<compile_context>
chip_gen: v6e
topology: v6e:2x2x1
jax: 0.10.0
libtpu: 0.0.40
codegen_flags: <defaults>
</compile_context>

<pallas_src>
import functools

import jax
import jax.numpy as jnp
import numpy as np
from jax import lax
from jax.experimental import pallas as pl
from jax.experimental.pallas import tpu as pltpu


def _round_up(x, m):
    return ((x + m - 1) // m) * m


# ----------------------------- Pallas kernels ------------------------------

def _conv_bn_relu_kernel(x_ref, w_ref, b_ref, o_ref):
    """One M-tile of the flattened im2col matmul.

    x_ref: (TM, Kp)   bf16 im2col patches (rows = flattened N*Ho*Wo)
    w_ref: (Kp, Cout) bf16 conv weight with BN scale folded in
    b_ref: (1, Cout)  f32 folded (conv bias + BN) bias
    o_ref: (TM, Cout) conv + BN + ReLU output
    """
    y = jnp.dot(x_ref[...], w_ref[...], preferred_element_type=jnp.float32)
    y = jnp.maximum(y + b_ref[...], 0.0)
    o_ref[...] = y.astype(o_ref.dtype)


def _conv_bn_relu_pool_kernel(x_ref, w_ref, b_ref, p_ref, o_ref):
    """Last conv layer fused with the adaptive average pool (one tile of whole images).

    x_ref: (nimg*P, Kp)       bf16 im2col patches of `nimg` whole images
    w_ref: (Kp, Cout)         bf16 conv weight with BN scale folded in
    b_ref: (1, Cout)          f32 folded bias
    p_ref: (nimg*GG, nimg*P)  f32 block-diagonal adaptive-average-pool matrix
    o_ref: (nimg*GG, Cout)    f32 pooled tokens
    """
    y = jnp.dot(x_ref[...], w_ref[...], preferred_element_type=jnp.float32)
    y = jnp.maximum(y + b_ref[...], 0.0)
    o_ref[...] = jnp.dot(p_ref[...], y, preferred_element_type=jnp.float32)


# ------------------------------ layer wrappers ------------------------------

def _im2col_s2(x_nhwc):
    """3x3 / stride-2 / pad-1 im2col.  Returns bf16 (N*Ho*Wo, 9*Cin) patches and (Ho, Wo)."""
    N, H, W, Cin = x_nhwc.shape
    Ho = (H + 2 - 3) // 2 + 1
    Wo = (W + 2 - 3) // 2 + 1
    xp = jnp.pad(x_nhwc.astype(jnp.bfloat16), ((0, 0), (1, 1), (1, 1), (0, 0)))
    cols = [xp[:, kh:kh + 2 * Ho:2, kw:kw + 2 * Wo:2, :]
            for kh in range(3) for kw in range(3)]
    patches = jnp.concatenate(cols, axis=-1).reshape(N * Ho * Wo, 9 * Cin)
    return patches, Ho, Wo


def _fold_bn(w_oihw, conv_b, gamma, beta, mean, var, eps):
    """Fold eval-mode BN into a bf16 weight matrix (scale folded) + f32 bias."""
    Cout, Cin = w_oihw.shape[0], w_oihw.shape[1]
    s = gamma / jnp.sqrt(var + eps)
    w_mat = jnp.transpose(w_oihw, (2, 3, 1, 0)).reshape(9 * Cin, Cout)   # matches im2col order
    w_mat = (w_mat * s[None, :]).astype(jnp.bfloat16)
    bias = ((conv_b - mean) * s + beta).reshape(1, Cout).astype(jnp.float32)
    return w_mat, bias


def _pad_k(patches, w_mat):
    """Zero-pad the contraction dim to a multiple of 8 (harmless for the dot)."""
    Kd = patches.shape[-1]
    Kp = _round_up(Kd, 8)
    if Kp != Kd:
        patches = jnp.pad(patches, ((0, 0), (0, Kp - Kd)))
        w_mat = jnp.pad(w_mat, ((0, Kp - Kd), (0, 0)))
    return patches, w_mat


def conv_bn_relu(x_nhwc, w_oihw, conv_b, gamma, beta, mean, var,
                 eps=1e-5, tm=512, out_dtype=jnp.bfloat16):
    """3x3 conv, stride 2, padding 1, fused with eval-mode BN + ReLU (flattened-M tiling)."""
    N = x_nhwc.shape[0]
    Cout = w_oihw.shape[0]
    patches, Ho, Wo = _im2col_s2(x_nhwc)
    w_mat, bias = _fold_bn(w_oihw, conv_b, gamma, beta, mean, var, eps)
    patches, w_mat = _pad_k(patches, w_mat)

    M = N * Ho * Wo
    Kp = patches.shape[-1]
    TM = tm if M >= tm else _round_up(M, 8)
    Mp = _round_up(M, TM)
    if Mp != M:
        patches = jnp.pad(patches, ((0, Mp - M), (0, 0)))

    out = pl.pallas_call(
        _conv_bn_relu_kernel,
        out_shape=jax.ShapeDtypeStruct((Mp, Cout), out_dtype),
        grid_spec=pltpu.PrefetchScalarGridSpec(
            num_scalar_prefetch=0,
            grid=(Mp // TM,),
            in_specs=[
                pl.BlockSpec((TM, Kp), lambda i: (i, 0)),
                pl.BlockSpec((Kp, Cout), lambda i: (0, 0)),
                pl.BlockSpec((1, Cout), lambda i: (0, 0)),
            ],
            out_specs=pl.BlockSpec((TM, Cout), lambda i: (i, 0)),
        ),
        compiler_params=pltpu.CompilerParams(dimension_semantics=("parallel",)),
    )(patches, w_mat, bias)
    return out[:M].reshape(N, Ho, Wo, Cout)


def _pool_matrix(Hf, Wf, G):
    """Adaptive average pool (Hf, Wf) -> (G, G) as a (G*G, Hf*Wf) matrix (PyTorch semantics)."""
    pm = np.zeros((G * G, Hf * Wf), np.float32)
    for gi in range(G):
        h0 = (gi * Hf) // G
        h1 = -((-(gi + 1) * Hf) // G)
        for gj in range(G):
            w0 = (gj * Wf) // G
            w1 = -((-(gj + 1) * Wf) // G)
            inv = 1.0 / ((h1 - h0) * (w1 - w0))
            for h in range(h0, h1):
                for w in range(w0, w1):
                    pm[gi * G + gj, h * Wf + w] = inv
    return jnp.asarray(pm)


def conv_bn_relu_pool(x_nhwc, w_oihw, conv_b, gamma, beta, mean, var, G,
                      eps=1e-5, imgs_per_step=8):
    """Last conv + BN + ReLU fused with the adaptive average pool (tokens out)."""
    N = x_nhwc.shape[0]
    Cout = w_oihw.shape[0]
    patches, Ho, Wo = _im2col_s2(x_nhwc)
    w_mat, bias = _fold_bn(w_oihw, conv_b, gamma, beta, mean, var, eps)
    patches, w_mat = _pad_k(patches, w_mat)

    P = Ho * Wo
    GG = G * G
    Kp = patches.shape[-1]

    nimg = min(imgs_per_step, N)
    Npad = _round_up(N, nimg)
    if Npad != N:
        patches = jnp.pad(patches, ((0, (Npad - N) * P), (0, 0)))

    # block-diagonal pool matrix so `nimg` whole images are pooled per grid step
    pool_blk = jnp.kron(jnp.eye(nimg, dtype=jnp.float32), _pool_matrix(Ho, Wo, G))

    out = pl.pallas_call(
        _conv_bn_relu_pool_kernel,
        out_shape=jax.ShapeDtypeStruct((Npad * GG, Cout), jnp.float32),
        grid_spec=pltpu.PrefetchScalarGridSpec(
            num_scalar_prefetch=0,
            grid=(Npad // nimg,),
            in_specs=[
                pl.BlockSpec((nimg * P, Kp), lambda i: (i, 0)),
                pl.BlockSpec((Kp, Cout), lambda i: (0, 0)),
                pl.BlockSpec((1, Cout), lambda i: (0, 0)),
                pl.BlockSpec((nimg * GG, nimg * P), lambda i: (0, 0)),
            ],
            out_specs=pl.BlockSpec((nimg * GG, Cout), lambda i: (i, 0)),
        ),
        compiler_params=pltpu.CompilerParams(dimension_semantics=("parallel",)),
    )(patches, w_mat, bias, pool_blk)
    return out[:N * GG].reshape(N, GG, Cout)


def simple_view_encoder(x_bkchw, params, G=2):
    """Pallas implementation of SimpleViewEncoder.forward.

    x_bkchw: (B, K, C_in, H, W) float32   ->   tokens (B, K, G*G, output_dim)
    """
    B, K, Cin, H, W = x_bkchw.shape
    N = B * K
    x = jnp.transpose(x_bkchw.reshape(N, Cin, H, W), (0, 2, 3, 1))  # NCHW -> NHWC
    layers = params["layers"]
    for L in layers[:-1]:
        x = conv_bn_relu(x, L["w"], L["b"], L["gamma"], L["beta"], L["mean"], L["var"])
    L = layers[-1]
    tok = conv_bn_relu_pool(x, L["w"], L["b"], L["gamma"], L["beta"], L["mean"], L["var"], G)
    C = tok.shape[-1]
    return tok.reshape(B, K, G * G, C)


# ------------------------------ params / reference --------------------------

def init_params(key, output_dim=256, intermediate_channels=(32, 64, 128)):
    c1, c2, c3 = intermediate_channels
    chans = [(3, c1), (c1, c2), (c2, c3), (c3, output_dim)]
    layers = []
    for i, (cin, cout) in enumerate(chans):
        k = jax.random.fold_in(key, i)
        kw, kb, kg, kbe, km, kv = jax.random.split(k, 6)
        fan_in = cin * 9
        layers.append(dict(
            w=jax.random.normal(kw, (cout, cin, 3, 3), jnp.float32) * (2.0 / fan_in) ** 0.5,
            b=jax.random.normal(kb, (cout,), jnp.float32) * 0.05,
            gamma=jax.random.uniform(kg, (cout,), jnp.float32, 0.5, 1.5),
            beta=jax.random.normal(kbe, (cout,), jnp.float32) * 0.1,
            mean=jax.random.normal(km, (cout,), jnp.float32) * 0.1,
            var=jax.random.uniform(kv, (cout,), jnp.float32, 0.5, 1.5),
        ))
    return {"layers": layers}


def reference(x_bkchw, params, G=2, eps=1e-5):
    """Pure-JAX (XLA, f32) replica of the PyTorch forward, for validation only."""
    B, K, Cin, H, W = x_bkchw.shape
    x = x_bkchw.reshape(B * K, Cin, H, W)
    for L in params["layers"]:
        y = lax.conv_general_dilated(x, L["w"], window_strides=(2, 2),
                                     padding=((1, 1), (1, 1)),
                                     dimension_numbers=("NCHW", "OIHW", "NCHW"))
        y = y + L["b"].reshape(1, -1, 1, 1)
        s = (L["gamma"] / jnp.sqrt(L["var"] + eps)).reshape(1, -1, 1, 1)
        y = (y - L["mean"].reshape(1, -1, 1, 1)) * s + L["beta"].reshape(1, -1, 1, 1)
        x = jnp.maximum(y, 0.0)
    N, C, Hf, Wf = x.shape
    x = x.reshape(N, C, G, Hf // G, G, Wf // G).mean(axis=(3, 5))       # adaptive pool (divisible case)
    x = x.reshape(B, K, C, G, G).transpose(0, 1, 3, 4, 2).reshape(B, K, G * G, C)
    return x


# ----------------------------------- main -----------------------------------

if __name__ == "__main__":
    key = jax.random.PRNGKey(0)
    kx, kp = jax.random.split(key)

    # Small but valid shapes: 4 stride-2 convs need H, W >= 32 so the pre-pool map is >= 2x2.
    B, K, C_in, H, W = 2, 2, 3, 64, 64
    x = jax.random.normal(kx, (B, K, C_in, H, W), jnp.float32)

    params = init_params(kp, output_dim=256, intermediate_channels=(32, 64, 128))

    encoder = jax.jit(functools.partial(simple_view_encoder, G=2))
    tokens = jax.block_until_ready(encoder(x, params))

    ref = jax.block_until_ready(reference(x, params, G=2))
    assert tokens.shape == (B, K, 4, 256), tokens.shape
    # bf16 MXU operands / bf16 intermediates vs. a pure-f32 reference -> loose tolerance.
    np.testing.assert_allclose(np.asarray(tokens), np.asarray(ref), rtol=5e-2, atol=5e-2)

    print("KERNEL_OK")
</pallas_src>

<mosaic_0001>
module attributes {stable_mosaic.version = 11 : i64} {
  func.func @_conv_bn_relu_kernel(%arg0: i32, %arg1: memref<512x32xbf16, #tpu.memory_space<vmem>>, %arg2: memref<32x32xbf16, #tpu.memory_space<vmem>>, %arg3: memref<1x32xf32, #tpu.memory_space<vmem>>, %arg4: memref<512x32xbf16, #tpu.memory_space<vmem>>) attributes {dimension_semantics = [#tpu.dimension_semantics<parallel>], iteration_bounds = array<i64: 8>, scalar_prefetch = 0 : i64, scratch_operands = 0 : i64, tpu.core_type = #tpu.core_type<tc>, window_params = [{transform_indices = @transform_0, window_bounds = array<i64: 512, 32>}, {pipeline_mode = #tpu.pipeline_mode<synchronous>, transform_indices = @transform_1, window_bounds = array<i64: 32, 32>}, {pipeline_mode = #tpu.pipeline_mode<synchronous>, transform_indices = @transform_2, window_bounds = array<i64: 1, 32>}, {transform_indices = @transform_3, window_bounds = array<i64: 512, 32>}]} {
    %c0 = arith.constant 0 : index
    %c0_0 = arith.constant 0 : index
    %0 = vector.load %arg1[%c0, %c0_0] : memref<512x32xbf16, #tpu.memory_space<vmem>>, vector<512x32xbf16>
    %c0_1 = arith.constant 0 : index
    %c0_2 = arith.constant 0 : index
    %1 = vector.load %arg2[%c0_1, %c0_2] : memref<32x32xbf16, #tpu.memory_space<vmem>>, vector<32x32xbf16>
    %cst = arith.constant dense<0.000000e+00> : vector<512x32xf32>
    %2 = tpu.matmul %0, %1, %cst {dimension_numbers = #tpu.dot_dimension_numbers<[1], [0], [0], [1], [0, 0, 1, 1], [], []>} : vector<512x32xbf16>, vector<32x32xbf16>, vector<512x32xf32> -> vector<512x32xf32>
    %c0_3 = arith.constant 0 : index
    %c0_4 = arith.constant 0 : index
    %3 = vector.load %arg3[%c0_3, %c0_4] : memref<1x32xf32, #tpu.memory_space<vmem>>, vector<1x32xf32>
    %4 = vector.broadcast %3 : vector<1x32xf32> to vector<512x32xf32>
    %5 = arith.addf %2, %4 : vector<512x32xf32>
    %cst_5 = arith.constant 0.000000e+00 : f32
    %6 = vector.broadcast %cst_5 : f32 to vector<512x32xf32>
    %7 = arith.maximumf %5, %6 : vector<512x32xf32>
    %8 = arith.truncf %7 : vector<512x32xf32> to vector<512x32xbf16>
    %c0_6 = arith.constant 0 : index
    %c0_7 = arith.constant 0 : index
    %9 = vector.load %arg4[%c0_6, %c0_7] : memref<512x32xbf16, #tpu.memory_space<vmem>>, vector<512x32xbf16>
    tpu.vector_store %arg4[%c0_6, %c0_7], %8 {strides = array<i32>} : memref<512x32xbf16, #tpu.memory_space<vmem>>, vector<512x32xbf16>,
    return
  }
  func.func @transform_0(%arg0: i32) -> (i32, i32) {
    %c0_i32 = arith.constant 0 : i32
    %c0_i32_0 = arith.constant 0 : i32
    return %arg0, %c0_i32 : i32, i32
  }
  func.func @transform_1(%arg0: i32) -> (i32, i32) {
    %c0_i32 = arith.constant 0 : i32
    %c0_i32_0 = arith.constant 0 : i32
    %c0_i32_1 = arith.constant 0 : i32
    return %c0_i32, %c0_i32_0 : i32, i32
  }
  func.func @transform_2(%arg0: i32) -> (i32, i32) {
    %c0_i32 = arith.constant 0 : i32
    %c0_i32_0 = arith.constant 0 : i32
    %c0_i32_1 = arith.constant 0 : i32
    return %c0_i32, %c0_i32_0 : i32, i32
  }
  func.func @transform_3(%arg0: i32) -> (i32, i32) {
    %c0_i32 = arith.constant 0 : i32
    %c0_i32_0 = arith.constant 0 : i32
    return %arg0, %c0_i32 : i32, i32
  }
}

module attributes {stable_mosaic.version = 11 : i64} {
  func.func @_conv_bn_relu_kernel(%arg0: i32, %arg1: memref<512x288xbf16, #tpu.memory_space<vmem>>, %arg2: memref<288x64xbf16, #tpu.memory_space<vmem>>, %arg3: memref<1x64xf32, #tpu.memory_space<vmem>>, %arg4: memref<512x64xbf16, #tpu.memory_space<vmem>>) attributes {dimension_semantics = [#tpu.dimension_semantics<parallel>], iteration_bounds = array<i64: 2>, scalar_prefetch = 0 : i64, scratch_operands = 0 : i64, tpu.core_type = #tpu.core_type<tc>, window_params = [{transform_indices = @transform_0, window_bounds = array<i64: 512, 288>}, {pipeline_mode = #tpu.pipeline_mode<synchronous>, transform_indices = @transform_1, window_bounds = array<i64: 288, 64>}, {pipeline_mode = #tpu.pipeline_mode<synchronous>, transform_indices = @transform_2, window_bounds = array<i64: 1, 64>}, {transform_indices = @transform_3, window_bounds = array<i64: 512, 64>}]} {
    %c0 = arith.constant 0 : index
    %c0_0 = arith.constant 0 : index
    %0 = vector.load %arg1[%c0, %c0_0] : memref<512x288xbf16, #tpu.memory_space<vmem>>, vector<512x288xbf16>
    %c0_1 = arith.constant 0 : index
    %c0_2 = arith.constant 0 : index
    %1 = vector.load %arg2[%c0_1, %c0_2] : memref<288x64xbf16, #tpu.memory_space<vmem>>, vector<288x64xbf16>
    %cst = arith.constant dense<0.000000e+00> : vector<512x64xf32>
    %2 = tpu.matmul %0, %1, %cst {dimension_numbers = #tpu.dot_dimension_numbers<[1], [0], [0], [1], [0, 0, 1, 1], [], []>} : vector<512x288xbf16>, vector<288x64xbf16>, vector<512x64xf32> -> vector<512x64xf32>
    %c0_3 = arith.constant 0 : index
    %c0_4 = arith.constant 0 : index
    %3 = vector.load %arg3[%c0_3, %c0_4] : memref<1x64xf32, #tpu.memory_space<vmem>>, vector<1x64xf32>
    %4 = vector.broadcast %3 : vector<1x64xf32> to vector<512x64xf32>
    %5 = arith.addf %2, %4 : vector<512x64xf32>
    %cst_5 = arith.constant 0.000000e+00 : f32
    %6 = vector.broadcast %cst_5 : f32 to vector<512x64xf32>
    %7 = arith.maximumf %5, %6 : vector<512x64xf32>
    %8 = arith.truncf %7 : vector<512x64xf32> to vector<512x64xbf16>
    %c0_6 = arith.constant 0 : index
    %c0_7 = arith.constant 0 : index
    %9 = vector.load %arg4[%c0_6, %c0_7] : memref<512x64xbf16, #tpu.memory_space<vmem>>, vector<512x64xbf16>
    tpu.vector_store %arg4[%c0_6, %c0_7], %8 {strides = array<i32>} : memref<512x64xbf16, #tpu.memory_space<vmem>>, vector<512x64xbf16>,
    return
  }
  func.func @transform_0(%arg0: i32) -> (i32, i32) {
    %c0_i32 = arith.constant 0 : i32
    %c0_i32_0 = arith.constant 0 : i32
    return %arg0, %c0_i32 : i32, i32
  }
  func.func @transform_1(%arg0: i32) -> (i32, i32) {
    %c0_i32 = arith.constant 0 : i32
    %c0_i32_0 = arith.constant 0 : i32
    %c0_i32_1 = arith.constant 0 : i32
    return %c0_i32, %c0_i32_0 : i32, i32
  }
  func.func @transform_2(%arg0: i32) -> (i32, i32) {
    %c0_i32 = arith.constant 0 : i32
    %c0_i32_0 = arith.constant 0 : i32
    %c0_i32_1 = arith.constant 0 : i32
    return %c0_i32, %c0_i32_0 : i32, i32
  }
  func.func @transform_3(%arg0: i32) -> (i32, i32) {
    %c0_i32 = arith.constant 0 : i32
    %c0_i32_0 = arith.constant 0 : i32
    return %arg0, %c0_i32 : i32, i32
  }
}

module attributes {stable_mosaic.version = 11 : i64} {
  func.func @_conv_bn_relu_kernel(%arg0: i32, %arg1: memref<256x576xbf16, #tpu.memory_space<vmem>>, %arg2: memref<576x128xbf16, #tpu.memory_space<vmem>>, %arg3: memref<1x128xf32, #tpu.memory_space<vmem>>, %arg4: memref<256x128xbf16, #tpu.memory_space<vmem>>) attributes {dimension_semantics = [#tpu.dimension_semantics<parallel>], iteration_bounds = array<i64: 1>, scalar_prefetch = 0 : i64, scratch_operands = 0 : i64, tpu.core_type = #tpu.core_type<tc>, window_params = [{transform_indices = @transform_0, window_bounds = array<i64: 256, 576>}, {pipeline_mode = #tpu.pipeline_mode<synchronous>, transform_indices = @transform_1, window_bounds = array<i64: 576, 128>}, {pipeline_mode = #tpu.pipeline_mode<synchronous>, transform_indices = @transform_2, window_bounds = array<i64: 1, 128>}, {transform_indices = @transform_3, window_bounds = array<i64: 256, 128>}]} {
    %c0 = arith.constant 0 : index
    %c0_0 = arith.constant 0 : index
    %0 = vector.load %arg1[%c0, %c0_0] : memref<256x576xbf16, #tpu.memory_space<vmem>>, vector<256x576xbf16>
    %c0_1 = arith.constant 0 : index
    %c0_2 = arith.constant 0 : index
    %1 = vector.load %arg2[%c0_1, %c0_2] : memref<576x128xbf16, #tpu.memory_space<vmem>>, vector<576x128xbf16>
    %cst = arith.constant dense<0.000000e+00> : vector<256x128xf32>
    %2 = tpu.matmul %0, %1, %cst {dimension_numbers = #tpu.dot_dimension_numbers<[1], [0], [0], [1], [0, 0, 1, 1], [], []>} : vector<256x576xbf16>, vector<576x128xbf16>, vector<256x128xf32> -> vector<256x128xf32>
    %c0_3 = arith.constant 0 : index
    %c0_4 = arith.constant 0 : index
    %3 = vector.load %arg3[%c0_3, %c0_4] : memref<1x128xf32, #tpu.memory_space<vmem>>, vector<1x128xf32>
    %4 = vector.broadcast %3 : vector<1x128xf32> to vector<256x128xf32>
    %5 = arith.addf %2, %4 : vector<256x128xf32>
    %cst_5 = arith.constant 0.000000e+00 : f32
    %6 = vector.broadcast %cst_5 : f32 to vector<256x128xf32>
    %7 = arith.maximumf %5, %6 : vector<256x128xf32>
    %8 = arith.truncf %7 : vector<256x128xf32> to vector<256x128xbf16>
    %c0_6 = arith.constant 0 : index
    %c0_7 = arith.constant 0 : index
    %9 = vector.load %arg4[%c0_6, %c0_7] : memref<256x128xbf16, #tpu.memory_space<vmem>>, vector<256x128xbf16>
    tpu.vector_store %arg4[%c0_6, %c0_7], %8 {strides = array<i32>} : memref<256x128xbf16, #tpu.memory_space<vmem>>, vector<256x128xbf16>,
    return
  }
  func.func @transform_0(%arg0: i32) -> (i32, i32) {
    %c0_i32 = arith.constant 0 : i32
    %c0_i32_0 = arith.constant 0 : i32
    return %arg0, %c0_i32 : i32, i32
  }
  func.func @transform_1(%arg0: i32) -> (i32, i32) {
    %c0_i32 = arith.constant 0 : i32
    %c0_i32_0 = arith.constant 0 : i32
    %c0_i32_1 = arith.constant 0 : i32
    return %c0_i32, %c0_i32_0 : i32, i32
  }
  func.func @transform_2(%arg0: i32) -> (i32, i32) {
    %c0_i32 = arith.constant 0 : i32
    %c0_i32_0 = arith.constant 0 : i32
    %c0_i32_1 = arith.constant 0 : i32
    return %c0_i32, %c0_i32_0 : i32, i32
  }
  func.func @transform_3(%arg0: i32) -> (i32, i32) {
    %c0_i32 = arith.constant 0 : i32
    %c0_i32_0 = arith.constant 0 : i32
    return %arg0, %c0_i32 : i32, i32
  }
}

module attributes {stable_mosaic.version = 11 : i64} {
  func.func @_conv_bn_relu_pool_kernel(%arg0: i32, %arg1: memref<64x1152xbf16, #tpu.memory_space<vmem>>, %arg2: memref<1152x256xbf16, #tpu.memory_space<vmem>>, %arg3: memref<1x256xf32, #tpu.memory_space<vmem>>, %arg4: memref<16x64xf32, #tpu.memory_space<vmem>>, %arg5: memref<16x256xf32, #tpu.memory_space<vmem>>) attributes {dimension_semantics = [#tpu.dimension_semantics<parallel>], iteration_bounds = array<i64: 1>, scalar_prefetch = 0 : i64, scratch_operands = 0 : i64, tpu.core_type = #tpu.core_type<tc>, window_params = [{transform_indices = @transform_0, window_bounds = array<i64: 64, 1152>}, {pipeline_mode = #tpu.pipeline_mode<synchronous>, transform_indices = @transform_1, window_bounds = array<i64: 1152, 256>}, {pipeline_mode = #tpu.pipeline_mode<synchronous>, transform_indices = @transform_2, window_bounds = array<i64: 1, 256>}, {pipeline_mode = #tpu.pipeline_mode<synchronous>, transform_indices = @transform_3, window_bounds = array<i64: 16, 64>}, {transform_indices = @transform_4, window_bounds = array<i64: 16, 256>}]} {
    %c0 = arith.constant 0 : index
    %c0_0 = arith.constant 0 : index
    %0 = vector.load %arg1[%c0, %c0_0] : memref<64x1152xbf16, #tpu.memory_space<vmem>>, vector<64x1152xbf16>
    %c0_1 = arith.constant 0 : index
    %c0_2 = arith.constant 0 : index
    %1 = vector.load %arg2[%c0_1, %c0_2] : memref<1152x256xbf16, #tpu.memory_space<vmem>>, vector<1152x256xbf16>
    %cst = arith.constant dense<0.000000e+00> : vector<64x256xf32>
    %2 = tpu.matmul %0, %1, %cst {dimension_numbers = #tpu.dot_dimension_numbers<[1], [0], [0], [1], [0, 0, 1, 1], [], []>} : vector<64x1152xbf16>, vector<1152x256xbf16>, vector<64x256xf32> -> vector<64x256xf32>
    %c0_3 = arith.constant 0 : index
    %c0_4 = arith.constant 0 : index
    %3 = vector.load %arg3[%c0_3, %c0_4] : memref<1x256xf32, #tpu.memory_space<vmem>>, vector<1x256xf32>
    %4 = vector.broadcast %3 : vector<1x256xf32> to vector<64x256xf32>
    %5 = arith.addf %2, %4 : vector<64x256xf32>
    %cst_5 = arith.constant 0.000000e+00 : f32
    %6 = vector.broadcast %cst_5 : f32 to vector<64x256xf32>
    %7 = arith.maximumf %5, %6 : vector<64x256xf32>
    %c0_6 = arith.constant 0 : index
    %c0_7 = arith.constant 0 : index
    %8 = vector.load %arg4[%c0_6, %c0_7] : memref<16x64xf32, #tpu.memory_space<vmem>>, vector<16x64xf32>
    %cst_8 = arith.constant dense<0.000000e+00> : vector<16x256xf32>
    %9 = tpu.matmul %8, %7, %cst_8 {dimension_numbers = #tpu.dot_dimension_numbers<[1], [0], [0], [1], [0, 0, 1, 1], [], []>} : vector<16x64xf32>, vector<64x256xf32>, vector<16x256xf32> -> vector<16x256xf32>
    %c0_9 = arith.constant 0 : index
    %c0_10 = arith.constant 0 : index
    %10 = vector.load %arg5[%c0_9, %c0_10] : memref<16x256xf32, #tpu.memory_space<vmem>>, vector<16x256xf32>
    tpu.vector_store %arg5[%c0_9, %c0_10], %9 {strides = array<i32>} : memref<16x256xf32, #tpu.memory_space<vmem>>, vector<16x256xf32>,
    return
  }
  func.func @transform_0(%arg0: i32) -> (i32, i32) {
    %c0_i32 = arith.constant 0 : i32
    %c0_i32_0 = arith.constant 0 : i32
    return %arg0, %c0_i32 : i32, i32
  }
  func.func @transform_1(%arg0: i32) -> (i32, i32) {
    %c0_i32 = arith.constant 0 : i32
    %c0_i32_0 = arith.constant 0 : i32
    %c0_i32_1 = arith.constant 0 : i32
    return %c0_i32, %c0_i32_0 : i32, i32
  }
  func.func @transform_2(%arg0: i32) -> (i32, i32) {
    %c0_i32 = arith.constant 0 : i32
    %c0_i32_0 = arith.constant 0 : i32
    %c0_i32_1 = arith.constant 0 : i32
    return %c0_i32, %c0_i32_0 : i32, i32
  }
  func.func @transform_3(%arg0: i32) -> (i32, i32) {
    %c0_i32 = arith.constant 0 : i32
    %c0_i32_0 = arith.constant 0 : i32
    %c0_i32_1 = arith.constant 0 : i32
    return %c0_i32, %c0_i32_0 : i32, i32
  }
  func.func @transform_4(%arg0: i32) -> (i32, i32) {
    %c0_i32 = arith.constant 0 : i32
    %c0_i32_0 = arith.constant 0 : i32
    return %arg0, %c0_i32 : i32, i32
  }
}

</mosaic_0001>

<llo_original>
// kernel: simple_view_encoder.4
$region0: #{simple_view_encoder.4}
  #allocation0 [shape = 'u32[]', space=smem, size = 0x4, offset = 0x4, fixed_abs, tag = 'smem constant byte address 0x4 - core index']
  #allocation1 [shape = 'u32[144,128]{1,0:T(1,128)}', space=vmem, size = 0x12000, scoped, tag = 'internal scratch']
  %s0 = inlined_call_operand.vmem [shape: bf16[4096,32], index: 0, kind: input, shape index: {}]
  %s1 = inlined_call_operand.vmem [shape: bf16[32,32], index: 1, kind: input, shape index: {}]
  %s2 = inlined_call_operand.vmem [shape: f32[1,32], index: 2, kind: input, shape index: {}]
  %s3 = inlined_call_operand.vmem [shape: bf16[4096,32], index: 3, kind: output, shape index: {}]
  %s4 = sld [smem:[#allocation0]]
  $region45: #{simple_view_encoder.4} parent=0
    _
  %s6 = ssub.s32 1, %s4
  %s7 = scalar_select 0, %s6, %s4
  loop: start=0, step=1, limit=10
  $region2: #{simple_view_encoder.4} parent=0 // loop_pre_header
    _
  $region3: #{simple_view_encoder.4} parent=0 // loop_header
    %s9 = sphi 0, %s13
    %p10 = scmp.ge.s32.totalorder %s9, 10
    %s19 = sphi 0, %s21
    %s22 = sphi 0, %s19
    %s23 = sphi 0, %s22
    %s39 = sphi 0, %s23
    %s43 = sphi 0, %s43
    %s45 = sphi 0, %s43
    %s46 = sphi 0, %s45
    %s60 = sphi 0, %s46
    %s64 = sphi 0, %s64
    %s66 = sphi 0, %s64
    %s67 = sphi 0, %s66
    %s81 = sphi 0, %s67
    %s87 = sphi 0, %s89
    %s90 = sphi 0, %s87
    %s91 = sphi 0, %s90
    %s107 = sphi 0, %s91
  $region4: #{simple_view_encoder.4} parent=0 // loop_header_branch
    %12 = sbr.rel (%p10) target = $region8
  $region5: #{simple_view_encoder.4} parent=0 // loop_body
    %s14 = ssub.s32 %s9, 1
    %s15 = ssub.s32 %s9, 2
    %s16 = sadd.s32 %s9, 1
    %s17 = ssub.s32 %s9, %s16
    %p18 = scmp.eq.s32.totalorder %s17, 0
    %s20 = sadd.s32 %s19, 1
    %s21 = scalar_select %p18, %s19, %s20
    %p24 = pneg %p18
    %p25 = scmp.eq.s32.totalorder %s9, 7
    %p26 = por %p24, %p25
    %p27 = scmp.ne.s32.totalorder %s19, %s22
    %p28 = scmp.eq.s32.totalorder %s9, 0
    %p29 = por %p27, %p28
    %p30 = scmp.ne.s32.totalorder %s19, %s22
    %p31 = scmp.eq.s32.totalorder %s14, 7
    %p32 = por %p30, %p31
    %p33 = scmp.ne.s32.totalorder %s22, %s23
    %p34 = scmp.eq.s32.totalorder %s14, 0
    %p35 = por %p33, %p34
    %p36 = scmp.ne.s32.totalorder %s22, %s23
    %p37 = scmp.eq.s32.totalorder %s15, 7
    %p38 = por %p36, %p37
    %p40 = scmp.ne.s32.totalorder %s23, %s39
    %p41 = scmp.eq.s32.totalorder %s15, 0
    %p42 = por %p40, %p41
    %s44 = sadd.s32 %s43, 1
    %p47 = scmp.eq.s32.totalorder %s9, 7
    %p48 = scmp.ne.s32.totalorder %s43, %s45
    %p49 = scmp.eq.s32.totalorder %s9, 0
    %p50 = por %p48, %p49
    %p51 = scmp.ne.s32.totalorder %s43, %s45
    %p52 = scmp.eq.s32.totalorder %s14, 7
    %p53 = por %p51, %p52
    %p54 = scmp.ne.s32.totalorder %s45, %s46
    %p55 = scmp.eq.s32.totalorder %s14, 0
    %p56 = por %p54, %p55
    %p57 = scmp.ne.s32.totalorder %s45, %s46
    %p58 = scmp.eq.s32.totalorder %s15, 7
    %p59 = por %p57, %p58
    %p61 = scmp.ne.s32.totalorder %s46, %s60
    %p62 = scmp.eq.s32.totalorder %s15, 0
    %p63 = por %p61, %p62
    %s65 = sadd.s32 %s64, 1
    %p68 = scmp.eq.s32.totalorder %s9, 7
    %p69 = scmp.ne.s32.totalorder %s64, %s66
    %p70 = scmp.eq.s32.totalorder %s9, 0
    %p71 = por %p69, %p70
    %p72 = scmp.ne.s32.totalorder %s64, %s66
    %p73 = scmp.eq.s32.totalorder %s14, 7
    %p74 = por %p72, %p73
    %p75 = scmp.ne.s32.totalorder %s66, %s67
    %p76 = scmp.eq.s32.totalorder %s14, 0
    %p77 = por %p75, %p76
    %p78 = scmp.ne.s32.totalorder %s66, %s67
    %p79 = scmp.eq.s32.totalorder %s15, 7
    %p80 = por %p78, %p79
    %p82 = scmp.ne.s32.totalorder %s67, %s81
    %p83 = scmp.eq.s32.totalorder %s15, 0
    %p84 = por %p82, %p83
    %s85 = ssub.s32 %s9, %s16
    %p86 = scmp.eq.s32.totalorder %s85, 0
    %s88 = sadd.s32 %s87, 1
    %s89 = scalar_select %p86, %s87, %s88
    %p92 = pneg %p86
    %p93 = scmp.eq.s32.totalorder %s9, 7
    %p94 = por %p92, %p93
    %p95 = scmp.ne.s32.totalorder %s87, %s90
    %p96 = scmp.eq.s32.totalorder %s9, 0
    %p97 = por %p95, %p96
    %p98 = scmp.ne.s32.totalorder %s87, %s90
    %p99 = scmp.eq.s32.totalorder %s14, 7
    %p100 = por %p98, %p99
    %p101 = scmp.ne.s32.totalorder %s90, %s91
    %p102 = scmp.eq.s32.totalorder %s14, 0
    %p103 = por %p101, %p102
    %p104 = scmp.ne.s32.totalorder %s90, %s91
    %p105 = scmp.eq.s32.totalorder %s15, 7
    %p106 = por %p104, %p105
    %p108 = scmp.ne.s32.totalorder %s91, %s107
    %p109 = scmp.eq.s32.totalorder %s15, 0
    %p110 = por %p108, %p109
    %p111 = scmp.le.s32.totalorder 1, %s9
    %p112 = scmp.lt.s32.totalorder %s9, 9
    %p113 = pnand %p111, %p112
    %p114 = pneg %p113
    // Predicated region
    $region9: #{simple_view_encoder.4} parent=5 // pred_check
      _
    $region10: #{simple_view_encoder.4} parent=5 // pred_check_branch
      %116 = sbr.rel (%p113) target = $region12
    $region11: #{simple_view_encoder.4} parent=5 // pred_region
      %s117 = ssub.s32 %s9, 1
      // Predicated region
      $region13: #{simple_view_encoder.4} parent=11 // pred_check
        %p118 = pneg %p56
      $region14: #{simple_view_encoder.4} parent=11 // pred_check_branch
        %120 = sbr.rel (%p118) target = $region16
      $region15: #{simple_view_encoder.4} parent=11 // pred_region
        _
      $region16: #{simple_view_encoder.4} parent=11 // pred_fallthru
        _
      // Predicated region
      $region17: #{simple_view_encoder.4} parent=11 // pred_check
        %p121 = pneg %p77
      $region18: #{simple_view_encoder.4} parent=11 // pred_check_branch
        %123 = sbr.rel (%p121) target = $region20
      $region19: #{simple_view_encoder.4} parent=11 // pred_region
        _
      $region20: #{simple_view_encoder.4} parent=11 // pred_fallthru
        _
    $region12: #{simple_view_encoder.4} parent=5 // pred_fallthru
      _
    %p124 = scmp.lt.s32.totalorder %s9, 8
    // Predicated region
    $region21: #{simple_view_encoder.4} parent=5 // pred_check
      %p125 = pneg %p124
    $region22: #{simple_view_encoder.4} parent=5 // pred_check_branch
      %127 = sbr.rel (%p125) target = $region24
    $region23: #{simple_view_encoder.4} parent=5 // pred_region
      // Predicated region
      $region25: #{simple_view_encoder.4} parent=23 // pred_check
        %p128 = pneg %p29
      $region26: #{simple_view_encoder.4} parent=23 // pred_check_branch
        %130 = sbr.rel (%p128) target = $region28
      $region27: #{simple_view_encoder.4} parent=23 // pred_region
        %s131 = smul.u32 64, %s9
        %p132 = scmp.lt.s32.totalorder %s131, 511
        %s133 = scalar_select %p132, %s131, 511
        %s134 = smul.addr %s133, 4
        %s135 = scalar_lea.vmem %s0, %s134
        %s136 = smul.u32 64, %s9
      $region28: #{simple_view_encoder.4} parent=23 // pred_fallthru
        _
    $region24: #{simple_view_encoder.4} parent=5 // pred_fallthru
      _
    %p137 = scmp.le.s32.totalorder 1, %s9
    %p138 = scmp.lt.s32.totalorder %s9, 9
    %p139 = pnand %p137, %p138
    %p140 = pneg %p139
    // Predicated region
    $region29: #{simple_view_encoder.4} parent=5 // pred_check
      _
    $region30: #{simple_view_encoder.4} parent=5 // pred_check_branch
      %142 = sbr.rel (%p139) target = $region32
    $region31: #{simple_view_encoder.4} parent=5 // pred_region
      %s143 = ssub.s32 %s9, 1
      %s144 = smul.u32 64, %s14
      %p145 = scmp.lt.s32.totalorder %s144, 511
      %s146 = scalar_select %p145, %s144, 511
      %s147 = smul.addr %s146, 4
      %s148 = scalar_lea.vmem %s0, %s147
      %p149 = pneg %p35
      %p150 = pneg %p32
      %p151 = pneg %p56
      %p152 = pneg %p53
      %p153 = pneg %p77
      %p154 = pneg %p74
      %p155 = pneg %p103
      %p156 = pneg %p100
      %s157 = smul.u32 64, %s14
      %p158 = scmp.lt.s32.totalorder %s157, 511
      %s159 = scalar_select %p158, %s157, 511
      %s160 = smul.addr %s159, 4
      %s161 = scalar_lea.vmem %s3, %s160
      %s162 = smul.u32 64, %s14
      %p163 = scmp.lt.s32.totalorder %s162, 511
      %s164 = scalar_select %p163, %s162, 511
      %s165 = smul.addr %s164, 4
      %s166 = scalar_lea.vmem %s0, %s165
      %s167 = smul.u32 64, %s14
      %s168 = smul.u32 64, %s14
      %p169 = scmp.lt.s32.totalorder %s168, 511
      %s170 = scalar_select %p169, %s168, 511
      %s171 = smul.addr %s170, 4
      %s172 = scalar_lea.vmem %s3, %s171
      %s173 = smul.u32 64, %s14
      %v175 = vld [vmem:[%s166] sm:$0xf]
      %v176 = vld [vmem:[%s166 + $0x4] sm:$0xf]
      %v177 = vld [vmem:[%s166 + $0x8] sm:$0xf]
      %v178 = vld [vmem:[%s166 + $0xc] sm:$0xf]
      %v179 = vld [vmem:[%s166 + $0x10] sm:$0xf]
      %v180 = vld [vmem:[%s166 + $0x14] sm:$0xf]
      %v181 = vld [vmem:[%s166 + $0x18] sm:$0xf]
      %v182 = vld [vmem:[%s166 + $0x1c] sm:$0xf]
      %v183 = vld [vmem:[%s166 + $0x20] sm:$0xf]
      %v184 = vld [vmem:[%s166 + $0x24] sm:$0xf]
      %v185 = vld [vmem:[%s166 + $0x28] sm:$0xf]
      %v186 = vld [vmem:[%s166 + $0x2c] sm:$0xf]
      %v187 = vld [vmem:[%s166 + $0x30] sm:$0xf]
      %v188 = vld [vmem:[%s166 + $0x34] sm:$0xf]
      %v189 = vld [vmem:[%s166 + $0x38] sm:$0xf]
      %v190 = vld [vmem:[%s166 + $0x3c] sm:$0xf]
      %v191 = vld [vmem:[%s166 + $0x40] sm:$0xf]
      %v192 = vld [vmem:[%s166 + $0x44] sm:$0xf]
      %v193 = vld [vmem:[%s166 + $0x48] sm:$0xf]
      %v194 = vld [vmem:[%s166 + $0x4c] sm:$0xf]
      %v195 = vld [vmem:[%s166 + $0x50] sm:$0xf]
      %v196 = vld [vmem:[%s166 + $0x54] sm:$0xf]
      %v197 = vld [vmem:[%s166 + $0x58] sm:$0xf]
      %v198 = vld [vmem:[%s166 + $0x5c] sm:$0xf]
      %v199 = vld [vmem:[%s166 + $0x60] sm:$0xf]
      %v200 = vld [vmem:[%s166 + $0x64] sm:$0xf]
      %v201 = vld [vmem:[%s166 + $0x68] sm:$0xf]
      %v202 = vld [vmem:[%s166 + $0x6c] sm:$0xf]
      %v203 = vld [vmem:[%s166 + $0x70] sm:$0xf]
      %v204 = vld [vmem:[%s166 + $0x74] sm:$0xf]
      %v205 = vld [vmem:[%s166 + $0x78] sm:$0xf]
      %v206 = vld [vmem:[%s166 + $0x7c] sm:$0xf]
      %v207 = vld [vmem:[%s166 + $0x80] sm:$0xf]
      %v208 = vld [vmem:[%s166 + $0x84] sm:$0xf]
      %v209 = vld [vmem:[%s166 + $0x88] sm:$0xf]
      %v210 = vld [vmem:[%s166 + $0x8c] sm:$0xf]
      %v211 = vld [vmem:[%s166 + $0x90] sm:$0xf]
      %v212 = vld [vmem:[%s166 + $0x94] sm:$0xf]
      %v213 = vld [vmem:[%s166 + $0x98] sm:$0xf]
      %v214 = vld [vmem:[%s166 + $0x9c] sm:$0xf]
      %v215 = vld [vmem:[%s166 + $0xa0] sm:$0xf]
      %v216 = vld [vmem:[%s166 + $0xa4] sm:$0xf]
      %v217 = vld [vmem:[%s166 + $0xa8] sm:$0xf]
      %v218 = vld [vmem:[%s166 + $0xac] sm:$0xf]
      %v219 = vld [vmem:[%s166 + $0xb0] sm:$0xf]
      %v220 = vld [vmem:[%s166 + $0xb4] sm:$0xf]
      %v221 = vld [vmem:[%s166 + $0xb8] sm:$0xf]
      %v222 = vld [vmem:[%s166 + $0xbc] sm:$0xf]
      %v223 = vld [vmem:[%s166 + $0xc0] sm:$0xf]
      %v224 = vld [vmem:[%s166 + $0xc4] sm:$0xf]
      %v225 = vld [vmem:[%s166 + $0xc8] sm:$0xf]
      %v226 = vld [vmem:[%s166 + $0xcc] sm:$0xf]
      %v227 = vld [vmem:[%s166 + $0xd0] sm:$0xf]
      %v228 = vld [vmem:[%s166 + $0xd4] sm:$0xf]
      %v229 = vld [vmem:[%s166 + $0xd8] sm:$0xf]
      %v230 = vld [vmem:[%s166 + $0xdc] sm:$0xf]
      %v231 = vld [vmem:[%s166 + $0xe0] sm:$0xf]
      %v232 = vld [vmem:[%s166 + $0xe4] sm:$0xf]
      %v233 = vld [vmem:[%s166 + $0xe8] sm:$0xf]
      %v234 = vld [vmem:[%s166 + $0xec] sm:$0xf]
      %v235 = vld [vmem:[%s166 + $0xf0] sm:$0xf]
      %v236 = vld [vmem:[%s166 + $0xf4] sm:$0xf]
      %v237 = vld [vmem:[%s166 + $0xf8] sm:$0xf]
      %v238 = vld [vmem:[%s166 + $0xfc] sm:$0xf]
      %v239 = vld [vmem:[%s1] sm:$0xf]
      %v240 = vld [vmem:[%s1 + $0x4] sm:$0xf]
      %v241 = vld [vmem:[%s1 + $0x8] sm:$0xf]
      %v242 = vld [vmem:[%s1 + $0xc] sm:$0xf]
      %v243 = vld [vmem:[%s2] sm:$0x1]
      %v245 = vlaneseq
      %v246 = vshrl.u32 %v245, 7
      %v247 = vsub.s32 0, %v246
      %v248 = vrot.slane %v243, %v247
      %v314 = vunpack.c.l.b16 %v175
      %v315 = vunpack.c.l.b16 %v176
      %v316 = vunpack.c.l.b16 %v177
      %v317 = vunpack.c.l.b16 %v178
      %v318 = vunpack.c.l.b16 %v179
      %v319 = vunpack.c.l.b16 %v180
      %v320 = vunpack.c.l.b16 %v181
      %v321 = vunpack.c.l.b16 %v182
      %v322 = vunpack.c.l.b16 %v183
      %v323 = vunpack.c.l.b16 %v184
      %v324 = vunpack.c.l.b16 %v185
      %v325 = vunpack.c.l.b16 %v186
      %v326 = vunpack.c.l.b16 %v187
      %v327 = vunpack.c.l.b16 %v188
      %v328 = vunpack.c.l.b16 %v189
      %v329 = vunpack.c.l.b16 %v190
      %v330 = vunpack.c.l.b16 %v191
      %v331 = vunpack.c.l.b16 %v192
      %v332 = vunpack.c.l.b16 %v193
      %v333 = vunpack.c.l.b16 %v194
      %v334 = vunpack.c.l.b16 %v195
      %v335 = vunpack.c.l.b16 %v196
      %v336 = vunpack.c.l.b16 %v197
      %v337 = vunpack.c.l.b16 %v198
      %v338 = vunpack.c.l.b16 %v199
      %v339 = vunpack.c.l.b16 %v200
      %v340 = vunpack.c.l.b16 %v201
      %v341 = vunpack.c.l.b16 %v202
      %v342 = vunpack.c.l.b16 %v203
      %v343 = vunpack.c.l.b16 %v204
      %v344 = vunpack.c.l.b16 %v205
      %v345 = vunpack.c.l.b16 %v206
      %v346 = vunpack.c.l.b16 %v207
      %v347 = vunpack.c.l.b16 %v208
      %v348 = vunpack.c.l.b16 %v209
      %v349 = vunpack.c.l.b16 %v210
      %v350 = vunpack.c.l.b16 %v211
      %v351 = vunpack.c.l.b16 %v212
      %v352 = vunpack.c.l.b16 %v213
      %v353 = vunpack.c.l.b16 %v214
      %v354 = vunpack.c.l.b16 %v215
      %v355 = vunpack.c.l.b16 %v216
      %v356 = vunpack.c.l.b16 %v217
      %v357 = vunpack.c.l.b16 %v218
      %v358 = vunpack.c.l.b16 %v219
      %v359 = vunpack.c.l.b16 %v220
      %v360 = vunpack.c.l.b16 %v221
      %v361 = vunpack.c.l.b16 %v222
      %v362 = vunpack.c.l.b16 %v223
      %v363 = vunpack.c.l.b16 %v224
      %v364 = vunpack.c.l.b16 %v225
      %v365 = vunpack.c.l.b16 %v226
      %v366 = vunpack.c.l.b16 %v227
      %v367 = vunpack.c.l.b16 %v228
      %v368 = vunpack.c.l.b16 %v229
      %v369 = vunpack.c.l.b16 %v230
      %v370 = vunpack.c.l.b16 %v231
      %v371 = vunpack.c.l.b16 %v232
      %v372 = vunpack.c.l.b16 %v233
      %v373 = vunpack.c.l.b16 %v234
      %v374 = vunpack.c.l.b16 %v235
      %v375 = vunpack.c.l.b16 %v236
      %v376 = vunpack.c.l.b16 %v237
      %v377 = vunpack.c.l.b16 %v238
      %v378 = vpack.c.b16 %v315, %v314
      %v379 = vpack.c.b16 %v317, %v316
      %v380 = vpack.c.b16 %v319, %v318
      %v381 = vpack.c.b16 %v321, %v320
      %v382 = vpack.c.b16 %v323, %v322
      %v383 = vpack.c.b16 %v325, %v324
      %v384 = vpack.c.b16 %v327, %v326
      %v385 = vpack.c.b16 %v329, %v328
      %v386 = vpack.c.b16 %v331, %v330
      %v387 = vpack.c.b16 %v333, %v332
      %v388 = vpack.c.b16 %v335, %v334
      %v389 = vpack.c.b16 %v337, %v336
      %v390 = vpack.c.b16 %v339, %v338
      %v391 = vpack.c.b16 %v341, %v340
      %v392 = vpack.c.b16 %v343, %v342
      %v393 = vpack.c.b16 %v345, %v344
      %v394 = vpack.c.b16 %v347, %v346
      %v395 = vpack.c.b16 %v349, %v348
      %v396 = vpack.c.b16 %v351, %v350
      %v397 = vpack.c.b16 %v353, %v352
      %v398 = vpack.c.b16 %v355, %v354
      %v399 = vpack.c.b16 %v357, %v356
      %v400 = vpack.c.b16 %v359, %v358
      %v401 = vpack.c.b16 %v361, %v360
      %v402 = vpack.c.b16 %v363, %v362
      %v403 = vpack.c.b16 %v365, %v364
      %v404 = vpack.c.b16 %v367, %v366
      %v405 = vpack.c.b16 %v369, %v368
      %v406 = vpack.c.b16 %v371, %v370
      %v407 = vpack.c.b16 %v373, %v372
      %v408 = vpack.c.b16 %v375, %v374
      %v409 = vpack.c.b16 %v377, %v376
      %v414 = vunpack.c.l.b16 %v239
      %v415 = vunpack.c.l.b16 %v240
      %v416 = vunpack.c.l.b16 %v241
      %v417 = vunpack.c.l.b16 %v242
      %v418 = vpack.c.b16 %v415, %v414
      %v419 = vpack.c.b16 %v417, %v416
      %vm422 = vcmask 261120
      %v424 = vsel %vm422, %v378, 0
      %v427 = vsel %vm422, %v379, 0
      %v430 = vsel %vm422, %v380, 0
      %v433 = vsel %vm422, %v381, 0
      %v436 = vsel %vm422, %v382, 0
      %v439 = vsel %vm422, %v383, 0
      %v442 = vsel %vm422, %v384, 0
      %v445 = vsel %vm422, %v385, 0
      %v448 = vsel %vm422, %v386, 0
      %v451 = vsel %vm422, %v387, 0
      %v454 = vsel %vm422, %v388, 0
      %v457 = vsel %vm422, %v389, 0
      %v460 = vsel %vm422, %v390, 0
      %v463 = vsel %vm422, %v391, 0
      %v466 = vsel %vm422, %v392, 0
      %v469 = vsel %vm422, %v393, 0
      %v472 = vsel %vm422, %v394, 0
      %v475 = vsel %vm422, %v395, 0
      %v478 = vsel %vm422, %v396, 0
      %v481 = vsel %vm422, %v397, 0
      %v484 = vsel %vm422, %v398, 0
      %v487 = vsel %vm422, %v399, 0
      %v490 = vsel %vm422, %v400, 0
      %v493 = vsel %vm422, %v401, 0
      %v496 = vsel %vm422, %v402, 0
      %v499 = vsel %vm422, %v403, 0
      %v502 = vsel %vm422, %v404, 0
      %v505 = vsel %vm422, %v405, 0
      %v508 = vsel %vm422, %v406, 0
      %v511 = vsel %vm422, %v407, 0
      %v514 = vsel %vm422, %v408, 0
      %v517 = vsel %vm422, %v409, 0
      %519 = vmatprep.subr.bf16.mxu0 0
      %520 = vmatpush1.bf16.msra.mxu0 0
      %521 = vmatprep.subr.bf16.mxu0 0
      %522 = vmatpush1.bf16.msra.mxu0 0
      %523 = vmatprep.subr.bf16.mxu0 0
      %524 = vmatpush1.bf16.msra.mxu0 0
      %525 = vmatprep.subr.bf16.mxu0 0
      %526 = vmatpush1.bf16.msra.mxu0 0
      %527 = vmatprep.subr.bf16.mxu0 0
      %528 = vmatpush1.bf16.msra.mxu0 0
      %529 = vmatprep.subr.bf16.mxu0 0
      %530 = vmatpush1.bf16.msra.mxu0 0
      %531 = vmatprep.subr.bf16.mxu0 0
      %532 = vmatpush1.bf16.msra.mxu0 %v419
      %533 = vmatprep.subr.bf16.mxu0 0
      %534 = vmatpush1.bf16.msra.mxu0 %v418
      %535 = vmatprep.subr.bf16.mxu0 0
      %536 = vmatpush2.bf16.msra.mxu0 0
      %537 = vmatprep.subr.bf16.mxu0 0
      %538 = vmatpush2.bf16.msra.mxu0 0
      %539 = vmatprep.subr.bf16.mxu0 0
      %540 = vmatpush2.bf16.msra.mxu0 0
      %541 = vmatprep.subr.bf16.mxu0 0
      %542 = vmatpush2.bf16.msra.mxu0 0
      %543 = vmatprep.subr.bf16.mxu0 0
      %544 = vmatpush2.bf16.msra.mxu0 0
      %545 = vmatprep.subr.bf16.mxu0 0
      %546 = vmatpush2.bf16.msra.mxu0 0
      %547 = vmatprep.subr.bf16.mxu0 0
      %548 = vmatpush2.bf16.msra.mxu0 0
      %549 = vmatprep.subr.bf16.mxu0 0
      %550 = vmatpush2.bf16.msra.mxu0 0
      %551 = vmatprep.mubr.bf16.mxu0 0
      %552 = vmatmul.mubr.bf16.gmra.mxu0 %v424
      %v553 = vpop.f32.mrf.mxu0
      %v554 = vadd.f32 %v248, %v553
      %v555 = vpop.f32.mrf.mxu0
      %v556 = vpop.f32.mrf.mxu0
      %v557 = vadd.f32 %v248, %v556
      %v558 = vpop.f32.mrf.mxu0
      %559 = vmatprep.mubr.bf16.mxu0 0
      %560 = vmatmul.mubr.bf16.gmra.mxu0 %v427
      %v561 = vpop.f32.mrf.mxu0
      %v562 = vadd.f32 %v248, %v561
      %v563 = vpop.f32.mrf.mxu0
      %v564 = vpop.f32.mrf.mxu0
      %v565 = vadd.f32 %v248, %v564
      %v566 = vpop.f32.mrf.mxu0
      %567 = vmatprep.mubr.bf16.mxu0 0
      %568 = vmatmul.mubr.bf16.gmra.mxu0 %v430
      %v569 = vpop.f32.mrf.mxu0
      %v570 = vadd.f32 %v248, %v569
      %v571 = vpop.f32.mrf.mxu0
      %v572 = vpop.f32.mrf.mxu0
      %v573 = vadd.f32 %v248, %v572
      %v574 = vpop.f32.mrf.mxu0
      %575 = vmatprep.mubr.bf16.mxu0 0
      %576 = vmatmul.mubr.bf16.gmra.mxu0 %v433
      %v577 = vpop.f32.mrf.mxu0
      %v578 = vadd.f32 %v248, %v577
      %v579 = vpop.f32.mrf.mxu0
      %v580 = vpop.f32.mrf.mxu0
      %v581 = vadd.f32 %v248, %v580
      %v582 = vpop.f32.mrf.mxu0
      %583 = vmatprep.mubr.bf16.mxu0 0
      %584 = vmatmul.mubr.bf16.gmra.mxu0 %v436
      %v585 = vpop.f32.mrf.mxu0
      %v586 = vadd.f32 %v248, %v585
      %v587 = vpop.f32.mrf.mxu0
      %v588 = vpop.f32.mrf.mxu0
      %v589 = vadd.f32 %v248, %v588
      %v590 = vpop.f32.mrf.mxu0
      %591 = vmatprep.mubr.bf16.mxu0 0
      %592 = vmatmul.mubr.bf16.gmra.mxu0 %v439
      %v593 = vpop.f32.mrf.mxu0
      %v594 = vadd.f32 %v248, %v593
      %v595 = vpop.f32.mrf.mxu0
      %v596 = vpop.f32.mrf.mxu0
      %v597 = vadd.f32 %v248, %v596
      %v598 = vpop.f32.mrf.mxu0
      %599 = vmatprep.mubr.bf16.mxu0 0
      %600 = vmatmul.mubr.bf16.gmra.mxu0 %v442
      %v601 = vpop.f32.mrf.mxu0
      %v602 = vadd.f32 %v248, %v601
      %v603 = vpop.f32.mrf.mxu0
      %v604 = vpop.f32.mrf.mxu0
      %v605 = vadd.f32 %v248, %v604
      %v606 = vpop.f32.mrf.mxu0
      %607 = vmatprep.mubr.bf16.mxu0 0
      %608 = vmatmul.mubr.bf16.gmra.mxu0 %v445
      %v609 = vpop.f32.mrf.mxu0
      %v610 = vadd.f32 %v248, %v609
      %v611 = vpop.f32.mrf.mxu0
      %v612 = vpop.f32.mrf.mxu0
      %v613 = vadd.f32 %v248, %v612
      %v614 = vpop.f32.mrf.mxu0
      %615 = vmatprep.mubr.bf16.mxu0 0
      %616 = vmatmul.mubr.bf16.gmra.mxu0 %v448
      %v617 = vpop.f32.mrf.mxu0
      %v618 = vadd.f32 %v248, %v617
      %v619 = vpop.f32.mrf.mxu0
      %v620 = vpop.f32.mrf.mxu0
      %v621 = vadd.f32 %v248, %v620
      %v622 = vpop.f32.mrf.mxu0
      %623 = vmatprep.mubr.bf16.mxu0 0
      %624 = vmatmul.mubr.bf16.gmra.mxu0 %v451
      %v625 = vpop.f32.mrf.mxu0
      %v626 = vadd.f32 %v248, %v625
      %v627 = vpop.f32.mrf.mxu0
      %v628 = vpop.f32.mrf.mxu0
      %v629 = vadd.f32 %v248, %v628
      %v630 = vpop.f32.mrf.mxu0
      %631 = vmatprep.mubr.bf16.mxu0 0
      %632 = vmatmul.mubr.bf16.gmra.mxu0 %v454
      %v633 = vpop.f32.mrf.mxu0
      %v634 = vadd.f32 %v248, %v633
      %v635 = vpop.f32.mrf.mxu0
      %v636 = vpop.f32.mrf.mxu0
      %v637 = vadd.f32 %v248, %v636
      %v638 = vpop.f32.mrf.mxu0
      %639 = vmatprep.mubr.bf16.mxu0 0
      %640 = vmatmul.mubr.bf16.gmra.mxu0 %v457
      %v641 = vpop.f32.mrf.mxu0
      %v642 = vadd.f32 %v248, %v641
      %v643 = vpop.f32.mrf.mxu0
      %v644 = vpop.f32.mrf.mxu0
      %v645 = vadd.f32 %v248, %v644
      %v646 = vpop.f32.mrf.mxu0
      %647 = vmatprep.mubr.bf16.mxu0 0
      %648 = vmatmul.mubr.bf16.gmra.mxu0 %v460
      %v649 = vpop.f32.mrf.mxu0
      %v650 = vadd.f32 %v248, %v649
      %v651 = vpop.f32.mrf.mxu0
      %v652 = vpop.f32.mrf.mxu0
      %v653 = vadd.f32 %v248, %v652
      %v654 = vpop.f32.mrf.mxu0
      %655 = vmatprep.mubr.bf16.mxu0 0
      %656 = vmatmul.mubr.bf16.gmra.mxu0 %v463
      %v657 = vpop.f32.mrf.mxu0
      %v658 = vadd.f32 %v248, %v657
      %v659 = vpop.f32.mrf.mxu0
      %v660 = vpop.f32.mrf.mxu0
      %v661 = vadd.f32 %v248, %v660
      %v662 = vpop.f32.mrf.mxu0
      %663 = vmatprep.mubr.bf16.mxu0 0
      %664 = vmatmul.mubr.bf16.gmra.mxu0 %v466
      %v665 = vpop.f32.mrf.mxu0
      %v666 = vadd.f32 %v248, %v665
      %v667 = vpop.f32.mrf.mxu0
      %v668 = vpop.f32.mrf.mxu0
      %v669 = vadd.f32 %v248, %v668
      %v670 = vpop.f32.mrf.mxu0
      %671 = vmatprep.mubr.bf16.mxu0 0
      %672 = vmatmul.mubr.bf16.gmra.mxu0 %v469
      %v673 = vpop.f32.mrf.mxu0
      %v674 = vadd.f32 %v248, %v673
      %v675 = vpop.f32.mrf.mxu0
      %v676 = vpop.f32.mrf.mxu0
      %v677 = vadd.f32 %v248, %v676
      %v678 = vpop.f32.mrf.mxu0
      %679 = vmatprep.mubr.bf16.mxu0 0
      %680 = vmatmul.mubr.bf16.gmra.mxu0 %v472
      %v681 = vpop.f32.mrf.mxu0
      %v682 = vadd.f32 %v248, %v681
      %v683 = vpop.f32.mrf.mxu0
      %v684 = vpop.f32.mrf.mxu0
      %v685 = vadd.f32 %v248, %v684
      %v686 = vpop.f32.mrf.mxu0
      %687 = vmatprep.mubr.bf16.mxu0 0
      %688 = vmatmul.mubr.bf16.gmra.mxu0 %v475
      %v689 = vpop.f32.mrf.mxu0
      %v690 = vadd.f32 %v248, %v689
      %v691 = vpop.f32.mrf.mxu0
      %v692 = vpop.f32.mrf.mxu0
      %v693 = vadd.f32 %v248, %v692
      %v694 = vpop.f32.mrf.mxu0
      %695 = vmatprep.mubr.bf16.mxu0 0
      %696 = vmatmul.mubr.bf16.gmra.mxu0 %v478
      %v697 = vpop.f32.mrf.mxu0
      %v698 = vadd.f32 %v248, %v697
      %v699 = vpop.f32.mrf.mxu0
      %v700 = vpop.f32.mrf.mxu0
      %v701 = vadd.f32 %v248, %v700
      %v702 = vpop.f32.mrf.mxu0
      %703 = vmatprep.mubr.bf16.mxu0 0
      %704 = vmatmul.mubr.bf16.gmra.mxu0 %v481
      %v705 = vpop.f32.mrf.mxu0
      %v706 = vadd.f32 %v248, %v705
      %v707 = vpop.f32.mrf.mxu0
      %v708 = vpop.f32.mrf.mxu0
      %v709 = vadd.f32 %v248, %v708
      %v710 = vpop.f32.mrf.mxu0
      %711 = vmatprep.mubr.bf16.mxu0 0
      %712 = vmatmul.mubr.bf16.gmra.mxu0 %v484
      %v713 = vpop.f32.mrf.mxu0
      %v714 = vadd.f32 %v248, %v713
      %v715 = vpop.f32.mrf.mxu0
      %v716 = vpop.f32.mrf.mxu0
      %v717 = vadd.f32 %v248, %v716
      %v718 = vpop.f32.mrf.mxu0
      %719 = vmatprep.mubr.bf16.mxu0 0
      %720 = vmatmul.mubr.bf16.gmra.mxu0 %v487
      %v721 = vpop.f32.mrf.mxu0
      %v722 = vadd.f32 %v248, %v721
      %v723 = vpop.f32.mrf.mxu0
      %v724 = vpop.f32.mrf.mxu0
      %v725 = vadd.f32 %v248, %v724
      %v726 = vpop.f32.mrf.mxu0
      %727 = vmatprep.mubr.bf16.mxu0 0
      %728 = vmatmul.mubr.bf16.gmra.mxu0 %v490
      %v729 = vpop.f32.mrf.mxu0
      %v730 = vadd.f32 %v248, %v729
      %v731 = vpop.f32.mrf.mxu0
      %v732 = vpop.f32.mrf.mxu0
      %v733 = vadd.f32 %v248, %v732
      %v734 = vpop.f32.mrf.mxu0
      %735 = vmatprep.mubr.bf16.mxu0 0
      %736 = vmatmul.mubr.bf16.gmra.mxu0 %v493
      %v737 = vpop.f32.mrf.mxu0
      %v738 = vadd.f32 %v248, %v737
      %v739 = vpop.f32.mrf.mxu0
      %v740 = vpop.f32.mrf.mxu0
      %v741 = vadd.f32 %v248, %v740
      %v742 = vpop.f32.mrf.mxu0
      %743 = vmatprep.mubr.bf16.mxu0 0
      %744 = vmatmul.mubr.bf16.gmra.mxu0 %v496
      %v745 = vpop.f32.mrf.mxu0
      %v746 = vadd.f32 %v248, %v745
      %v747 = vpop.f32.mrf.mxu0
      %v748 = vpop.f32.mrf.mxu0
      %v749 = vadd.f32 %v248, %v748
      %v750 = vpop.f32.mrf.mxu0
      %751 = vmatprep.mubr.bf16.mxu0 0
      %752 = vmatmul.mubr.bf16.gmra.mxu0 %v499
      %v753 = vpop.f32.mrf.mxu0
      %v754 = vadd.f32 %v248, %v753
      %v755 = vpop.f32.mrf.mxu0
      %v756 = vpop.f32.mrf.mxu0
      %v757 = vadd.f32 %v248, %v756
      %v758 = vpop.f32.mrf.mxu0
      %759 = vmatprep.mubr.bf16.mxu0 0
      %760 = vmatmul.mubr.bf16.gmra.mxu0 %v502
      %v761 = vpop.f32.mrf.mxu0
      %v762 = vadd.f32 %v248, %v761
      %v763 = vpop.f32.mrf.mxu0
      %v764 = vpop.f32.mrf.mxu0
      %v765 = vadd.f32 %v248, %v764
      %v766 = vpop.f32.mrf.mxu0
      %767 = vmatprep.mubr.bf16.mxu0 0
      %768 = vmatmul.mubr.bf16.gmra.mxu0 %v505
      %v769 = vpop.f32.mrf.mxu0
      %v770 = vadd.f32 %v248, %v769
      %v771 = vpop.f32.mrf.mxu0
      %v772 = vpop.f32.mrf.mxu0
      %v773 = vadd.f32 %v248, %v772
      %v774 = vpop.f32.mrf.mxu0
      %775 = vmatprep.mubr.bf16.mxu0 0
      %776 = vmatmul.mubr.bf16.gmra.mxu0 %v508
      %v777 = vpop.f32.mrf.mxu0
      %v778 = vadd.f32 %v248, %v777
      %v779 = vpop.f32.mrf.mxu0
      %v780 = vpop.f32.mrf.mxu0
      %v781 = vadd.f32 %v248, %v780
      %v782 = vpop.f32.mrf.mxu0
      %783 = vmatprep.mubr.bf16.mxu0 0
      %784 = vmatmul.mubr.bf16.gmra.mxu0 %v511
      %v785 = vpop.f32.mrf.mxu0
      %v786 = vadd.f32 %v248, %v785
      %v787 = vpop.f32.mrf.mxu0
      %v788 = vpop.f32.mrf.mxu0
      %v789 = vadd.f32 %v248, %v788
      %v790 = vpop.f32.mrf.mxu0
      %791 = vmatprep.mubr.bf16.mxu0 0
      %792 = vmatmul.mubr.bf16.gmra.mxu0 %v514
      %v793 = vpop.f32.mrf.mxu0
      %v794 = vadd.f32 %v248, %v793
      %v795 = vpop.f32.mrf.mxu0
      %v796 = vpop.f32.mrf.mxu0
      %v797 = vadd.f32 %v248, %v796
      %v798 = vpop.f32.mrf.mxu0
      %799 = vmatprep.mubr.bf16.mxu0 0
      %800 = vmatmul.mubr.bf16.gmra.mxu0 %v517
      %v801 = vpop.f32.mrf.mxu0
      %v802 = vadd.f32 %v248, %v801
      %v803 = vpop.f32.mrf.mxu0
      %v804 = vpop.f32.mrf.mxu0
      %v805 = vadd.f32 %v248, %v804
      %v806 = vpop.f32.mrf.mxu0
      %807 = vdwg.mxu0
      %v808 = vmax.f32 %v554, 0.0
      %v809 = vmax.f32 %v557, 0.0
      %v810 = vmax.f32 %v562, 0.0
      %v811 = vmax.f32 %v565, 0.0
      %v812 = vmax.f32 %v570, 0.0
      %v813 = vmax.f32 %v573, 0.0
      %v814 = vmax.f32 %v578, 0.0
      %v815 = vmax.f32 %v581, 0.0
      %v816 = vmax.f32 %v586, 0.0
      %v817 = vmax.f32 %v589, 0.0
      %v818 = vmax.f32 %v594, 0.0
      %v819 = vmax.f32 %v597, 0.0
      %v820 = vmax.f32 %v602, 0.0
      %v821 = vmax.f32 %v605, 0.0
      %v822 = vmax.f32 %v610, 0.0
      %v823 = vmax.f32 %v613, 0.0
      %v824 = vmax.f32 %v618, 0.0
      %v825 = vmax.f32 %v621, 0.0
      %v826 = vmax.f32 %v626, 0.0
      %v827 = vmax.f32 %v629, 0.0
      %v828 = vmax.f32 %v634, 0.0
      %v829 = vmax.f32 %v637, 0.0
      %v830 = vmax.f32 %v642, 0.0
      %v831 = vmax.f32 %v645, 0.0
      %v832 = vmax.f32 %v650, 0.0
      %v833 = vmax.f32 %v653, 0.0
      %v834 = vmax.f32 %v658, 0.0
      %v835 = vmax.f32 %v661, 0.0
      %v836 = vmax.f32 %v666, 0.0
      %v837 = vmax.f32 %v669, 0.0
      %v838 = vmax.f32 %v674, 0.0
      %v839 = vmax.f32 %v677, 0.0
      %v840 = vmax.f32 %v682, 0.0
      %v841 = vmax.f32 %v685, 0.0
      %v842 = vmax.f32 %v690, 0.0
      %v843 = vmax.f32 %v693, 0.0
      %v844 = vmax.f32 %v698, 0.0
      %v845 = vmax.f32 %v701, 0.0
      %v846 = vmax.f32 %v706, 0.0
      %v847 = vmax.f32 %v709, 0.0
      %v848 = vmax.f32 %v714, 0.0
      %v849 = vmax.f32 %v717, 0.0
      %v850 = vmax.f32 %v722, 0.0
      %v851 = vmax.f32 %v725, 0.0
      %v852 = vmax.f32 %v730, 0.0
      %v853 = vmax.f32 %v733, 0.0
      %v854 = vmax.f32 %v738, 0.0
      %v855 = vmax.f32 %v741, 0.0
      %v856 = vmax.f32 %v746, 0.0
      %v857 = vmax.f32 %v749, 0.0
      %v858 = vmax.f32 %v754, 0.0
      %v859 = vmax.f32 %v757, 0.0
      %v860 = vmax.f32 %v762, 0.0
      %v861 = vmax.f32 %v765, 0.0
      %v862 = vmax.f32 %v770, 0.0
      %v863 = vmax.f32 %v773, 0.0
      %v864 = vmax.f32 %v778, 0.0
      %v865 = vmax.f32 %v781, 0.0
      %v866 = vmax.f32 %v786, 0.0
      %v867 = vmax.f32 %v789, 0.0
      %v868 = vmax.f32 %v794, 0.0
      %v869 = vmax.f32 %v797, 0.0
      %v870 = vmax.f32 %v802, 0.0
      %v871 = vmax.f32 %v805, 0.0
      %v872 = vpack.c.bf16 %v809, %v808
      %v873 = vpack.c.bf16 %v811, %v810
      %v874 = vpack.c.bf16 %v813, %v812
      %v875 = vpack.c.bf16 %v815, %v814
      %v876 = vpack.c.bf16 %v817, %v816
      %v877 = vpack.c.bf16 %v819, %v818
      %v878 = vpack.c.bf16 %v821, %v820
      %v879 = vpack.c.bf16 %v823, %v822
      %v880 = vpack.c.bf16 %v825, %v824
      %v881 = vpack.c.bf16 %v827, %v826
      %v882 = vpack.c.bf16 %v829, %v828
      %v883 = vpack.c.bf16 %v831, %v830
      %v884 = vpack.c.bf16 %v833, %v832
      %v885 = vpack.c.bf16 %v835, %v834
      %v886 = vpack.c.bf16 %v837, %v836
      %v887 = vpack.c.bf16 %v839, %v838
      %v888 = vpack.c.bf16 %v841, %v840
      %v889 = vpack.c.bf16 %v843, %v842
      %v890 = vpack.c.bf16 %v845, %v844
      %v891 = vpack.c.bf16 %v847, %v846
      %v892 = vpack.c.bf16 %v849, %v848
      %v893 = vpack.c.bf16 %v851, %v850
      %v894 = vpack.c.bf16 %v853, %v852
      %v895 = vpack.c.bf16 %v855, %v854
      %v896 = vpack.c.bf16 %v857, %v856
      %v897 = vpack.c.bf16 %v859, %v858
      %v898 = vpack.c.bf16 %v861, %v860
      %v899 = vpack.c.bf16 %v863, %v862
      %v900 = vpack.c.bf16 %v865, %v864
      %v901 = vpack.c.bf16 %v867, %v866
      %v902 = vpack.c.bf16 %v869, %v868
      %v903 = vpack.c.bf16 %v871, %v870
      %v936 = vunpack.c.l.b16 %v872
      %v937 = vunpack.c.h.b16 %v872
      %v938 = vunpack.c.l.b16 %v873
      %v939 = vunpack.c.h.b16 %v873
      %v940 = vunpack.c.l.b16 %v874
      %v941 = vunpack.c.h.b16 %v874
      %v942 = vunpack.c.l.b16 %v875
      %v943 = vunpack.c.h.b16 %v875
      %v944 = vunpack.c.l.b16 %v876
      %v945 = vunpack.c.h.b16 %v876
      %v946 = vunpack.c.l.b16 %v877
      %v947 = vunpack.c.h.b16 %v877
      %v948 = vunpack.c.l.b16 %v878
      %v949 = vunpack.c.h.b16 %v878
      %v950 = vunpack.c.l.b16 %v879
      %v951 = vunpack.c.h.b16 %v879
      %v952 = vunpack.c.l.b16 %v880
      %v953 = vunpack.c.h.b16 %v880
      %v954 = vunpack.c.l.b16 %v881
      %v955 = vunpack.c.h.b16 %v881
      %v956 = vunpack.c.l.b16 %v882
      %v957 = vunpack.c.h.b16 %v882
      %v958 = vunpack.c.l.b16 %v883
      %v959 = vunpack.c.h.b16 %v883
      %v960 = vunpack.c.l.b16 %v884
      %v961 = vunpack.c.h.b16 %v884
      %v962 = vunpack.c.l.b16 %v885
      %v963 = vunpack.c.h.b16 %v885
      %v964 = vunpack.c.l.b16 %v886
      %v965 = vunpack.c.h.b16 %v886
      %v966 = vunpack.c.l.b16 %v887
      %v967 = vunpack.c.h.b16 %v887
      %v968 = vunpack.c.l.b16 %v888
      %v969 = vunpack.c.h.b16 %v888
      %v970 = vunpack.c.l.b16 %v889
      %v971 = vunpack.c.h.b16 %v889
      %v972 = vunpack.c.l.b16 %v890
      %v973 = vunpack.c.h.b16 %v890
      %v974 = vunpack.c.l.b16 %v891
      %v975 = vunpack.c.h.b16 %v891
      %v976 = vunpack.c.l.b16 %v892
      %v977 = vunpack.c.h.b16 %v892
      %v978 = vunpack.c.l.b16 %v893
      %v979 = vunpack.c.h.b16 %v893
      %v980 = vunpack.c.l.b16 %v894
      %v981 = vunpack.c.h.b16 %v894
      %v982 = vunpack.c.l.b16 %v895
      %v983 = vunpack.c.h.b16 %v895
      %v984 = vunpack.c.l.b16 %v896
      %v985 = vunpack.c.h.b16 %v896
      %v986 = vunpack.c.l.b16 %v897
      %v987 = vunpack.c.h.b16 %v897
      %v988 = vunpack.c.l.b16 %v898
      %v989 = vunpack.c.h.b16 %v898
      %v990 = vunpack.c.l.b16 %v899
      %v991 = vunpack.c.h.b16 %v899
      %v992 = vunpack.c.l.b16 %v900
      %v993 = vunpack.c.h.b16 %v900
      %v994 = vunpack.c.l.b16 %v901
      %v995 = vunpack.c.h.b16 %v901
      %v996 = vunpack.c.l.b16 %v902
      %v997 = vunpack.c.h.b16 %v902
      %v998 = vunpack.c.l.b16 %v903
      %v999 = vunpack.c.h.b16 %v903
      %v1000 = vpack.c.b16 %v936, %v936
      %v1001 = vpack.c.b16 %v937, %v937
      %v1002 = vpack.c.b16 %v938, %v938
      %v1003 = vpack.c.b16 %v939, %v939
      %v1004 = vpack.c.b16 %v940, %v940
      %v1005 = vpack.c.b16 %v941, %v941
      %v1006 = vpack.c.b16 %v942, %v942
      %v1007 = vpack.c.b16 %v943, %v943
      %v1008 = vpack.c.b16 %v944, %v944
      %v1009 = vpack.c.b16 %v945, %v945
      %v1010 = vpack.c.b16 %v946, %v946
      %v1011 = vpack.c.b16 %v947, %v947
      %v1012 = vpack.c.b16 %v948, %v948
      %v1013 = vpack.c.b16 %v949, %v949
      %v1014 = vpack.c.b16 %v950, %v950
      %v1015 = vpack.c.b16 %v951, %v951
      %v1016 = vpack.c.b16 %v952, %v952
      %v1017 = vpack.c.b16 %v953, %v953
      %v1018 = vpack.c.b16 %v954, %v954
      %v1019 = vpack.c.b16 %v955, %v955
      %v1020 = vpack.c.b16 %v956, %v956
      %v1021 = vpack.c.b16 %v957, %v957
      %v1022 = vpack.c.b16 %v958, %v958
      %v1023 = vpack.c.b16 %v959, %v959
      %v1024 = vpack.c.b16 %v960, %v960
      %v1025 = vpack.c.b16 %v961, %v961
      %v1026 = vpack.c.b16 %v962, %v962
      %v1027 = vpack.c.b16 %v963, %v963
      %v1028 = vpack.c.b16 %v964, %v964
      %v1029 = vpack.c.b16 %v965, %v965
      %v1030 = vpack.c.b16 %v966, %v966
      %v1031 = vpack.c.b16 %v967, %v967
      %v1032 = vpack.c.b16 %v968, %v968
      %v1033 = vpack.c.b16 %v969, %v969
      %v1034 = vpack.c.b16 %v970, %v970
      %v1035 = vpack.c.b16 %v971, %v971
      %v1036 = vpack.c.b16 %v972, %v972
      %v1037 = vpack.c.b16 %v973, %v973
      %v1038 = vpack.c.b16 %v974, %v974
      %v1039 = vpack.c.b16 %v975, %v975
      %v1040 = vpack.c.b16 %v976, %v976
      %v1041 = vpack.c.b16 %v977, %v977
      %v1042 = vpack.c.b16 %v978, %v978
      %v1043 = vpack.c.b16 %v979, %v979
      %v1044 = vpack.c.b16 %v980, %v980
      %v1045 = vpack.c.b16 %v981, %v981
      %v1046 = vpack.c.b16 %v982, %v982
      %v1047 = vpack.c.b16 %v983, %v983
      %v1048 = vpack.c.b16 %v984, %v984
      %v1049 = vpack.c.b16 %v985, %v985
      %v1050 = vpack.c.b16 %v986, %v986
      %v1051 = vpack.c.b16 %v987, %v987
      %v1052 = vpack.c.b16 %v988, %v988
      %v1053 = vpack.c.b16 %v989, %v989
      %v1054 = vpack.c.b16 %v990, %v990
      %v1055 = vpack.c.b16 %v991, %v991
      %v1056 = vpack.c.b16 %v992, %v992
      %v1057 = vpack.c.b16 %v993, %v993
      %v1058 = vpack.c.b16 %v994, %v994
      %v1059 = vpack.c.b16 %v995, %v995
      %v1060 = vpack.c.b16 %v996, %v996
      %v1061 = vpack.c.b16 %v997, %v997
      %v1062 = vpack.c.b16 %v998, %v998
      %v1063 = vpack.c.b16 %v999, %v999
      %vm1128 = vcmask 257024
      %1129 = vst.msk [vmem:[%s172] sm:$0xf] %vm1128, %v1000
      %1130 = vst.msk [vmem:[%s172 + $0x4] sm:$0xf] %vm1128, %v1001
      %1131 = vst.msk [vmem:[%s172 + $0x8] sm:$0xf] %vm1128, %v1002
      %1132 = vst.msk [vmem:[%s172 + $0xc] sm:$0xf] %vm1128, %v1003
      %1133 = vst.msk [vmem:[%s172 + $0x10] sm:$0xf] %vm1128, %v1004
      %1134 = vst.msk [vmem:[%s172 + $0x14] sm:$0xf] %vm1128, %v1005
      %1135 = vst.msk [vmem:[%s172 + $0x18] sm:$0xf] %vm1128, %v1006
      %1136 = vst.msk [vmem:[%s172 + $0x1c] sm:$0xf] %vm1128, %v1007
      %1137 = vst.msk [vmem:[%s172 + $0x20] sm:$0xf] %vm1128, %v1008
      %1138 = vst.msk [vmem:[%s172 + $0x24] sm:$0xf] %vm1128, %v1009
      %1139 = vst.msk [vmem:[%s172 + $0x28] sm:$0xf] %vm1128, %v1010
      %1140 = vst.msk [vmem:[%s172 + $0x2c] sm:$0xf] %vm1128, %v1011
      %1141 = vst.msk [vmem:[%s172 + $0x30] sm:$0xf] %vm1128, %v1012
      %1142 = vst.msk [vmem:[%s172 + $0x34] sm:$0xf] %vm1128, %v1013
      %1143 = vst.msk [vmem:[%s172 + $0x38] sm:$0xf] %vm1128, %v1014
      %1144 = vst.msk [vmem:[%s172 + $0x3c] sm:$0xf] %vm1128, %v1015
      %1145 = vst.msk [vmem:[%s172 + $0x40] sm:$0xf] %vm1128, %v1016
      %1146 = vst.msk [vmem:[%s172 + $0x44] sm:$0xf] %vm1128, %v1017
      %1147 = vst.msk [vmem:[%s172 + $0x48] sm:$0xf] %vm1128, %v1018
      %1148 = vst.msk [vmem:[%s172 + $0x4c] sm:$0xf] %vm1128, %v1019
      %1149 = vst.msk [vmem:[%s172 + $0x50] sm:$0xf] %vm1128, %v1020
      %1150 = vst.msk [vmem:[%s172 + $0x54] sm:$0xf] %vm1128, %v1021
      %1151 = vst.msk [vmem:[%s172 + $0x58] sm:$0xf] %vm1128, %v1022
      %1152 = vst.msk [vmem:[%s172 + $0x5c] sm:$0xf] %vm1128, %v1023
      %1153 = vst.msk [vmem:[%s172 + $0x60] sm:$0xf] %vm1128, %v1024
      %1154 = vst.msk [vmem:[%s172 + $0x64] sm:$0xf] %vm1128, %v1025
      %1155 = vst.msk [vmem:[%s172 + $0x68] sm:$0xf] %vm1128, %v1026
      %1156 = vst.msk [vmem:[%s172 + $0x6c] sm:$0xf] %vm1128, %v1027
      %1157 = vst.msk [vmem:[%s172 + $0x70] sm:$0xf] %vm1128, %v1028
      %1158 = vst.msk [vmem:[%s172 + $0x74] sm:$0xf] %vm1128, %v1029
      %1159 = vst.msk [vmem:[%s172 + $0x78] sm:$0xf] %vm1128, %v1030
      %1160 = vst.msk [vmem:[%s172 + $0x7c] sm:$0xf] %vm1128, %v1031
      %1161 = vst.msk [vmem:[%s172 + $0x80] sm:$0xf] %vm1128, %v1032
      %1162 = vst.msk [vmem:[%s172 + $0x84] sm:$0xf] %vm1128, %v1033
      %1163 = vst.msk [vmem:[%s172 + $0x88] sm:$0xf] %vm1128, %v1034
      %1164 = vst.msk [vmem:[%s172 + $0x8c] sm:$0xf] %vm1128, %v1035
      %1165 = vst.msk [vmem:[%s172 + $0x90] sm:$0xf] %vm1128, %v1036
      %1166 = vst.msk [vmem:[%s172 + $0x94] sm:$0xf] %vm1128, %v1037
      %1167 = vst.msk [vmem:[%s172 + $0x98] sm:$0xf] %vm1128, %v1038
      %1168 = vst.msk [vmem:[%s172 + $0x9c] sm:$0xf] %vm1128, %v1039
      %1169 = vst.msk [vmem:[%s172 + $0xa0] sm:$0xf] %vm1128, %v1040
      %1170 = vst.msk [vmem:[%s172 + $0xa4] sm:$0xf] %vm1128, %v1041
      %1171 = vst.msk [vmem:[%s172 + $0xa8] sm:$0xf] %vm1128, %v1042
      %1172 = vst.msk [vmem:[%s172 + $0xac] sm:$0xf] %vm1128, %v1043
      %1173 = vst.msk [vmem:[%s172 + $0xb0] sm:$0xf] %vm1128, %v1044
      %1174 = vst.msk [vmem:[%s172 + $0xb4] sm:$0xf] %vm1128, %v1045
      %1175 = vst.msk [vmem:[%s172 + $0xb8] sm:$0xf] %vm1128, %v1046
      %1176 = vst.msk [vmem:[%s172 + $0xbc] sm:$0xf] %vm1128, %v1047
      %1177 = vst.msk [vmem:[%s172 + $0xc0] sm:$0xf] %vm1128, %v1048
      %1178 = vst.msk [vmem:[%s172 + $0xc4] sm:$0xf] %vm1128, %v1049
      %1179 = vst.msk [vmem:[%s172 + $0xc8] sm:$0xf] %vm1128, %v1050
      %1180 = vst.msk [vmem:[%s172 + $0xcc] sm:$0xf] %vm1128, %v1051
      %1181 = vst.msk [vmem:[%s172 + $0xd0] sm:$0xf] %vm1128, %v1052
      %1182 = vst.msk [vmem:[%s172 + $0xd4] sm:$0xf] %vm1128, %v1053
      %1183 = vst.msk [vmem:[%s172 + $0xd8] sm:$0xf] %vm1128, %v1054
      %1184 = vst.msk [vmem:[%s172 + $0xdc] sm:$0xf] %vm1128, %v1055
      %1185 = vst.msk [vmem:[%s172 + $0xe0] sm:$0xf] %vm1128, %v1056
      %1186 = vst.msk [vmem:[%s172 + $0xe4] sm:$0xf] %vm1128, %v1057
      %1187 = vst.msk [vmem:[%s172 + $0xe8] sm:$0xf] %vm1128, %v1058
      %1188 = vst.msk [vmem:[%s172 + $0xec] sm:$0xf] %vm1128, %v1059
      %1189 = vst.msk [vmem:[%s172 + $0xf0] sm:$0xf] %vm1128, %v1060
      %1190 = vst.msk [vmem:[%s172 + $0xf4] sm:$0xf] %vm1128, %v1061
      %1191 = vst.msk [vmem:[%s172 + $0xf8] sm:$0xf] %vm1128, %v1062
      %1192 = vst.msk [vmem:[%s172 + $0xfc] sm:$0xf] %vm1128, %v1063
      %s1193 = smul.u32 64, %s14
      %p1194 = scmp.lt.s32.totalorder %s1193, 511
      %s1195 = scalar_select %p1194, %s1193, 511
      %s1196 = smul.addr %s1195, 4
      %s1197 = scalar_lea.vmem %s3, %s1196
      // Predicated region
      $region33: #{simple_view_encoder.4} parent=31 // pred_check
        %p1198 = pneg %p100
      $region34: #{simple_view_encoder.4} parent=31 // pred_check_branch
        %1200 = sbr.rel (%p1198) target = $region36
      $region35: #{simple_view_encoder.4} parent=31 // pred_region
        %s1201 = smul.u32 64, %s14
      $region36: #{simple_view_encoder.4} parent=31 // pred_fallthru
        _
    $region32: #{simple_view_encoder.4} parent=5 // pred_fallthru
      _
    %p1202 = scmp.le.s32.totalorder 2, %s9
    // Predicated region
    $region37: #{simple_view_encoder.4} parent=5 // pred_check
      %p1203 = pneg %p1202
    $region38: #{simple_view_encoder.4} parent=5 // pred_check_branch
      %1205 = sbr.rel (%p1203) target = $region40
    $region39: #{simple_view_encoder.4} parent=5 // pred_region
      %s1206 = ssub.s32 %s9, 2
      // Predicated region
      $region41: #{simple_view_encoder.4} parent=39 // pred_check
        %p1207 = pneg %p106
      $region42: #{simple_view_encoder.4} parent=39 // pred_check_branch
        %1209 = sbr.rel (%p1207) target = $region44
      $region43: #{simple_view_encoder.4} parent=39 // pred_region
        %s1210 = smul.u32 64, %s15
        %p1211 = scmp.lt.s32.totalorder %s1210, 511
        %s1212 = scalar_select %p1211, %s1210, 511
        %s1213 = smul.addr %s1212, 4
        %s1214 = scalar_lea.vmem %s3, %s1213
      $region44: #{simple_view_encoder.4} parent=39 // pred_fallthru
        _
    $region40: #{simple_view_encoder.4} parent=5 // pred_fallthru
      _
  $region6: #{simple_view_encoder.4} parent=0 // loop_footer
    %s13 = sadd.s32 1, %s9
  $region7: #{simple_view_encoder.4} parent=0 // loop_footer_branch
    %8 = sbr.rel target = $region3
  $region8: #{simple_view_encoder.4} parent=0 // loop_exit
    _

// kernel: simple_view_encoder.5
$region0: #{simple_view_encoder.5}
  #allocation0 [shape = 'u32[]', space=smem, size = 0x4, offset = 0x4, fixed_abs, tag = 'smem constant byte address 0x4 - core index']
  #allocation1 [shape = 'u32[144,128]{1,0:T(1,128)}', space=vmem, size = 0x12000, scoped, tag = 'internal scratch']
  %s0 = inlined_call_operand.vmem [shape: bf16[1024,288], index: 0, kind: input, shape index: {}]
  %s1 = inlined_call_operand.vmem [shape: bf16[288,64], index: 1, kind: input, shape index: {}]
  %s2 = inlined_call_operand.vmem [shape: f32[1,64], index: 2, kind: input, shape index: {}]
  %s3 = inlined_call_operand.vmem [shape: bf16[1024,64], index: 3, kind: output, shape index: {}]
  %s4 = sld [smem:[#allocation0]]
  $region45: #{simple_view_encoder.5} parent=0
    _
  %s6 = ssub.s32 1, %s4
  %s7 = scalar_select 0, %s6, %s4
  loop: start=0, step=1, limit=4
  $region2: #{simple_view_encoder.5} parent=0 // loop_pre_header
    _
  $region3: #{simple_view_encoder.5} parent=0 // loop_header
    %s9 = sphi 0, %s13
    %p10 = scmp.ge.s32.totalorder %s9, 4
    %s19 = sphi 0, %s21
    %s22 = sphi 0, %s19
    %s23 = sphi 0, %s22
    %s39 = sphi 0, %s23
    %s43 = sphi 0, %s43
    %s45 = sphi 0, %s43
    %s46 = sphi 0, %s45
    %s60 = sphi 0, %s46
    %s64 = sphi 0, %s64
    %s66 = sphi 0, %s64
    %s67 = sphi 0, %s66
    %s81 = sphi 0, %s67
    %s87 = sphi 0, %s89
    %s90 = sphi 0, %s87
    %s91 = sphi 0, %s90
    %s107 = sphi 0, %s91
  $region4: #{simple_view_encoder.5} parent=0 // loop_header_branch
    %12 = sbr.rel (%p10) target = $region8
  $region5: #{simple_view_encoder.5} parent=0 // loop_body
    %s14 = ssub.s32 %s9, 1
    %s15 = ssub.s32 %s9, 2
    %s16 = sadd.s32 %s9, 1
    %s17 = ssub.s32 %s9, %s16
    %p18 = scmp.eq.s32.totalorder %s17, 0
    %s20 = sadd.s32 %s19, 1
    %s21 = scalar_select %p18, %s19, %s20
    %p24 = pneg %p18
    %p25 = scmp.eq.s32.totalorder %s9, 1
    %p26 = por %p24, %p25
    %p27 = scmp.ne.s32.totalorder %s19, %s22
    %p28 = scmp.eq.s32.totalorder %s9, 0
    %p29 = por %p27, %p28
    %p30 = scmp.ne.s32.totalorder %s19, %s22
    %p31 = scmp.eq.s32.totalorder %s14, 1
    %p32 = por %p30, %p31
    %p33 = scmp.ne.s32.totalorder %s22, %s23
    %p34 = scmp.eq.s32.totalorder %s14, 0
    %p35 = por %p33, %p34
    %p36 = scmp.ne.s32.totalorder %s22, %s23
    %p37 = scmp.eq.s32.totalorder %s15, 1
    %p38 = por %p36, %p37
    %p40 = scmp.ne.s32.totalorder %s23, %s39
    %p41 = scmp.eq.s32.totalorder %s15, 0
    %p42 = por %p40, %p41
    %s44 = sadd.s32 %s43, 1
    %p47 = scmp.eq.s32.totalorder %s9, 1
    %p48 = scmp.ne.s32.totalorder %s43, %s45
    %p49 = scmp.eq.s32.totalorder %s9, 0
    %p50 = por %p48, %p49
    %p51 = scmp.ne.s32.totalorder %s43, %s45
    %p52 = scmp.eq.s32.totalorder %s14, 1
    %p53 = por %p51, %p52
    %p54 = scmp.ne.s32.totalorder %s45, %s46
    %p55 = scmp.eq.s32.totalorder %s14, 0
    %p56 = por %p54, %p55
    %p57 = scmp.ne.s32.totalorder %s45, %s46
    %p58 = scmp.eq.s32.totalorder %s15, 1
    %p59 = por %p57, %p58
    %p61 = scmp.ne.s32.totalorder %s46, %s60
    %p62 = scmp.eq.s32.totalorder %s15, 0
    %p63 = por %p61, %p62
    %s65 = sadd.s32 %s64, 1
    %p68 = scmp.eq.s32.totalorder %s9, 1
    %p69 = scmp.ne.s32.totalorder %s64, %s66
    %p70 = scmp.eq.s32.totalorder %s9, 0
    %p71 = por %p69, %p70
    %p72 = scmp.ne.s32.totalorder %s64, %s66
    %p73 = scmp.eq.s32.totalorder %s14, 1
    %p74 = por %p72, %p73
    %p75 = scmp.ne.s32.totalorder %s66, %s67
    %p76 = scmp.eq.s32.totalorder %s14, 0
    %p77 = por %p75, %p76
    %p78 = scmp.ne.s32.totalorder %s66, %s67
    %p79 = scmp.eq.s32.totalorder %s15, 1
    %p80 = por %p78, %p79
    %p82 = scmp.ne.s32.totalorder %s67, %s81
    %p83 = scmp.eq.s32.totalorder %s15, 0
    %p84 = por %p82, %p83
    %s85 = ssub.s32 %s9, %s16
    %p86 = scmp.eq.s32.totalorder %s85, 0
    %s88 = sadd.s32 %s87, 1
    %s89 = scalar_select %p86, %s87, %s88
    %p92 = pneg %p86
    %p93 = scmp.eq.s32.totalorder %s9, 1
    %p94 = por %p92, %p93
    %p95 = scmp.ne.s32.totalorder %s87, %s90
    %p96 = scmp.eq.s32.totalorder %s9, 0
    %p97 = por %p95, %p96
    %p98 = scmp.ne.s32.totalorder %s87, %s90
    %p99 = scmp.eq.s32.totalorder %s14, 1
    %p100 = por %p98, %p99
    %p101 = scmp.ne.s32.totalorder %s90, %s91
    %p102 = scmp.eq.s32.totalorder %s14, 0
    %p103 = por %p101, %p102
    %p104 = scmp.ne.s32.totalorder %s90, %s91
    %p105 = scmp.eq.s32.totalorder %s15, 1
    %p106 = por %p104, %p105
    %p108 = scmp.ne.s32.totalorder %s91, %s107
    %p109 = scmp.eq.s32.totalorder %s15, 0
    %p110 = por %p108, %p109
    %p111 = scmp.le.s32.totalorder 1, %s9
    %p112 = scmp.lt.s32.totalorder %s9, 3
    %p113 = pnand %p111, %p112
    %p114 = pneg %p113
    // Predicated region
    $region9: #{simple_view_encoder.5} parent=5 // pred_check
      _
    $region10: #{simple_view_encoder.5} parent=5 // pred_check_branch
      %116 = sbr.rel (%p113) target = $region12
    $region11: #{simple_view_encoder.5} parent=5 // pred_region
      %s117 = ssub.s32 %s9, 1
      // Predicated region
      $region13: #{simple_view_encoder.5} parent=11 // pred_check
        %p118 = pneg %p56
      $region14: #{simple_view_encoder.5} parent=11 // pred_check_branch
        %120 = sbr.rel (%p118) target = $region16
      $region15: #{simple_view_encoder.5} parent=11 // pred_region
        _
      $region16: #{simple_view_encoder.5} parent=11 // pred_fallthru
        _
      // Predicated region
      $region17: #{simple_view_encoder.5} parent=11 // pred_check
        %p121 = pneg %p77
      $region18: #{simple_view_encoder.5} parent=11 // pred_check_branch
        %123 = sbr.rel (%p121) target = $region20
      $region19: #{simple_view_encoder.5} parent=11 // pred_region
        _
      $region20: #{simple_view_encoder.5} parent=11 // pred_fallthru
        _
    $region12: #{simple_view_encoder.5} parent=5 // pred_fallthru
      _
    %p124 = scmp.lt.s32.totalorder %s9, 2
    // Predicated region
    $region21: #{simple_view_encoder.5} parent=5 // pred_check
      %p125 = pneg %p124
    $region22: #{simple_view_encoder.5} parent=5 // pred_check_branch
      %127 = sbr.rel (%p125) target = $region24
    $region23: #{simple_view_encoder.5} parent=5 // pred_region
      // Predicated region
      $region25: #{simple_view_encoder.5} parent=23 // pred_check
        %p128 = pneg %p29
      $region26: #{simple_view_encoder.5} parent=23 // pred_check_branch
        %130 = sbr.rel (%p128) target = $region28
      $region27: #{simple_view_encoder.5} parent=23 // pred_region
        %s131 = smul.u32 64, %s9
        %p132 = scmp.lt.s32.totalorder %s131, 127
        %s133 = scalar_select %p132, %s131, 127
        %s134 = smul.addr %s133, 3
        %s135 = smul.addr %s134, 4
        %s136 = scalar_lea.vmem %s0, %s135
        %s137 = smul.u32 64, %s9
      $region28: #{simple_view_encoder.5} parent=23 // pred_fallthru
        _
    $region24: #{simple_view_encoder.5} parent=5 // pred_fallthru
      _
    %p138 = scmp.le.s32.totalorder 1, %s9
    %p139 = scmp.lt.s32.totalorder %s9, 3
    %p140 = pnand %p138, %p139
    %p141 = pneg %p140
    // Predicated region
    $region29: #{simple_view_encoder.5} parent=5 // pred_check
      _
    $region30: #{simple_view_encoder.5} parent=5 // pred_check_branch
      %143 = sbr.rel (%p140) target = $region32
    $region31: #{simple_view_encoder.5} parent=5 // pred_region
      %s144 = ssub.s32 %s9, 1
      %s145 = smul.u32 64, %s14
      %p146 = scmp.lt.s32.totalorder %s145, 127
      %s147 = scalar_select %p146, %s145, 127
      %s148 = smul.addr %s147, 3
      %s149 = smul.addr %s148, 4
      %s150 = scalar_lea.vmem %s0, %s149
      %p151 = pneg %p35
      %p152 = pneg %p32
      %p153 = pneg %p56
      %p154 = pneg %p53
      %p155 = pneg %p77
      %p156 = pneg %p74
      %p157 = pneg %p103
      %p158 = pneg %p100
      %s159 = smul.u32 64, %s14
      %p160 = scmp.lt.s32.totalorder %s159, 127
      %s161 = scalar_select %p160, %s159, 127
      %s162 = smul.addr %s161, 4
      %s163 = scalar_lea.vmem %s3, %s162
      %s164 = smul.u32 64, %s14
      %p165 = scmp.lt.s32.totalorder %s164, 127
      %s166 = scalar_select %p165, %s164, 127
      %s167 = smul.addr %s166, 3
      %s168 = smul.addr %s167, 4
      %s169 = scalar_lea.vmem %s0, %s168
      %s170 = smul.u32 64, %s14
      %s171 = smul.u32 64, %s14
      %p172 = scmp.lt.s32.totalorder %s171, 127
      %s173 = scalar_select %p172, %s171, 127
      %s174 = smul.addr %s173, 4
      %s175 = scalar_lea.vmem %s3, %s174
      %s176 = smul.u32 64, %s14
      %v178 = vld [vmem:[%s169] sm:$0xff]
      %v179 = vld [vmem:[%s169 + $0x8] sm:$0xf]
      %v180 = vld [vmem:[%s169 + $0xc] sm:$0xff]
      %v181 = vld [vmem:[%s169 + $0x14] sm:$0xf]
      %v182 = vld [vmem:[%s169 + $0x18] sm:$0xff]
      %v183 = vld [vmem:[%s169 + $0x20] sm:$0xf]
      %v184 = vld [vmem:[%s169 + $0x24] sm:$0xff]
      %v185 = vld [vmem:[%s169 + $0x2c] sm:$0xf]
      %v186 = vld [vmem:[%s169 + $0x30] sm:$0xff]
      %v187 = vld [vmem:[%s169 + $0x38] sm:$0xf]
      %v188 = vld [vmem:[%s169 + $0x3c] sm:$0xff]
      %v189 = vld [vmem:[%s169 + $0x44] sm:$0xf]
      %v190 = vld [vmem:[%s169 + $0x48] sm:$0xff]
      %v191 = vld [vmem:[%s169 + $0x50] sm:$0xf]
      %v192 = vld [vmem:[%s169 + $0x54] sm:$0xff]
      %v193 = vld [vmem:[%s169 + $0x5c] sm:$0xf]
      %v194 = vld [vmem:[%s169 + $0x60] sm:$0xff]
      %v195 = vld [vmem:[%s169 + $0x68] sm:$0xf]
      %v196 = vld [vmem:[%s169 + $0x6c] sm:$0xff]
      %v197 = vld [vmem:[%s169 + $0x74] sm:$0xf]
      %v198 = vld [vmem:[%s169 + $0x78] sm:$0xff]
      %v199 = vld [vmem:[%s169 + $0x80] sm:$0xf]
      %v200 = vld [vmem:[%s169 + $0x84] sm:$0xff]
      %v201 = vld [vmem:[%s169 + $0x8c] sm:$0xf]
      %v202 = vld [vmem:[%s169 + $0x90] sm:$0xff]
      %v203 = vld [vmem:[%s169 + $0x98] sm:$0xf]
      %v204 = vld [vmem:[%s169 + $0x9c] sm:$0xff]
      %v205 = vld [vmem:[%s169 + $0xa4] sm:$0xf]
      %v206 = vld [vmem:[%s169 + $0xa8] sm:$0xff]
      %v207 = vld [vmem:[%s169 + $0xb0] sm:$0xf]
      %v208 = vld [vmem:[%s169 + $0xb4] sm:$0xff]
      %v209 = vld [vmem:[%s169 + $0xbc] sm:$0xf]
      %v210 = vld [vmem:[%s169 + $0xc0] sm:$0xff]
      %v211 = vld [vmem:[%s169 + $0xc8] sm:$0xf]
      %v212 = vld [vmem:[%s169 + $0xcc] sm:$0xff]
      %v213 = vld [vmem:[%s169 + $0xd4] sm:$0xf]
      %v214 = vld [vmem:[%s169 + $0xd8] sm:$0xff]
      %v215 = vld [vmem:[%s169 + $0xe0] sm:$0xf]
      %v216 = vld [vmem:[%s169 + $0xe4] sm:$0xff]
      %v217 = vld [vmem:[%s169 + $0xec] sm:$0xf]
      %v218 = vld [vmem:[%s169 + $0xf0] sm:$0xff]
      %v219 = vld [vmem:[%s169 + $0xf8] sm:$0xf]
      %v220 = vld [vmem:[%s169 + $0xfc] sm:$0xff]
      %v221 = vld [vmem:[%s169 + $0x104] sm:$0xf]
      %v222 = vld [vmem:[%s169 + $0x108] sm:$0xff]
      %v223 = vld [vmem:[%s169 + $0x110] sm:$0xf]
      %v224 = vld [vmem:[%s169 + $0x114] sm:$0xff]
      %v225 = vld [vmem:[%s169 + $0x11c] sm:$0xf]
      %v226 = vld [vmem:[%s169 + $0x120] sm:$0xff]
      %v227 = vld [vmem:[%s169 + $0x128] sm:$0xf]
      %v228 = vld [vmem:[%s169 + $0x12c] sm:$0xff]
      %v229 = vld [vmem:[%s169 + $0x134] sm:$0xf]
      %v230 = vld [vmem:[%s169 + $0x138] sm:$0xff]
      %v231 = vld [vmem:[%s169 + $0x140] sm:$0xf]
      %v232 = vld [vmem:[%s169 + $0x144] sm:$0xff]
      %v233 = vld [vmem:[%s169 + $0x14c] sm:$0xf]
      %v234 = vld [vmem:[%s169 + $0x150] sm:$0xff]
      %v235 = vld [vmem:[%s169 + $0x158] sm:$0xf]
      %v236 = vld [vmem:[%s169 + $0x15c] sm:$0xff]
      %v237 = vld [vmem:[%s169 + $0x164] sm:$0xf]
      %v238 = vld [vmem:[%s169 + $0x168] sm:$0xff]
      %v239 = vld [vmem:[%s169 + $0x170] sm:$0xf]
      %v240 = vld [vmem:[%s169 + $0x174] sm:$0xff]
      %v241 = vld [vmem:[%s169 + $0x17c] sm:$0xf]
      %v242 = vld [vmem:[%s169 + $0x180] sm:$0xff]
      %v243 = vld [vmem:[%s169 + $0x188] sm:$0xf]
      %v244 = vld [vmem:[%s169 + $0x18c] sm:$0xff]
      %v245 = vld [vmem:[%s169 + $0x194] sm:$0xf]
      %v246 = vld [vmem:[%s169 + $0x198] sm:$0xff]
      %v247 = vld [vmem:[%s169 + $0x1a0] sm:$0xf]
      %v248 = vld [vmem:[%s169 + $0x1a4] sm:$0xff]
      %v249 = vld [vmem:[%s169 + $0x1ac] sm:$0xf]
      %v250 = vld [vmem:[%s169 + $0x1b0] sm:$0xff]
      %v251 = vld [vmem:[%s169 + $0x1b8] sm:$0xf]
      %v252 = vld [vmem:[%s169 + $0x1bc] sm:$0xff]
      %v253 = vld [vmem:[%s169 + $0x1c4] sm:$0xf]
      %v254 = vld [vmem:[%s169 + $0x1c8] sm:$0xff]
      %v255 = vld [vmem:[%s169 + $0x1d0] sm:$0xf]
      %v256 = vld [vmem:[%s169 + $0x1d4] sm:$0xff]
      %v257 = vld [vmem:[%s169 + $0x1dc] sm:$0xf]
      %v258 = vld [vmem:[%s169 + $0x1e0] sm:$0xff]
      %v259 = vld [vmem:[%s169 + $0x1e8] sm:$0xf]
      %v260 = vld [vmem:[%s169 + $0x1ec] sm:$0xff]
      %v261 = vld [vmem:[%s169 + $0x1f4] sm:$0xf]
      %v262 = vld [vmem:[%s169 + $0x1f8] sm:$0xff]
      %v263 = vld [vmem:[%s169 + $0x200] sm:$0xf]
      %v264 = vld [vmem:[%s169 + $0x204] sm:$0xff]
      %v265 = vld [vmem:[%s169 + $0x20c] sm:$0xf]
      %v266 = vld [vmem:[%s169 + $0x210] sm:$0xff]
      %v267 = vld [vmem:[%s169 + $0x218] sm:$0xf]
      %v268 = vld [vmem:[%s169 + $0x21c] sm:$0xff]
      %v269 = vld [vmem:[%s169 + $0x224] sm:$0xf]
      %v270 = vld [vmem:[%s169 + $0x228] sm:$0xff]
      %v271 = vld [vmem:[%s169 + $0x230] sm:$0xf]
      %v272 = vld [vmem:[%s169 + $0x234] sm:$0xff]
      %v273 = vld [vmem:[%s169 + $0x23c] sm:$0xf]
      %v274 = vld [vmem:[%s169 + $0x240] sm:$0xff]
      %v275 = vld [vmem:[%s169 + $0x248] sm:$0xf]
      %v276 = vld [vmem:[%s169 + $0x24c] sm:$0xff]
      %v277 = vld [vmem:[%s169 + $0x254] sm:$0xf]
      %v278 = vld [vmem:[%s169 + $0x258] sm:$0xff]
      %v279 = vld [vmem:[%s169 + $0x260] sm:$0xf]
      %v280 = vld [vmem:[%s169 + $0x264] sm:$0xff]
      %v281 = vld [vmem:[%s169 + $0x26c] sm:$0xf]
      %v282 = vld [vmem:[%s169 + $0x270] sm:$0xff]
      %v283 = vld [vmem:[%s169 + $0x278] sm:$0xf]
      %v284 = vld [vmem:[%s169 + $0x27c] sm:$0xff]
      %v285 = vld [vmem:[%s169 + $0x284] sm:$0xf]
      %v286 = vld [vmem:[%s169 + $0x288] sm:$0xff]
      %v287 = vld [vmem:[%s169 + $0x290] sm:$0xf]
      %v288 = vld [vmem:[%s169 + $0x294] sm:$0xff]
      %v289 = vld [vmem:[%s169 + $0x29c] sm:$0xf]
      %v290 = vld [vmem:[%s169 + $0x2a0] sm:$0xff]
      %v291 = vld [vmem:[%s169 + $0x2a8] sm:$0xf]
      %v292 = vld [vmem:[%s169 + $0x2ac] sm:$0xff]
      %v293 = vld [vmem:[%s169 + $0x2b4] sm:$0xf]
      %v294 = vld [vmem:[%s169 + $0x2b8] sm:$0xff]
      %v295 = vld [vmem:[%s169 + $0x2c0] sm:$0xf]
      %v296 = vld [vmem:[%s169 + $0x2c4] sm:$0xff]
      %v297 = vld [vmem:[%s169 + $0x2cc] sm:$0xf]
      %v298 = vld [vmem:[%s169 + $0x2d0] sm:$0xff]
      %v299 = vld [vmem:[%s169 + $0x2d8] sm:$0xf]
      %v300 = vld [vmem:[%s169 + $0x2dc] sm:$0xff]
      %v301 = vld [vmem:[%s169 + $0x2e4] sm:$0xf]
      %v302 = vld [vmem:[%s169 + $0x2e8] sm:$0xff]
      %v303 = vld [vmem:[%s169 + $0x2f0] sm:$0xf]
      %v304 = vld [vmem:[%s169 + $0x2f4] sm:$0xff]
      %v305 = vld [vmem:[%s169 + $0x2fc] sm:$0xf]
      %v306 = vld [vmem:[%s1] sm:$0xf]
      %v307 = vld [vmem:[%s1 + $0x4] sm:$0xf]
      %v308 = vld [vmem:[%s1 + $0x8] sm:$0xf]
      %v309 = vld [vmem:[%s1 + $0xc] sm:$0xf]
      %v310 = vld [vmem:[%s1 + $0x10] sm:$0xf]
      %v311 = vld [vmem:[%s1 + $0x14] sm:$0xf]
      %v312 = vld [vmem:[%s1 + $0x18] sm:$0xf]
      %v313 = vld [vmem:[%s1 + $0x1c] sm:$0xf]
      %v314 = vld [vmem:[%s1 + $0x20] sm:$0xf]
      %v315 = vld [vmem:[%s1 + $0x24] sm:$0xf]
      %v316 = vld [vmem:[%s1 + $0x28] sm:$0xf]
      %v317 = vld [vmem:[%s1 + $0x2c] sm:$0xf]
      %v318 = vld [vmem:[%s1 + $0x30] sm:$0xf]
      %v319 = vld [vmem:[%s1 + $0x34] sm:$0xf]
      %v320 = vld [vmem:[%s1 + $0x38] sm:$0xf]
      %v321 = vld [vmem:[%s1 + $0x3c] sm:$0xf]
      %v322 = vld [vmem:[%s1 + $0x40] sm:$0xf]
      %v323 = vld [vmem:[%s1 + $0x44] sm:$0xf]
      %v324 = vld [vmem:[%s1 + $0x48] sm:$0xf]
      %v325 = vld [vmem:[%s1 + $0x4c] sm:$0xf]
      %v326 = vld [vmem:[%s1 + $0x50] sm:$0xf]
      %v327 = vld [vmem:[%s1 + $0x54] sm:$0xf]
      %v328 = vld [vmem:[%s1 + $0x58] sm:$0xf]
      %v329 = vld [vmem:[%s1 + $0x5c] sm:$0xf]
      %v330 = vld [vmem:[%s1 + $0x60] sm:$0xf]
      %v331 = vld [vmem:[%s1 + $0x64] sm:$0xf]
      %v332 = vld [vmem:[%s1 + $0x68] sm:$0xf]
      %v333 = vld [vmem:[%s1 + $0x6c] sm:$0xf]
      %v334 = vld [vmem:[%s1 + $0x70] sm:$0xf]
      %v335 = vld [vmem:[%s1 + $0x74] sm:$0xf]
      %v336 = vld [vmem:[%s1 + $0x78] sm:$0xf]
      %v337 = vld [vmem:[%s1 + $0x7c] sm:$0xf]
      %v338 = vld [vmem:[%s1 + $0x80] sm:$0xf]
      %v339 = vld [vmem:[%s1 + $0x84] sm:$0xf]
      %v340 = vld [vmem:[%s1 + $0x88] sm:$0xf]
      %v341 = vld [vmem:[%s1 + $0x8c] sm:$0xf]
      %v342 = vld [vmem:[%s2] sm:$0x1]
      %v344 = vlaneseq
      %v345 = vshrl.u32 %v344, 7
      %v346 = vsub.s32 0, %v345
      %v347 = vrot.slane %v342, %v346
      %v477 = vunpack.c.l.b16 %v178
      %v478 = vunpack.c.h.b16 %v178
      %v479 = vunpack.c.l.b16 %v179
      %v480 = vunpack.c.l.b16 %v180
      %v481 = vunpack.c.h.b16 %v180
      %v482 = vunpack.c.l.b16 %v181
      %v483 = vunpack.c.l.b16 %v182
      %v484 = vunpack.c.h.b16 %v182
      %v485 = vunpack.c.l.b16 %v183
      %v486 = vunpack.c.l.b16 %v184
      %v487 = vunpack.c.h.b16 %v184
      %v488 = vunpack.c.l.b16 %v185
      %v489 = vunpack.c.l.b16 %v186
      %v490 = vunpack.c.h.b16 %v186
      %v491 = vunpack.c.l.b16 %v187
      %v492 = vunpack.c.l.b16 %v188
      %v493 = vunpack.c.h.b16 %v188
      %v494 = vunpack.c.l.b16 %v189
      %v495 = vunpack.c.l.b16 %v190
      %v496 = vunpack.c.h.b16 %v190
      %v497 = vunpack.c.l.b16 %v191
      %v498 = vunpack.c.l.b16 %v192
      %v499 = vunpack.c.h.b16 %v192
      %v500 = vunpack.c.l.b16 %v193
      %v501 = vunpack.c.l.b16 %v194
      %v502 = vunpack.c.h.b16 %v194
      %v503 = vunpack.c.l.b16 %v195
      %v504 = vunpack.c.l.b16 %v196
      %v505 = vunpack.c.h.b16 %v196
      %v506 = vunpack.c.l.b16 %v197
      %v507 = vunpack.c.l.b16 %v198
      %v508 = vunpack.c.h.b16 %v198
      %v509 = vunpack.c.l.b16 %v199
      %v510 = vunpack.c.l.b16 %v200
      %v511 = vunpack.c.h.b16 %v200
      %v512 = vunpack.c.l.b16 %v201
      %v513 = vunpack.c.l.b16 %v202
      %v514 = vunpack.c.h.b16 %v202
      %v515 = vunpack.c.l.b16 %v203
      %v516 = vunpack.c.l.b16 %v204
      %v517 = vunpack.c.h.b16 %v204
      %v518 = vunpack.c.l.b16 %v205
      %v519 = vunpack.c.l.b16 %v206
      %v520 = vunpack.c.h.b16 %v206
      %v521 = vunpack.c.l.b16 %v207
      %v522 = vunpack.c.l.b16 %v208
      %v523 = vunpack.c.h.b16 %v208
      %v524 = vunpack.c.l.b16 %v209
      %v525 = vunpack.c.l.b16 %v210
      %v526 = vunpack.c.h.b16 %v210
      %v527 = vunpack.c.l.b16 %v211
      %v528 = vunpack.c.l.b16 %v212
      %v529 = vunpack.c.h.b16 %v212
      %v530 = vunpack.c.l.b16 %v213
      %v531 = vunpack.c.l.b16 %v214
      %v532 = vunpack.c.h.b16 %v214
      %v533 = vunpack.c.l.b16 %v215
      %v534 = vunpack.c.l.b16 %v216
      %v535 = vunpack.c.h.b16 %v216
      %v536 = vunpack.c.l.b16 %v217
      %v537 = vunpack.c.l.b16 %v218
      %v538 = vunpack.c.h.b16 %v218
      %v539 = vunpack.c.l.b16 %v219
      %v540 = vunpack.c.l.b16 %v220
      %v541 = vunpack.c.h.b16 %v220
      %v542 = vunpack.c.l.b16 %v221
      %v543 = vunpack.c.l.b16 %v222
      %v544 = vunpack.c.h.b16 %v222
      %v545 = vunpack.c.l.b16 %v223
      %v546 = vunpack.c.l.b16 %v224
      %v547 = vunpack.c.h.b16 %v224
      %v548 = vunpack.c.l.b16 %v225
      %v549 = vunpack.c.l.b16 %v226
      %v550 = vunpack.c.h.b16 %v226
      %v551 = vunpack.c.l.b16 %v227
      %v552 = vunpack.c.l.b16 %v228
      %v553 = vunpack.c.h.b16 %v228
      %v554 = vunpack.c.l.b16 %v229
      %v555 = vunpack.c.l.b16 %v230
      %v556 = vunpack.c.h.b16 %v230
      %v557 = vunpack.c.l.b16 %v231
      %v558 = vunpack.c.l.b16 %v232
      %v559 = vunpack.c.h.b16 %v232
      %v560 = vunpack.c.l.b16 %v233
      %v561 = vunpack.c.l.b16 %v234
      %v562 = vunpack.c.h.b16 %v234
      %v563 = vunpack.c.l.b16 %v235
      %v564 = vunpack.c.l.b16 %v236
      %v565 = vunpack.c.h.b16 %v236
      %v566 = vunpack.c.l.b16 %v237
      %v567 = vunpack.c.l.b16 %v238
      %v568 = vunpack.c.h.b16 %v238
      %v569 = vunpack.c.l.b16 %v239
      %v570 = vunpack.c.l.b16 %v240
      %v571 = vunpack.c.h.b16 %v240
      %v572 = vunpack.c.l.b16 %v241
      %v573 = vunpack.c.l.b16 %v242
      %v574 = vunpack.c.h.b16 %v242
      %v575 = vunpack.c.l.b16 %v243
      %v576 = vunpack.c.l.b16 %v244
      %v577 = vunpack.c.h.b16 %v244
      %v578 = vunpack.c.l.b16 %v245
      %v579 = vunpack.c.l.b16 %v246
      %v580 = vunpack.c.h.b16 %v246
      %v581 = vunpack.c.l.b16 %v247
      %v582 = vunpack.c.l.b16 %v248
      %v583 = vunpack.c.h.b16 %v248
      %v584 = vunpack.c.l.b16 %v249
      %v585 = vunpack.c.l.b16 %v250
      %v586 = vunpack.c.h.b16 %v250
      %v587 = vunpack.c.l.b16 %v251
      %v588 = vunpack.c.l.b16 %v252
      %v589 = vunpack.c.h.b16 %v252
      %v590 = vunpack.c.l.b16 %v253
      %v591 = vunpack.c.l.b16 %v254
      %v592 = vunpack.c.h.b16 %v254
      %v593 = vunpack.c.l.b16 %v255
      %v594 = vunpack.c.l.b16 %v256
      %v595 = vunpack.c.h.b16 %v256
      %v596 = vunpack.c.l.b16 %v257
      %v597 = vunpack.c.l.b16 %v258
      %v598 = vunpack.c.h.b16 %v258
      %v599 = vunpack.c.l.b16 %v259
      %v600 = vunpack.c.l.b16 %v260
      %v601 = vunpack.c.h.b16 %v260
      %v602 = vunpack.c.l.b16 %v261
      %v603 = vunpack.c.l.b16 %v262
      %v604 = vunpack.c.h.b16 %v262
      %v605 = vunpack.c.l.b16 %v263
      %v606 = vunpack.c.l.b16 %v264
      %v607 = vunpack.c.h.b16 %v264
      %v608 = vunpack.c.l.b16 %v265
      %v609 = vunpack.c.l.b16 %v266
      %v610 = vunpack.c.h.b16 %v266
      %v611 = vunpack.c.l.b16 %v267
      %v612 = vunpack.c.l.b16 %v268
      %v613 = vunpack.c.h.b16 %v268
      %v614 = vunpack.c.l.b16 %v269
      %v615 = vunpack.c.l.b16 %v270
      %v616 = vunpack.c.h.b16 %v270
      %v617 = vunpack.c.l.b16 %v271
      %v618 = vunpack.c.l.b16 %v272
      %v619 = vunpack.c.h.b16 %v272
      %v620 = vunpack.c.l.b16 %v273
      %v621 = vunpack.c.l.b16 %v274
      %v622 = vunpack.c.h.b16 %v274
      %v623 = vunpack.c.l.b16 %v275
      %v624 = vunpack.c.l.b16 %v276
      %v625 = vunpack.c.h.b16 %v276
      %v626 = vunpack.c.l.b16 %v277
      %v627 = vunpack.c.l.b16 %v278
      %v628 = vunpack.c.h.b16 %v278
      %v629 = vunpack.c.l.b16 %v279
      %v630 = vunpack.c.l.b16 %v280
      %v631 = vunpack.c.h.b16 %v280
      %v632 = vunpack.c.l.b16 %v281
      %v633 = vunpack.c.l.b16 %v282
      %v634 = vunpack.c.h.b16 %v282
      %v635 = vunpack.c.l.b16 %v283
      %v636 = vunpack.c.l.b16 %v284
      %v637 = vunpack.c.h.b16 %v284
      %v638 = vunpack.c.l.b16 %v285
      %v639 = vunpack.c.l.b16 %v286
      %v640 = vunpack.c.h.b16 %v286
      %v641 = vunpack.c.l.b16 %v287
      %v642 = vunpack.c.l.b16 %v288
      %v643 = vunpack.c.h.b16 %v288
      %v644 = vunpack.c.l.b16 %v289
      %v645 = vunpack.c.l.b16 %v290
      %v646 = vunpack.c.h.b16 %v290
      %v647 = vunpack.c.l.b16 %v291
      %v648 = vunpack.c.l.b16 %v292
      %v649 = vunpack.c.h.b16 %v292
      %v650 = vunpack.c.l.b16 %v293
      %v651 = vunpack.c.l.b16 %v294
      %v652 = vunpack.c.h.b16 %v294
      %v653 = vunpack.c.l.b16 %v295
      %v654 = vunpack.c.l.b16 %v296
      %v655 = vunpack.c.h.b16 %v296
      %v656 = vunpack.c.l.b16 %v297
      %v657 = vunpack.c.l.b16 %v298
      %v658 = vunpack.c.h.b16 %v298
      %v659 = vunpack.c.l.b16 %v299
      %v660 = vunpack.c.l.b16 %v300
      %v661 = vunpack.c.h.b16 %v300
      %v662 = vunpack.c.l.b16 %v301
      %v663 = vunpack.c.l.b16 %v302
      %v664 = vunpack.c.h.b16 %v302
      %v665 = vunpack.c.l.b16 %v303
      %v666 = vunpack.c.l.b16 %v304
      %v667 = vunpack.c.h.b16 %v304
      %v668 = vunpack.c.l.b16 %v305
      %v669 = vpack.c.b16 %v480, %v477
      %v670 = vpack.c.b16 %v481, %v478
      %v671 = vpack.c.b16 %v482, %v479
      %v672 = vpack.c.b16 %v486, %v483
      %v673 = vpack.c.b16 %v487, %v484
      %v674 = vpack.c.b16 %v488, %v485
      %v675 = vpack.c.b16 %v492, %v489
      %v676 = vpack.c.b16 %v493, %v490
      %v677 = vpack.c.b16 %v494, %v491
      %v678 = vpack.c.b16 %v498, %v495
      %v679 = vpack.c.b16 %v499, %v496
      %v680 = vpack.c.b16 %v500, %v497
      %v681 = vpack.c.b16 %v504, %v501
      %v682 = vpack.c.b16 %v505, %v502
      %v683 = vpack.c.b16 %v506, %v503
      %v684 = vpack.c.b16 %v510, %v507
      %v685 = vpack.c.b16 %v511, %v508
      %v686 = vpack.c.b16 %v512, %v509
      %v687 = vpack.c.b16 %v516, %v513
      %v688 = vpack.c.b16 %v517, %v514
      %v689 = vpack.c.b16 %v518, %v515
      %v690 = vpack.c.b16 %v522, %v519
      %v691 = vpack.c.b16 %v523, %v520
      %v692 = vpack.c.b16 %v524, %v521
      %v693 = vpack.c.b16 %v528, %v525
      %v694 = vpack.c.b16 %v529, %v526
      %v695 = vpack.c.b16 %v530, %v527
      %v696 = vpack.c.b16 %v534, %v531
      %v697 = vpack.c.b16 %v535, %v532
      %v698 = vpack.c.b16 %v536, %v533
      %v699 = vpack.c.b16 %v540, %v537
      %v700 = vpack.c.b16 %v541, %v538
      %v701 = vpack.c.b16 %v542, %v539
      %v702 = vpack.c.b16 %v546, %v543
      %v703 = vpack.c.b16 %v547, %v544
      %v704 = vpack.c.b16 %v548, %v545
      %v705 = vpack.c.b16 %v552, %v549
      %v706 = vpack.c.b16 %v553, %v550
      %v707 = vpack.c.b16 %v554, %v551
      %v708 = vpack.c.b16 %v558, %v555
      %v709 = vpack.c.b16 %v559, %v556
      %v710 = vpack.c.b16 %v560, %v557
      %v711 = vpack.c.b16 %v564, %v561
      %v712 = vpack.c.b16 %v565, %v562
      %v713 = vpack.c.b16 %v566, %v563
      %v714 = vpack.c.b16 %v570, %v567
      %v715 = vpack.c.b16 %v571, %v568
      %v716 = vpack.c.b16 %v572, %v569
      %v717 = vpack.c.b16 %v576, %v573
      %v718 = vpack.c.b16 %v577, %v574
      %v719 = vpack.c.b16 %v578, %v575
      %v720 = vpack.c.b16 %v582, %v579
      %v721 = vpack.c.b16 %v583, %v580
      %v722 = vpack.c.b16 %v584, %v581
      %v723 = vpack.c.b16 %v588, %v585
      %v724 = vpack.c.b16 %v589, %v586
      %v725 = vpack.c.b16 %v590, %v587
      %v726 = vpack.c.b16 %v594, %v591
      %v727 = vpack.c.b16 %v595, %v592
      %v728 = vpack.c.b16 %v596, %v593
      %v729 = vpack.c.b16 %v600, %v597
      %v730 = vpack.c.b16 %v601, %v598
      %v731 = vpack.c.b16 %v602, %v599
      %v732 = vpack.c.b16 %v606, %v603
      %v733 = vpack.c.b16 %v607, %v604
      %v734 = vpack.c.b16 %v608, %v605
      %v735 = vpack.c.b16 %v612, %v609
      %v736 = vpack.c.b16 %v613, %v610
      %v737 = vpack.c.b16 %v614, %v611
      %v738 = vpack.c.b16 %v618, %v615
      %v739 = vpack.c.b16 %v619, %v616
      %v740 = vpack.c.b16 %v620, %v617
      %v741 = vpack.c.b16 %v624, %v621
      %v742 = vpack.c.b16 %v625, %v622
      %v743 = vpack.c.b16 %v626, %v623
      %v744 = vpack.c.b16 %v630, %v627
      %v745 = vpack.c.b16 %v631, %v628
      %v746 = vpack.c.b16 %v632, %v629
      %v747 = vpack.c.b16 %v636, %v633
      %v748 = vpack.c.b16 %v637, %v634
      %v749 = vpack.c.b16 %v638, %v635
      %v750 = vpack.c.b16 %v642, %v639
      %v751 = vpack.c.b16 %v643, %v640
      %v752 = vpack.c.b16 %v644, %v641
      %v753 = vpack.c.b16 %v648, %v645
      %v754 = vpack.c.b16 %v649, %v646
      %v755 = vpack.c.b16 %v650, %v647
      %v756 = vpack.c.b16 %v654, %v651
      %v757 = vpack.c.b16 %v655, %v652
      %v758 = vpack.c.b16 %v656, %v653
      %v759 = vpack.c.b16 %v660, %v657
      %v760 = vpack.c.b16 %v661, %v658
      %v761 = vpack.c.b16 %v662, %v659
      %v762 = vpack.c.b16 %v666, %v663
      %v763 = vpack.c.b16 %v667, %v664
      %v764 = vpack.c.b16 %v668, %v665
      %v865 = vunpack.c.l.b16 %v306
      %v866 = vunpack.c.l.b16 %v307
      %v867 = vunpack.c.l.b16 %v308
      %v868 = vunpack.c.l.b16 %v309
      %v869 = vunpack.c.l.b16 %v310
      %v870 = vunpack.c.l.b16 %v311
      %v871 = vunpack.c.l.b16 %v312
      %v872 = vunpack.c.l.b16 %v313
      %v873 = vunpack.c.l.b16 %v314
      %v874 = vunpack.c.l.b16 %v315
      %v875 = vunpack.c.l.b16 %v316
      %v876 = vunpack.c.l.b16 %v317
      %v877 = vunpack.c.l.b16 %v318
      %v878 = vunpack.c.l.b16 %v319
      %v879 = vunpack.c.l.b16 %v320
      %v880 = vunpack.c.l.b16 %v321
      %v881 = vunpack.c.l.b16 %v322
      %v882 = vunpack.c.l.b16 %v323
      %v883 = vunpack.c.l.b16 %v324
      %v884 = vunpack.c.l.b16 %v325
      %v885 = vunpack.c.l.b16 %v326
      %v886 = vunpack.c.l.b16 %v327
      %v887 = vunpack.c.l.b16 %v328
      %v888 = vunpack.c.l.b16 %v329
      %v889 = vunpack.c.l.b16 %v330
      %v890 = vunpack.c.l.b16 %v331
      %v891 = vunpack.c.l.b16 %v332
      %v892 = vunpack.c.l.b16 %v333
      %v893 = vunpack.c.l.b16 %v334
      %v894 = vunpack.c.l.b16 %v335
      %v895 = vunpack.c.l.b16 %v336
      %v896 = vunpack.c.l.b16 %v337
      %v897 = vunpack.c.l.b16 %v338
      %v898 = vunpack.c.l.b16 %v339
      %v899 = vunpack.c.l.b16 %v340
      %v900 = vunpack.c.l.b16 %v341
      %v901 = vpack.c.b16 %v866, %v865
      %v902 = vpack.c.b16 %v868, %v867
      %v903 = vpack.c.b16 %v870, %v869
      %v904 = vpack.c.b16 %v872, %v871
      %v905 = vpack.c.b16 %v874, %v873
      %v906 = vpack.c.b16 %v876, %v875
      %v907 = vpack.c.b16 %v878, %v877
      %v908 = vpack.c.b16 %v880, %v879
      %v909 = vpack.c.b16 %v882, %v881
      %v910 = vpack.c.b16 %v884, %v883
      %v911 = vpack.c.b16 %v886, %v885
      %v912 = vpack.c.b16 %v888, %v887
      %v913 = vpack.c.b16 %v890, %v889
      %v914 = vpack.c.b16 %v892, %v891
      %v915 = vpack.c.b16 %v894, %v893
      %v916 = vpack.c.b16 %v896, %v895
      %v917 = vpack.c.b16 %v898, %v897
      %v918 = vpack.c.b16 %v900, %v899
      %vm937 = vcmask 261120
      %v939 = vsel %vm937, %v671, 0
      %v942 = vsel %vm937, %v674, 0
      %v945 = vsel %vm937, %v677, 0
      %v948 = vsel %vm937, %v680, 0
      %v951 = vsel %vm937, %v683, 0
      %v954 = vsel %vm937, %v686, 0
      %v957 = vsel %vm937, %v689, 0
      %v960 = vsel %vm937, %v692, 0
      %v963 = vsel %vm937, %v695, 0
      %v966 = vsel %vm937, %v698, 0
      %v969 = vsel %vm937, %v701, 0
      %v972 = vsel %vm937, %v704, 0
      %v975 = vsel %vm937, %v707, 0
      %v978 = vsel %vm937, %v710, 0
      %v981 = vsel %vm937, %v713, 0
      %v984 = vsel %vm937, %v716, 0
      %v987 = vsel %vm937, %v719, 0
      %v990 = vsel %vm937, %v722, 0
      %v993 = vsel %vm937, %v725, 0
      %v996 = vsel %vm937, %v728, 0
      %v999 = vsel %vm937, %v731, 0
      %v1002 = vsel %vm937, %v734, 0
      %v1005 = vsel %vm937, %v737, 0
      %v1008 = vsel %vm937, %v740, 0
      %v1011 = vsel %vm937, %v743, 0
      %v1014 = vsel %vm937, %v746, 0
      %v1017 = vsel %vm937, %v749, 0
      %v1020 = vsel %vm937, %v752, 0
      %v1023 = vsel %vm937, %v755, 0
      %v1026 = vsel %vm937, %v758, 0
      %v1029 = vsel %vm937, %v761, 0
      %v1032 = vsel %vm937, %v764, 0
      %1034 = vmatprep.subr.bf16.mxu0 0
      %1035 = vmatpush1.bf16.msra.mxu0 %v908
      %1036 = vmatprep.subr.bf16.mxu0 0
      %1037 = vmatpush1.bf16.msra.mxu0 %v907
      %1038 = vmatprep.subr.bf16.mxu0 0
      %1039 = vmatpush1.bf16.msra.mxu0 %v906
      %1040 = vmatprep.subr.bf16.mxu0 0
      %1041 = vmatpush1.bf16.msra.mxu0 %v905
      %1042 = vmatprep.subr.bf16.mxu0 0
      %1043 = vmatpush1.bf16.msra.mxu0 %v904
      %1044 = vmatprep.subr.bf16.mxu0 0
      %1045 = vmatpush1.bf16.msra.mxu0 %v903
      %1046 = vmatprep.subr.bf16.mxu0 0
      %1047 = vmatpush1.bf16.msra.mxu0 %v902
      %1048 = vmatprep.subr.bf16.mxu0 0
      %1049 = vmatpush1.bf16.msra.mxu0 %v901
      %1050 = vmatprep.subr.bf16.mxu0 0
      %1051 = vmatpush2.bf16.msra.mxu0 %v916
      %1052 = vmatprep.subr.bf16.mxu0 0
      %1053 = vmatpush2.bf16.msra.mxu0 %v915
      %1054 = vmatprep.subr.bf16.mxu0 0
      %1055 = vmatpush2.bf16.msra.mxu0 %v914
      %1056 = vmatprep.subr.bf16.mxu0 0
      %1057 = vmatpush2.bf16.msra.mxu0 %v913
      %1058 = vmatprep.subr.bf16.mxu0 0
      %1059 = vmatpush2.bf16.msra.mxu0 %v912
      %1060 = vmatprep.subr.bf16.mxu0 0
      %1061 = vmatpush2.bf16.msra.mxu0 %v911
      %1062 = vmatprep.subr.bf16.mxu0 0
      %1063 = vmatpush2.bf16.msra.mxu0 %v910
      %1064 = vmatprep.subr.bf16.mxu0 0
      %1065 = vmatpush2.bf16.msra.mxu0 %v909
      %1066 = vmatprep.mubr.bf16.mxu0 %v670
      %1067 = vmatmul.mubr.bf16.gmra.mxu0 %v669
      %v1068 = vpop.f32.mrf.mxu0
      %v1069 = vadd.f32 %v347, %v1068
      %v1070 = vpop.f32.mrf.mxu0
      %v1071 = vpop.f32.mrf.mxu0
      %v1072 = vadd.f32 %v347, %v1071
      %v1073 = vpop.f32.mrf.mxu0
      %1074 = vmatprep.mubr.bf16.mxu0 %v673
      %1075 = vmatmul.mubr.bf16.gmra.mxu0 %v672
      %v1076 = vpop.f32.mrf.mxu0
      %v1077 = vadd.f32 %v347, %v1076
      %v1078 = vpop.f32.mrf.mxu0
      %v1079 = vpop.f32.mrf.mxu0
      %v1080 = vadd.f32 %v347, %v1079
      %v1081 = vpop.f32.mrf.mxu0
      %1082 = vmatprep.mubr.bf16.mxu0 %v676
      %1083 = vmatmul.mubr.bf16.gmra.mxu0 %v675
      %v1084 = vpop.f32.mrf.mxu0
      %v1085 = vadd.f32 %v347, %v1084
      %v1086 = vpop.f32.mrf.mxu0
      %v1087 = vpop.f32.mrf.mxu0
      %v1088 = vadd.f32 %v347, %v1087
      %v1089 = vpop.f32.mrf.mxu0
      %1090 = vmatprep.mubr.bf16.mxu0 %v679
      %1091 = vmatmul.mubr.bf16.gmra.mxu0 %v678
      %v1092 = vpop.f32.mrf.mxu0
      %v1093 = vadd.f32 %v347, %v1092
      %v1094 = vpop.f32.mrf.mxu0
      %v1095 = vpop.f32.mrf.mxu0
      %v1096 = vadd.f32 %v347, %v1095
      %v1097 = vpop.f32.mrf.mxu0
      %1098 = vmatprep.mubr.bf16.mxu0 %v682
      %1099 = vmatmul.mubr.bf16.gmra.mxu0 %v681
      %v1100 = vpop.f32.mrf.mxu0
      %v1101 = vadd.f32 %v347, %v1100
      %v1102 = vpop.f32.mrf.mxu0
      %v1103 = vpop.f32.mrf.mxu0
      %v1104 = vadd.f32 %v347, %v1103
      %v1105 = vpop.f32.mrf.mxu0
      %1106 = vmatprep.mubr.bf16.mxu0 %v685
      %1107 = vmatmul.mubr.bf16.gmra.mxu0 %v684
      %v1108 = vpop.f32.mrf.mxu0
      %v1109 = vadd.f32 %v347, %v1108
      %v1110 = vpop.f32.mrf.mxu0
      %v1111 = vpop.f32.mrf.mxu0
      %v1112 = vadd.f32 %v347, %v1111
      %v1113 = vpop.f32.mrf.mxu0
      %1114 = vmatprep.mubr.bf16.mxu0 %v688
      %1115 = vmatmul.mubr.bf16.gmra.mxu0 %v687
      %v1116 = vpop.f32.mrf.mxu0
      %v1117 = vadd.f32 %v347, %v1116
      %v1118 = vpop.f32.mrf.mxu0
      %v1119 = vpop.f32.mrf.mxu0
      %v1120 = vadd.f32 %v347, %v1119
      %v1121 = vpop.f32.mrf.mxu0
      %1122 = vmatprep.mubr.bf16.mxu0 %v691
      %1123 = vmatmul.mubr.bf16.gmra.mxu0 %v690
      %v1124 = vpop.f32.mrf.mxu0
      %v1125 = vadd.f32 %v347, %v1124
      %v1126 = vpop.f32.mrf.mxu0
      %v1127 = vpop.f32.mrf.mxu0
      %v1128 = vadd.f32 %v347, %v1127
      %v1129 = vpop.f32.mrf.mxu0
      %1130 = vmatprep.mubr.bf16.mxu0 %v694
      %1131 = vmatmul.mubr.bf16.gmra.mxu0 %v693
      %v1132 = vpop.f32.mrf.mxu0
      %v1133 = vadd.f32 %v347, %v1132
      %v1134 = vpop.f32.mrf.mxu0
      %v1135 = vpop.f32.mrf.mxu0
      %v1136 = vadd.f32 %v347, %v1135
      %v1137 = vpop.f32.mrf.mxu0
      %1138 = vmatprep.mubr.bf16.mxu0 %v697
      %1139 = vmatmul.mubr.bf16.gmra.mxu0 %v696
      %v1140 = vpop.f32.mrf.mxu0
      %v1141 = vadd.f32 %v347, %v1140
      %v1142 = vpop.f32.mrf.mxu0
      %v1143 = vpop.f32.mrf.mxu0
      %v1144 = vadd.f32 %v347, %v1143
      %v1145 = vpop.f32.mrf.mxu0
      %1146 = vmatprep.mubr.bf16.mxu0 %v700
      %1147 = vmatmul.mubr.bf16.gmra.mxu0 %v699
      %v1148 = vpop.f32.mrf.mxu0
      %v1149 = vadd.f32 %v347, %v1148
      %v1150 = vpop.f32.mrf.mxu0
      %v1151 = vpop.f32.mrf.mxu0
      %v1152 = vadd.f32 %v347, %v1151
      %v1153 = vpop.f32.mrf.mxu0
      %1154 = vmatprep.mubr.bf16.mxu0 %v703
      %1155 = vmatmul.mubr.bf16.gmra.mxu0 %v702
      %v1156 = vpop.f32.mrf.mxu0
      %v1157 = vadd.f32 %v347, %v1156
      %v1158 = vpop.f32.mrf.mxu0
      %v1159 = vpop.f32.mrf.mxu0
      %v1160 = vadd.f32 %v347, %v1159
      %v1161 = vpop.f32.mrf.mxu0
      %1162 = vmatprep.mubr.bf16.mxu0 %v706
      %1163 = vmatmul.mubr.bf16.gmra.mxu0 %v705
      %v1164 = vpop.f32.mrf.mxu0
      %v1165 = vadd.f32 %v347, %v1164
      %v1166 = vpop.f32.mrf.mxu0
      %v1167 = vpop.f32.mrf.mxu0
      %v1168 = vadd.f32 %v347, %v1167
      %v1169 = vpop.f32.mrf.mxu0
      %1170 = vmatprep.mubr.bf16.mxu0 %v709
      %1171 = vmatmul.mubr.bf16.gmra.mxu0 %v708
      %v1172 = vpop.f32.mrf.mxu0
      %v1173 = vadd.f32 %v347, %v1172
      %v1174 = vpop.f32.mrf.mxu0
      %v1175 = vpop.f32.mrf.mxu0
      %v1176 = vadd.f32 %v347, %v1175
      %v1177 = vpop.f32.mrf.mxu0
      %1178 = vmatprep.mubr.bf16.mxu0 %v712
      %1179 = vmatmul.mubr.bf16.gmra.mxu0 %v711
      %v1180 = vpop.f32.mrf.mxu0
      %v1181 = vadd.f32 %v347, %v1180
      %v1182 = vpop.f32.mrf.mxu0
      %v1183 = vpop.f32.mrf.mxu0
      %v1184 = vadd.f32 %v347, %v1183
      %v1185 = vpop.f32.mrf.mxu0
      %1186 = vmatprep.mubr.bf16.mxu0 %v715
      %1187 = vmatmul.mubr.bf16.gmra.mxu0 %v714
      %v1188 = vpop.f32.mrf.mxu0
      %v1189 = vadd.f32 %v347, %v1188
      %v1190 = vpop.f32.mrf.mxu0
      %v1191 = vpop.f32.mrf.mxu0
      %v1192 = vadd.f32 %v347, %v1191
      %v1193 = vpop.f32.mrf.mxu0
      %1194 = vmatprep.mubr.bf16.mxu0 %v718
      %1195 = vmatmul.mubr.bf16.gmra.mxu0 %v717
      %v1196 = vpop.f32.mrf.mxu0
      %v1197 = vadd.f32 %v347, %v1196
      %v1198 = vpop.f32.mrf.mxu0
      %v1199 = vpop.f32.mrf.mxu0
      %v1200 = vadd.f32 %v347, %v1199
      %v1201 = vpop.f32.mrf.mxu0
      %1202 = vmatprep.mubr.bf16.mxu0 %v721
      %1203 = vmatmul.mubr.bf16.gmra.mxu0 %v720
      %v1204 = vpop.f32.mrf.mxu0
      %v1205 = vadd.f32 %v347, %v1204
      %v1206 = vpop.f32.mrf.mxu0
      %v1207 = vpop.f32.mrf.mxu0
      %v1208 = vadd.f32 %v347, %v1207
      %v1209 = vpop.f32.mrf.mxu0
      %1210 = vmatprep.mubr.bf16.mxu0 %v724
      %1211 = vmatmul.mubr.bf16.gmra.mxu0 %v723
      %v1212 = vpop.f32.mrf.mxu0
      %v1213 = vadd.f32 %v347, %v1212
      %v1214 = vpop.f32.mrf.mxu0
      %v1215 = vpop.f32.mrf.mxu0
      %v1216 = vadd.f32 %v347, %v1215
      %v1217 = vpop.f32.mrf.mxu0
      %1218 = vmatprep.mubr.bf16.mxu0 %v727
      %1219 = vmatmul.mubr.bf16.gmra.mxu0 %v726
      %v1220 = vpop.f32.mrf.mxu0
      %v1221 = vadd.f32 %v347, %v1220
      %v1222 = vpop.f32.mrf.mxu0
      %v1223 = vpop.f32.mrf.mxu0
      %v1224 = vadd.f32 %v347, %v1223
      %v1225 = vpop.f32.mrf.mxu0
      %1226 = vmatprep.mubr.bf16.mxu0 %v730
      %1227 = vmatmul.mubr.bf16.gmra.mxu0 %v729
      %v1228 = vpop.f32.mrf.mxu0
      %v1229 = vadd.f32 %v347, %v1228
      %v1230 = vpop.f32.mrf.mxu0
      %v1231 = vpop.f32.mrf.mxu0
      %v1232 = vadd.f32 %v347, %v1231
      %v1233 = vpop.f32.mrf.mxu0
      %1234 = vmatprep.mubr.bf16.mxu0 %v733
      %1235 = vmatmul.mubr.bf16.gmra.mxu0 %v732
      %v1236 = vpop.f32.mrf.mxu0
      %v1237 = vadd.f32 %v347, %v1236
      %v1238 = vpop.f32.mrf.mxu0
      %v1239 = vpop.f32.mrf.mxu0
      %v1240 = vadd.f32 %v347, %v1239
      %v1241 = vpop.f32.mrf.mxu0
      %1242 = vmatprep.mubr.bf16.mxu0 %v736
      %1243 = vmatmul.mubr.bf16.gmra.mxu0 %v735
      %v1244 = vpop.f32.mrf.mxu0
      %v1245 = vadd.f32 %v347, %v1244
      %v1246 = vpop.f32.mrf.mxu0
      %v1247 = vpop.f32.mrf.mxu0
      %v1248 = vadd.f32 %v347, %v1247
      %v1249 = vpop.f32.mrf.mxu0
      %1250 = vmatprep.mubr.bf16.mxu0 %v739
      %1251 = vmatmul.mubr.bf16.gmra.mxu0 %v738
      %v1252 = vpop.f32.mrf.mxu0
      %v1253 = vadd.f32 %v347, %v1252
      %v1254 = vpop.f32.mrf.mxu0
      %v1255 = vpop.f32.mrf.mxu0
      %v1256 = vadd.f32 %v347, %v1255
      %v1257 = vpop.f32.mrf.mxu0
      %1258 = vmatprep.mubr.bf16.mxu0 %v742
      %1259 = vmatmul.mubr.bf16.gmra.mxu0 %v741
      %v1260 = vpop.f32.mrf.mxu0
      %v1261 = vadd.f32 %v347, %v1260
      %v1262 = vpop.f32.mrf.mxu0
      %v1263 = vpop.f32.mrf.mxu0
      %v1264 = vadd.f32 %v347, %v1263
      %v1265 = vpop.f32.mrf.mxu0
      %1266 = vmatprep.mubr.bf16.mxu0 %v745
      %1267 = vmatmul.mubr.bf16.gmra.mxu0 %v744
      %v1268 = vpop.f32.mrf.mxu0
      %v1269 = vadd.f32 %v347, %v1268
      %v1270 = vpop.f32.mrf.mxu0
      %v1271 = vpop.f32.mrf.mxu0
      %v1272 = vadd.f32 %v347, %v1271
      %v1273 = vpop.f32.mrf.mxu0
      %1274 = vmatprep.mubr.bf16.mxu0 %v748
      %1275 = vmatmul.mubr.bf16.gmra.mxu0 %v747
      %v1276 = vpop.f32.mrf.mxu0
      %v1277 = vadd.f32 %v347, %v1276
      %v1278 = vpop.f32.mrf.mxu0
      %v1279 = vpop.f32.mrf.mxu0
      %v1280 = vadd.f32 %v347, %v1279
      %v1281 = vpop.f32.mrf.mxu0
      %1282 = vmatprep.mubr.bf16.mxu0 %v751
      %1283 = vmatmul.mubr.bf16.gmra.mxu0 %v750
      %v1284 = vpop.f32.mrf.mxu0
      %v1285 = vadd.f32 %v347, %v1284
      %v1286 = vpop.f32.mrf.mxu0
      %v1287 = vpop.f32.mrf.mxu0
      %v1288 = vadd.f32 %v347, %v1287
      %v1289 = vpop.f32.mrf.mxu0
      %1290 = vmatprep.mubr.bf16.mxu0 %v754
      %1291 = vmatmul.mubr.bf16.gmra.mxu0 %v753
      %v1292 = vpop.f32.mrf.mxu0
      %v1293 = vadd.f32 %v347, %v1292
      %v1294 = vpop.f32.mrf.mxu0
      %v1295 = vpop.f32.mrf.mxu0
      %v1296 = vadd.f32 %v347, %v1295
      %v1297 = vpop.f32.mrf.mxu0
      %1298 = vmatprep.mubr.bf16.mxu0 %v757
      %1299 = vmatmul.mubr.bf16.gmra.mxu0 %v756
      %v1300 = vpop.f32.mrf.mxu0
      %v1301 = vadd.f32 %v347, %v1300
      %v1302 = vpop.f32.mrf.mxu0
      %v1303 = vpop.f32.mrf.mxu0
      %v1304 = vadd.f32 %v347, %v1303
      %v1305 = vpop.f32.mrf.mxu0
      %1306 = vmatprep.mubr.bf16.mxu0 %v760
      %1307 = vmatmul.mubr.bf16.gmra.mxu0 %v759
      %v1308 = vpop.f32.mrf.mxu0
      %v1309 = vadd.f32 %v347, %v1308
      %v1310 = vpop.f32.mrf.mxu0
      %v1311 = vpop.f32.mrf.mxu0
      %v1312 = vadd.f32 %v347, %v1311
      %v1313 = vpop.f32.mrf.mxu0
      %1314 = vmatprep.mubr.bf16.mxu0 %v763
      %1315 = vmatmul.mubr.bf16.gmra.mxu0 %v762
      %v1316 = vpop.f32.mrf.mxu0
      %v1317 = vadd.f32 %v347, %v1316
      %v1318 = vpop.f32.mrf.mxu0
      %v1319 = vpop.f32.mrf.mxu0
      %v1320 = vadd.f32 %v347, %v1319
      %v1321 = vpop.f32.mrf.mxu0
      %1322 = vdwg.mxu0
      %1323 = vmatprep.subr.bf16.mxu0 0
      %1324 = vmatpush1.bf16.msra.mxu0 0
      %1325 = vmatprep.subr.bf16.mxu0 0
      %1326 = vmatpush1.bf16.msra.mxu0 0
      %1327 = vmatprep.subr.bf16.mxu0 0
      %1328 = vmatpush1.bf16.msra.mxu0 0
      %1329 = vmatprep.subr.bf16.mxu0 0
      %1330 = vmatpush1.bf16.msra.mxu0 0
      %1331 = vmatprep.subr.bf16.mxu0 0
      %1332 = vmatpush1.bf16.msra.mxu0 0
      %1333 = vmatprep.subr.bf16.mxu0 0
      %1334 = vmatpush1.bf16.msra.mxu0 0
      %1335 = vmatprep.subr.bf16.mxu0 0
      %1336 = vmatpush1.bf16.msra.mxu0 %v918
      %1337 = vmatprep.subr.bf16.mxu0 0
      %1338 = vmatpush1.bf16.msra.mxu0 %v917
      %1339 = vmatprep.subr.bf16.mxu0 0
      %1340 = vmatpush2.bf16.msra.mxu0 0
      %1341 = vmatprep.subr.bf16.mxu0 0
      %1342 = vmatpush2.bf16.msra.mxu0 0
      %1343 = vmatprep.subr.bf16.mxu0 0
      %1344 = vmatpush2.bf16.msra.mxu0 0
      %1345 = vmatprep.subr.bf16.mxu0 0
      %1346 = vmatpush2.bf16.msra.mxu0 0
      %1347 = vmatprep.subr.bf16.mxu0 0
      %1348 = vmatpush2.bf16.msra.mxu0 0
      %1349 = vmatprep.subr.bf16.mxu0 0
      %1350 = vmatpush2.bf16.msra.mxu0 0
      %1351 = vmatprep.subr.bf16.mxu0 0
      %1352 = vmatpush2.bf16.msra.mxu0 0
      %1353 = vmatprep.subr.bf16.mxu0 0
      %1354 = vmatpush2.bf16.msra.mxu0 0
      %1355 = vmatprep.mubr.bf16.mxu0 0
      %1356 = vmatmul.mubr.bf16.gmra.mxu0 %v939
      %v1357 = vpop.f32.mrf.mxu0
      %v1358 = vadd.f32 %v1069, %v1357
      %v1359 = vpop.f32.mrf.mxu0
      %v1360 = vpop.f32.mrf.mxu0
      %v1361 = vadd.f32 %v1072, %v1360
      %v1362 = vpop.f32.mrf.mxu0
      %1363 = vmatprep.mubr.bf16.mxu0 0
      %1364 = vmatmul.mubr.bf16.gmra.mxu0 %v942
      %v1365 = vpop.f32.mrf.mxu0
      %v1366 = vadd.f32 %v1077, %v1365
      %v1367 = vpop.f32.mrf.mxu0
      %v1368 = vpop.f32.mrf.mxu0
      %v1369 = vadd.f32 %v1080, %v1368
      %v1370 = vpop.f32.mrf.mxu0
      %1371 = vmatprep.mubr.bf16.mxu0 0
      %1372 = vmatmul.mubr.bf16.gmra.mxu0 %v945
      %v1373 = vpop.f32.mrf.mxu0
      %v1374 = vadd.f32 %v1085, %v1373
      %v1375 = vpop.f32.mrf.mxu0
      %v1376 = vpop.f32.mrf.mxu0
      %v1377 = vadd.f32 %v1088, %v1376
      %v1378 = vpop.f32.mrf.mxu0
      %1379 = vmatprep.mubr.bf16.mxu0 0
      %1380 = vmatmul.mubr.bf16.gmra.mxu0 %v948
      %v1381 = vpop.f32.mrf.mxu0
      %v1382 = vadd.f32 %v1093, %v1381
      %v1383 = vpop.f32.mrf.mxu0
      %v1384 = vpop.f32.mrf.mxu0
      %v1385 = vadd.f32 %v1096, %v1384
      %v1386 = vpop.f32.mrf.mxu0
      %1387 = vmatprep.mubr.bf16.mxu0 0
      %1388 = vmatmul.mubr.bf16.gmra.mxu0 %v951
      %v1389 = vpop.f32.mrf.mxu0
      %v1390 = vadd.f32 %v1101, %v1389
      %v1391 = vpop.f32.mrf.mxu0
      %v1392 = vpop.f32.mrf.mxu0
      %v1393 = vadd.f32 %v1104, %v1392
      %v1394 = vpop.f32.mrf.mxu0
      %1395 = vmatprep.mubr.bf16.mxu0 0
      %1396 = vmatmul.mubr.bf16.gmra.mxu0 %v954
      %v1397 = vpop.f32.mrf.mxu0
      %v1398 = vadd.f32 %v1109, %v1397
      %v1399 = vpop.f32.mrf.mxu0
      %v1400 = vpop.f32.mrf.mxu0
      %v1401 = vadd.f32 %v1112, %v1400
      %v1402 = vpop.f32.mrf.mxu0
      %1403 = vmatprep.mubr.bf16.mxu0 0
      %1404 = vmatmul.mubr.bf16.gmra.mxu0 %v957
      %v1405 = vpop.f32.mrf.mxu0
      %v1406 = vadd.f32 %v1117, %v1405
      %v1407 = vpop.f32.mrf.mxu0
      %v1408 = vpop.f32.mrf.mxu0
      %v1409 = vadd.f32 %v1120, %v1408
      %v1410 = vpop.f32.mrf.mxu0
      %1411 = vmatprep.mubr.bf16.mxu0 0
      %1412 = vmatmul.mubr.bf16.gmra.mxu0 %v960
      %v1413 = vpop.f32.mrf.mxu0
      %v1414 = vadd.f32 %v1125, %v1413
      %v1415 = vpop.f32.mrf.mxu0
      %v1416 = vpop.f32.mrf.mxu0
      %v1417 = vadd.f32 %v1128, %v1416
      %v1418 = vpop.f32.mrf.mxu0
      %1419 = vmatprep.mubr.bf16.mxu0 0
      %1420 = vmatmul.mubr.bf16.gmra.mxu0 %v963
      %v1421 = vpop.f32.mrf.mxu0
      %v1422 = vadd.f32 %v1133, %v1421
      %v1423 = vpop.f32.mrf.mxu0
      %v1424 = vpop.f32.mrf.mxu0
      %v1425 = vadd.f32 %v1136, %v1424
      %v1426 = vpop.f32.mrf.mxu0
      %1427 = vmatprep.mubr.bf16.mxu0 0
      %1428 = vmatmul.mubr.bf16.gmra.mxu0 %v966
      %v1429 = vpop.f32.mrf.mxu0
      %v1430 = vadd.f32 %v1141, %v1429
      %v1431 = vpop.f32.mrf.mxu0
      %v1432 = vpop.f32.mrf.mxu0
      %v1433 = vadd.f32 %v1144, %v1432
      %v1434 = vpop.f32.mrf.mxu0
      %1435 = vmatprep.mubr.bf16.mxu0 0
      %1436 = vmatmul.mubr.bf16.gmra.mxu0 %v969
      %v1437 = vpop.f32.mrf.mxu0
      %v1438 = vadd.f32 %v1149, %v1437
      %v1439 = vpop.f32.mrf.mxu0
      %v1440 = vpop.f32.mrf.mxu0
      %v1441 = vadd.f32 %v1152, %v1440
      %v1442 = vpop.f32.mrf.mxu0
      %1443 = vmatprep.mubr.bf16.mxu0 0
      %1444 = vmatmul.mubr.bf16.gmra.mxu0 %v972
      %v1445 = vpop.f32.mrf.mxu0
      %v1446 = vadd.f32 %v1157, %v1445
      %v1447 = vpop.f32.mrf.mxu0
      %v1448 = vpop.f32.mrf.mxu0
      %v1449 = vadd.f32 %v1160, %v1448
      %v1450 = vpop.f32.mrf.mxu0
      %1451 = vmatprep.mubr.bf16.mxu0 0
      %1452 = vmatmul.mubr.bf16.gmra.mxu0 %v975
      %v1453 = vpop.f32.mrf.mxu0
      %v1454 = vadd.f32 %v1165, %v1453
      %v1455 = vpop.f32.mrf.mxu0
      %v1456 = vpop.f32.mrf.mxu0
      %v1457 = vadd.f32 %v1168, %v1456
      %v1458 = vpop.f32.mrf.mxu0
      %1459 = vmatprep.mubr.bf16.mxu0 0
      %1460 = vmatmul.mubr.bf16.gmra.mxu0 %v978
      %v1461 = vpop.f32.mrf.mxu0
      %v1462 = vadd.f32 %v1173, %v1461
      %v1463 = vpop.f32.mrf.mxu0
      %v1464 = vpop.f32.mrf.mxu0
      %v1465 = vadd.f32 %v1176, %v1464
      %v1466 = vpop.f32.mrf.mxu0
      %1467 = vmatprep.mubr.bf16.mxu0 0
      %1468 = vmatmul.mubr.bf16.gmra.mxu0 %v981
      %v1469 = vpop.f32.mrf.mxu0
      %v1470 = vadd.f32 %v1181, %v1469
      %v1471 = vpop.f32.mrf.mxu0
      %v1472 = vpop.f32.mrf.mxu0
      %v1473 = vadd.f32 %v1184, %v1472
      %v1474 = vpop.f32.mrf.mxu0
      %1475 = vmatprep.mubr.bf16.mxu0 0
      %1476 = vmatmul.mubr.bf16.gmra.mxu0 %v984
      %v1477 = vpop.f32.mrf.mxu0
      %v1478 = vadd.f32 %v1189, %v1477
      %v1479 = vpop.f32.mrf.mxu0
      %v1480 = vpop.f32.mrf.mxu0
      %v1481 = vadd.f32 %v1192, %v1480
      %v1482 = vpop.f32.mrf.mxu0
      %1483 = vmatprep.mubr.bf16.mxu0 0
      %1484 = vmatmul.mubr.bf16.gmra.mxu0 %v987
      %v1485 = vpop.f32.mrf.mxu0
      %v1486 = vadd.f32 %v1197, %v1485
      %v1487 = vpop.f32.mrf.mxu0
      %v1488 = vpop.f32.mrf.mxu0
      %v1489 = vadd.f32 %v1200, %v1488
      %v1490 = vpop.f32.mrf.mxu0
      %1491 = vmatprep.mubr.bf16.mxu0 0
      %1492 = vmatmul.mubr.bf16.gmra.mxu0 %v990
      %v1493 = vpop.f32.mrf.mxu0
      %v1494 = vadd.f32 %v1205, %v1493
      %v1495 = vpop.f32.mrf.mxu0
      %v1496 = vpop.f32.mrf.mxu0
      %v1497 = vadd.f32 %v1208, %v1496
      %v1498 = vpop.f32.mrf.mxu0
      %1499 = vmatprep.mubr.bf16.mxu0 0
      %1500 = vmatmul.mubr.bf16.gmra.mxu0 %v993
      %v1501 = vpop.f32.mrf.mxu0
      %v1502 = vadd.f32 %v1213, %v1501
      %v1503 = vpop.f32.mrf.mxu0
      %v1504 = vpop.f32.mrf.mxu0
      %v1505 = vadd.f32 %v1216, %v1504
      %v1506 = vpop.f32.mrf.mxu0
      %1507 = vmatprep.mubr.bf16.mxu0 0
      %1508 = vmatmul.mubr.bf16.gmra.mxu0 %v996
      %v1509 = vpop.f32.mrf.mxu0
      %v1510 = vadd.f32 %v1221, %v1509
      %v1511 = vpop.f32.mrf.mxu0
      %v1512 = vpop.f32.mrf.mxu0
      %v1513 = vadd.f32 %v1224, %v1512
      %v1514 = vpop.f32.mrf.mxu0
      %1515 = vmatprep.mubr.bf16.mxu0 0
      %1516 = vmatmul.mubr.bf16.gmra.mxu0 %v999
      %v1517 = vpop.f32.mrf.mxu0
      %v1518 = vadd.f32 %v1229, %v1517
      %v1519 = vpop.f32.mrf.mxu0
      %v1520 = vpop.f32.mrf.mxu0
      %v1521 = vadd.f32 %v1232, %v1520
      %v1522 = vpop.f32.mrf.mxu0
      %1523 = vmatprep.mubr.bf16.mxu0 0
      %1524 = vmatmul.mubr.bf16.gmra.mxu0 %v1002
      %v1525 = vpop.f32.mrf.mxu0
      %v1526 = vadd.f32 %v1237, %v1525
      %v1527 = vpop.f32.mrf.mxu0
      %v1528 = vpop.f32.mrf.mxu0
      %v1529 = vadd.f32 %v1240, %v1528
      %v1530 = vpop.f32.mrf.mxu0
      %1531 = vmatprep.mubr.bf16.mxu0 0
      %1532 = vmatmul.mubr.bf16.gmra.mxu0 %v1005
      %v1533 = vpop.f32.mrf.mxu0
      %v1534 = vadd.f32 %v1245, %v1533
      %v1535 = vpop.f32.mrf.mxu0
      %v1536 = vpop.f32.mrf.mxu0
      %v1537 = vadd.f32 %v1248, %v1536
      %v1538 = vpop.f32.mrf.mxu0
      %1539 = vmatprep.mubr.bf16.mxu0 0
      %1540 = vmatmul.mubr.bf16.gmra.mxu0 %v1008
      %v1541 = vpop.f32.mrf.mxu0
      %v1542 = vadd.f32 %v1253, %v1541
      %v1543 = vpop.f32.mrf.mxu0
      %v1544 = vpop.f32.mrf.mxu0
      %v1545 = vadd.f32 %v1256, %v1544
      %v1546 = vpop.f32.mrf.mxu0
      %1547 = vmatprep.mubr.bf16.mxu0 0
      %1548 = vmatmul.mubr.bf16.gmra.mxu0 %v1011
      %v1549 = vpop.f32.mrf.mxu0
      %v1550 = vadd.f32 %v1261, %v1549
      %v1551 = vpop.f32.mrf.mxu0
      %v1552 = vpop.f32.mrf.mxu0
      %v1553 = vadd.f32 %v1264, %v1552
      %v1554 = vpop.f32.mrf.mxu0
      %1555 = vmatprep.mubr.bf16.mxu0 0
      %1556 = vmatmul.mubr.bf16.gmra.mxu0 %v1014
      %v1557 = vpop.f32.mrf.mxu0
      %v1558 = vadd.f32 %v1269, %v1557
      %v1559 = vpop.f32.mrf.mxu0
      %v1560 = vpop.f32.mrf.mxu0
      %v1561 = vadd.f32 %v1272, %v1560
      %v1562 = vpop.f32.mrf.mxu0
      %1563 = vmatprep.mubr.bf16.mxu0 0
      %1564 = vmatmul.mubr.bf16.gmra.mxu0 %v1017
      %v1565 = vpop.f32.mrf.mxu0
      %v1566 = vadd.f32 %v1277, %v1565
      %v1567 = vpop.f32.mrf.mxu0
      %v1568 = vpop.f32.mrf.mxu0
      %v1569 = vadd.f32 %v1280, %v1568
      %v1570 = vpop.f32.mrf.mxu0
      %1571 = vmatprep.mubr.bf16.mxu0 0
      %1572 = vmatmul.mubr.bf16.gmra.mxu0 %v1020
      %v1573 = vpop.f32.mrf.mxu0
      %v1574 = vadd.f32 %v1285, %v1573
      %v1575 = vpop.f32.mrf.mxu0
      %v1576 = vpop.f32.mrf.mxu0
      %v1577 = vadd.f32 %v1288, %v1576
      %v1578 = vpop.f32.mrf.mxu0
      %1579 = vmatprep.mubr.bf16.mxu0 0
      %1580 = vmatmul.mubr.bf16.gmra.mxu0 %v1023
      %v1581 = vpop.f32.mrf.mxu0
      %v1582 = vadd.f32 %v1293, %v1581
      %v1583 = vpop.f32.mrf.mxu0
      %v1584 = vpop.f32.mrf.mxu0
      %v1585 = vadd.f32 %v1296, %v1584
      %v1586 = vpop.f32.mrf.mxu0
      %1587 = vmatprep.mubr.bf16.mxu0 0
      %1588 = vmatmul.mubr.bf16.gmra.mxu0 %v1026
      %v1589 = vpop.f32.mrf.mxu0
      %v1590 = vadd.f32 %v1301, %v1589
      %v1591 = vpop.f32.mrf.mxu0
      %v1592 = vpop.f32.mrf.mxu0
      %v1593 = vadd.f32 %v1304, %v1592
      %v1594 = vpop.f32.mrf.mxu0
      %1595 = vmatprep.mubr.bf16.mxu0 0
      %1596 = vmatmul.mubr.bf16.gmra.mxu0 %v1029
      %v1597 = vpop.f32.mrf.mxu0
      %v1598 = vadd.f32 %v1309, %v1597
      %v1599 = vpop.f32.mrf.mxu0
      %v1600 = vpop.f32.mrf.mxu0
      %v1601 = vadd.f32 %v1312, %v1600
      %v1602 = vpop.f32.mrf.mxu0
      %1603 = vmatprep.mubr.bf16.mxu0 0
      %1604 = vmatmul.mubr.bf16.gmra.mxu0 %v1032
      %v1605 = vpop.f32.mrf.mxu0
      %v1606 = vadd.f32 %v1317, %v1605
      %v1607 = vpop.f32.mrf.mxu0
      %v1608 = vpop.f32.mrf.mxu0
      %v1609 = vadd.f32 %v1320, %v1608
      %v1610 = vpop.f32.mrf.mxu0
      %1611 = vdwg.mxu0
      %v1612 = vmax.f32 %v1358, 0.0
      %v1613 = vmax.f32 %v1361, 0.0
      %v1614 = vmax.f32 %v1366, 0.0
      %v1615 = vmax.f32 %v1369, 0.0
      %v1616 = vmax.f32 %v1374, 0.0
      %v1617 = vmax.f32 %v1377, 0.0
      %v1618 = vmax.f32 %v1382, 0.0
      %v1619 = vmax.f32 %v1385, 0.0
      %v1620 = vmax.f32 %v1390, 0.0
      %v1621 = vmax.f32 %v1393, 0.0
      %v1622 = vmax.f32 %v1398, 0.0
      %v1623 = vmax.f32 %v1401, 0.0
      %v1624 = vmax.f32 %v1406, 0.0
      %v1625 = vmax.f32 %v1409, 0.0
      %v1626 = vmax.f32 %v1414, 0.0
      %v1627 = vmax.f32 %v1417, 0.0
      %v1628 = vmax.f32 %v1422, 0.0
      %v1629 = vmax.f32 %v1425, 0.0
      %v1630 = vmax.f32 %v1430, 0.0
      %v1631 = vmax.f32 %v1433, 0.0
      %v1632 = vmax.f32 %v1438, 0.0
      %v1633 = vmax.f32 %v1441, 0.0
      %v1634 = vmax.f32 %v1446, 0.0
      %v1635 = vmax.f32 %v1449, 0.0
      %v1636 = vmax.f32 %v1454, 0.0
      %v1637 = vmax.f32 %v1457, 0.0
      %v1638 = vmax.f32 %v1462, 0.0
      %v1639 = vmax.f32 %v1465, 0.0
      %v1640 = vmax.f32 %v1470, 0.0
      %v1641 = vmax.f32 %v1473, 0.0
      %v1642 = vmax.f32 %v1478, 0.0
      %v1643 = vmax.f32 %v1481, 0.0
      %v1644 = vmax.f32 %v1486, 0.0
      %v1645 = vmax.f32 %v1489, 0.0
      %v1646 = vmax.f32 %v1494, 0.0
      %v1647 = vmax.f32 %v1497, 0.0
      %v1648 = vmax.f32 %v1502, 0.0
      %v1649 = vmax.f32 %v1505, 0.0
      %v1650 = vmax.f32 %v1510, 0.0
      %v1651 = vmax.f32 %v1513, 0.0
      %v1652 = vmax.f32 %v1518, 0.0
      %v1653 = vmax.f32 %v1521, 0.0
      %v1654 = vmax.f32 %v1526, 0.0
      %v1655 = vmax.f32 %v1529, 0.0
      %v1656 = vmax.f32 %v1534, 0.0
      %v1657 = vmax.f32 %v1537, 0.0
      %v1658 = vmax.f32 %v1542, 0.0
      %v1659 = vmax.f32 %v1545, 0.0
      %v1660 = vmax.f32 %v1550, 0.0
      %v1661 = vmax.f32 %v1553, 0.0
      %v1662 = vmax.f32 %v1558, 0.0
      %v1663 = vmax.f32 %v1561, 0.0
      %v1664 = vmax.f32 %v1566, 0.0
      %v1665 = vmax.f32 %v1569, 0.0
      %v1666 = vmax.f32 %v1574, 0.0
      %v1667 = vmax.f32 %v1577, 0.0
      %v1668 = vmax.f32 %v1582, 0.0
      %v1669 = vmax.f32 %v1585, 0.0
      %v1670 = vmax.f32 %v1590, 0.0
      %v1671 = vmax.f32 %v1593, 0.0
      %v1672 = vmax.f32 %v1598, 0.0
      %v1673 = vmax.f32 %v1601, 0.0
      %v1674 = vmax.f32 %v1606, 0.0
      %v1675 = vmax.f32 %v1609, 0.0
      %v1676 = vpack.c.bf16 %v1613, %v1612
      %v1677 = vpack.c.bf16 %v1615, %v1614
      %v1678 = vpack.c.bf16 %v1617, %v1616
      %v1679 = vpack.c.bf16 %v1619, %v1618
      %v1680 = vpack.c.bf16 %v1621, %v1620
      %v1681 = vpack.c.bf16 %v1623, %v1622
      %v1682 = vpack.c.bf16 %v1625, %v1624
      %v1683 = vpack.c.bf16 %v1627, %v1626
      %v1684 = vpack.c.bf16 %v1629, %v1628
      %v1685 = vpack.c.bf16 %v1631, %v1630
      %v1686 = vpack.c.bf16 %v1633, %v1632
      %v1687 = vpack.c.bf16 %v1635, %v1634
      %v1688 = vpack.c.bf16 %v1637, %v1636
      %v1689 = vpack.c.bf16 %v1639, %v1638
      %v1690 = vpack.c.bf16 %v1641, %v1640
      %v1691 = vpack.c.bf16 %v1643, %v1642
      %v1692 = vpack.c.bf16 %v1645, %v1644
      %v1693 = vpack.c.bf16 %v1647, %v1646
      %v1694 = vpack.c.bf16 %v1649, %v1648
      %v1695 = vpack.c.bf16 %v1651, %v1650
      %v1696 = vpack.c.bf16 %v1653, %v1652
      %v1697 = vpack.c.bf16 %v1655, %v1654
      %v1698 = vpack.c.bf16 %v1657, %v1656
      %v1699 = vpack.c.bf16 %v1659, %v1658
      %v1700 = vpack.c.bf16 %v1661, %v1660
      %v1701 = vpack.c.bf16 %v1663, %v1662
      %v1702 = vpack.c.bf16 %v1665, %v1664
      %v1703 = vpack.c.bf16 %v1667, %v1666
      %v1704 = vpack.c.bf16 %v1669, %v1668
      %v1705 = vpack.c.bf16 %v1671, %v1670
      %v1706 = vpack.c.bf16 %v1673, %v1672
      %v1707 = vpack.c.bf16 %v1675, %v1674
      %v1740 = vunpack.c.l.b16 %v1676
      %v1741 = vunpack.c.h.b16 %v1676
      %v1742 = vunpack.c.l.b16 %v1677
      %v1743 = vunpack.c.h.b16 %v1677
      %v1744 = vunpack.c.l.b16 %v1678
      %v1745 = vunpack.c.h.b16 %v1678
      %v1746 = vunpack.c.l.b16 %v1679
      %v1747 = vunpack.c.h.b16 %v1679
      %v1748 = vunpack.c.l.b16 %v1680
      %v1749 = vunpack.c.h.b16 %v1680
      %v1750 = vunpack.c.l.b16 %v1681
      %v1751 = vunpack.c.h.b16 %v1681
      %v1752 = vunpack.c.l.b16 %v1682
      %v1753 = vunpack.c.h.b16 %v1682
      %v1754 = vunpack.c.l.b16 %v1683
      %v1755 = vunpack.c.h.b16 %v1683
      %v1756 = vunpack.c.l.b16 %v1684
      %v1757 = vunpack.c.h.b16 %v1684
      %v1758 = vunpack.c.l.b16 %v1685
      %v1759 = vunpack.c.h.b16 %v1685
      %v1760 = vunpack.c.l.b16 %v1686
      %v1761 = vunpack.c.h.b16 %v1686
      %v1762 = vunpack.c.l.b16 %v1687
      %v1763 = vunpack.c.h.b16 %v1687
      %v1764 = vunpack.c.l.b16 %v1688
      %v1765 = vunpack.c.h.b16 %v1688
      %v1766 = vunpack.c.l.b16 %v1689
      %v1767 = vunpack.c.h.b16 %v1689
      %v1768 = vunpack.c.l.b16 %v1690
      %v1769 = vunpack.c.h.b16 %v1690
      %v1770 = vunpack.c.l.b16 %v1691
      %v1771 = vunpack.c.h.b16 %v1691
      %v1772 = vunpack.c.l.b16 %v1692
      %v1773 = vunpack.c.h.b16 %v1692
      %v1774 = vunpack.c.l.b16 %v1693
      %v1775 = vunpack.c.h.b16 %v1693
      %v1776 = vunpack.c.l.b16 %v1694
      %v1777 = vunpack.c.h.b16 %v1694
      %v1778 = vunpack.c.l.b16 %v1695
      %v1779 = vunpack.c.h.b16 %v1695
      %v1780 = vunpack.c.l.b16 %v1696
      %v1781 = vunpack.c.h.b16 %v1696
      %v1782 = vunpack.c.l.b16 %v1697
      %v1783 = vunpack.c.h.b16 %v1697
      %v1784 = vunpack.c.l.b16 %v1698
      %v1785 = vunpack.c.h.b16 %v1698
      %v1786 = vunpack.c.l.b16 %v1699
      %v1787 = vunpack.c.h.b16 %v1699
      %v1788 = vunpack.c.l.b16 %v1700
      %v1789 = vunpack.c.h.b16 %v1700
      %v1790 = vunpack.c.l.b16 %v1701
      %v1791 = vunpack.c.h.b16 %v1701
      %v1792 = vunpack.c.l.b16 %v1702
      %v1793 = vunpack.c.h.b16 %v1702
      %v1794 = vunpack.c.l.b16 %v1703
      %v1795 = vunpack.c.h.b16 %v1703
      %v1796 = vunpack.c.l.b16 %v1704
      %v1797 = vunpack.c.h.b16 %v1704
      %v1798 = vunpack.c.l.b16 %v1705
      %v1799 = vunpack.c.h.b16 %v1705
      %v1800 = vunpack.c.l.b16 %v1706
      %v1801 = vunpack.c.h.b16 %v1706
      %v1802 = vunpack.c.l.b16 %v1707
      %v1803 = vunpack.c.h.b16 %v1707
      %v1804 = vpack.c.b16 %v1740, %v1740
      %v1805 = vpack.c.b16 %v1741, %v1741
      %v1806 = vpack.c.b16 %v1742, %v1742
      %v1807 = vpack.c.b16 %v1743, %v1743
      %v1808 = vpack.c.b16 %v1744, %v1744
      %v1809 = vpack.c.b16 %v1745, %v1745
      %v1810 = vpack.c.b16 %v1746, %v1746
      %v1811 = vpack.c.b16 %v1747, %v1747
      %v1812 = vpack.c.b16 %v1748, %v1748
      %v1813 = vpack.c.b16 %v1749, %v1749
      %v1814 = vpack.c.b16 %v1750, %v1750
      %v1815 = vpack.c.b16 %v1751, %v1751
      %v1816 = vpack.c.b16 %v1752, %v1752
      %v1817 = vpack.c.b16 %v1753, %v1753
      %v1818 = vpack.c.b16 %v1754, %v1754
      %v1819 = vpack.c.b16 %v1755, %v1755
      %v1820 = vpack.c.b16 %v1756, %v1756
      %v1821 = vpack.c.b16 %v1757, %v1757
      %v1822 = vpack.c.b16 %v1758, %v1758
      %v1823 = vpack.c.b16 %v1759, %v1759
      %v1824 = vpack.c.b16 %v1760, %v1760
      %v1825 = vpack.c.b16 %v1761, %v1761
      %v1826 = vpack.c.b16 %v1762, %v1762
      %v1827 = vpack.c.b16 %v1763, %v1763
      %v1828 = vpack.c.b16 %v1764, %v1764
      %v1829 = vpack.c.b16 %v1765, %v1765
      %v1830 = vpack.c.b16 %v1766, %v1766
      %v1831 = vpack.c.b16 %v1767, %v1767
      %v1832 = vpack.c.b16 %v1768, %v1768
      %v1833 = vpack.c.b16 %v1769, %v1769
      %v1834 = vpack.c.b16 %v1770, %v1770
      %v1835 = vpack.c.b16 %v1771, %v1771
      %v1836 = vpack.c.b16 %v1772, %v1772
      %v1837 = vpack.c.b16 %v1773, %v1773
      %v1838 = vpack.c.b16 %v1774, %v1774
      %v1839 = vpack.c.b16 %v1775, %v1775
      %v1840 = vpack.c.b16 %v1776, %v1776
      %v1841 = vpack.c.b16 %v1777, %v1777
      %v1842 = vpack.c.b16 %v1778, %v1778
      %v1843 = vpack.c.b16 %v1779, %v1779
      %v1844 = vpack.c.b16 %v1780, %v1780
      %v1845 = vpack.c.b16 %v1781, %v1781
      %v1846 = vpack.c.b16 %v1782, %v1782
      %v1847 = vpack.c.b16 %v1783, %v1783
      %v1848 = vpack.c.b16 %v1784, %v1784
      %v1849 = vpack.c.b16 %v1785, %v1785
      %v1850 = vpack.c.b16 %v1786, %v1786
      %v1851 = vpack.c.b16 %v1787, %v1787
      %v1852 = vpack.c.b16 %v1788, %v1788
      %v1853 = vpack.c.b16 %v1789, %v1789
      %v1854 = vpack.c.b16 %v1790, %v1790
      %v1855 = vpack.c.b16 %v1791, %v1791
      %v1856 = vpack.c.b16 %v1792, %v1792
      %v1857 = vpack.c.b16 %v1793, %v1793
      %v1858 = vpack.c.b16 %v1794, %v1794
      %v1859 = vpack.c.b16 %v1795, %v1795
      %v1860 = vpack.c.b16 %v1796, %v1796
      %v1861 = vpack.c.b16 %v1797, %v1797
      %v1862 = vpack.c.b16 %v1798, %v1798
      %v1863 = vpack.c.b16 %v1799, %v1799
      %v1864 = vpack.c.b16 %v1800, %v1800
      %v1865 = vpack.c.b16 %v1801, %v1801
      %v1866 = vpack.c.b16 %v1802, %v1802
      %v1867 = vpack.c.b16 %v1803, %v1803
      %vm1932 = vcmask 519168
      %1933 = vst.msk [vmem:[%s175] sm:$0xf] %vm1932, %v1804
      %1934 = vst.msk [vmem:[%s175 + $0x4] sm:$0xf] %vm1932, %v1805
      %1935 = vst.msk [vmem:[%s175 + $0x8] sm:$0xf] %vm1932, %v1806
      %1936 = vst.msk [vmem:[%s175 + $0xc] sm:$0xf] %vm1932, %v1807
      %1937 = vst.msk [vmem:[%s175 + $0x10] sm:$0xf] %vm1932, %v1808
      %1938 = vst.msk [vmem:[%s175 + $0x14] sm:$0xf] %vm1932, %v1809
      %1939 = vst.msk [vmem:[%s175 + $0x18] sm:$0xf] %vm1932, %v1810
      %1940 = vst.msk [vmem:[%s175 + $0x1c] sm:$0xf] %vm1932, %v1811
      %1941 = vst.msk [vmem:[%s175 + $0x20] sm:$0xf] %vm1932, %v1812
      %1942 = vst.msk [vmem:[%s175 + $0x24] sm:$0xf] %vm1932, %v1813
      %1943 = vst.msk [vmem:[%s175 + $0x28] sm:$0xf] %vm1932, %v1814
      %1944 = vst.msk [vmem:[%s175 + $0x2c] sm:$0xf] %vm1932, %v1815
      %1945 = vst.msk [vmem:[%s175 + $0x30] sm:$0xf] %vm1932, %v1816
      %1946 = vst.msk [vmem:[%s175 + $0x34] sm:$0xf] %vm1932, %v1817
      %1947 = vst.msk [vmem:[%s175 + $0x38] sm:$0xf] %vm1932, %v1818
      %1948 = vst.msk [vmem:[%s175 + $0x3c] sm:$0xf] %vm1932, %v1819
      %1949 = vst.msk [vmem:[%s175 + $0x40] sm:$0xf] %vm1932, %v1820
      %1950 = vst.msk [vmem:[%s175 + $0x44] sm:$0xf] %vm1932, %v1821
      %1951 = vst.msk [vmem:[%s175 + $0x48] sm:$0xf] %vm1932, %v1822
      %1952 = vst.msk [vmem:[%s175 + $0x4c] sm:$0xf] %vm1932, %v1823
      %1953 = vst.msk [vmem:[%s175 + $0x50] sm:$0xf] %vm1932, %v1824
      %1954 = vst.msk [vmem:[%s175 + $0x54] sm:$0xf] %vm1932, %v1825
      %1955 = vst.msk [vmem:[%s175 + $0x58] sm:$0xf] %vm1932, %v1826
      %1956 = vst.msk [vmem:[%s175 + $0x5c] sm:$0xf] %vm1932, %v1827
      %1957 = vst.msk [vmem:[%s175 + $0x60] sm:$0xf] %vm1932, %v1828
      %1958 = vst.msk [vmem:[%s175 + $0x64] sm:$0xf] %vm1932, %v1829
      %1959 = vst.msk [vmem:[%s175 + $0x68] sm:$0xf] %vm1932, %v1830
      %1960 = vst.msk [vmem:[%s175 + $0x6c] sm:$0xf] %vm1932, %v1831
      %1961 = vst.msk [vmem:[%s175 + $0x70] sm:$0xf] %vm1932, %v1832
      %1962 = vst.msk [vmem:[%s175 + $0x74] sm:$0xf] %vm1932, %v1833
      %1963 = vst.msk [vmem:[%s175 + $0x78] sm:$0xf] %vm1932, %v1834
      %1964 = vst.msk [vmem:[%s175 + $0x7c] sm:$0xf] %vm1932, %v1835
      %1965 = vst.msk [vmem:[%s175 + $0x80] sm:$0xf] %vm1932, %v1836
      %1966 = vst.msk [vmem:[%s175 + $0x84] sm:$0xf] %vm1932, %v1837
      %1967 = vst.msk [vmem:[%s175 + $0x88] sm:$0xf] %vm1932, %v1838
      %1968 = vst.msk [vmem:[%s175 + $0x8c] sm:$0xf] %vm1932, %v1839
      %1969 = vst.msk [vmem:[%s175 + $0x90] sm:$0xf] %vm1932, %v1840
      %1970 = vst.msk [vmem:[%s175 + $0x94] sm:$0xf] %vm1932, %v1841
      %1971 = vst.msk [vmem:[%s175 + $0x98] sm:$0xf] %vm1932, %v1842
      %1972 = vst.msk [vmem:[%s175 + $0x9c] sm:$0xf] %vm1932, %v1843
      %1973 = vst.msk [vmem:[%s175 + $0xa0] sm:$0xf] %vm1932, %v1844
      %1974 = vst.msk [vmem:[%s175 + $0xa4] sm:$0xf] %vm1932, %v1845
      %1975 = vst.msk [vmem:[%s175 + $0xa8] sm:$0xf] %vm1932, %v1846
      %1976 = vst.msk [vmem:[%s175 + $0xac] sm:$0xf] %vm1932, %v1847
      %1977 = vst.msk [vmem:[%s175 + $0xb0] sm:$0xf] %vm1932, %v1848
      %1978 = vst.msk [vmem:[%s175 + $0xb4] sm:$0xf] %vm1932, %v1849
      %1979 = vst.msk [vmem:[%s175 + $0xb8] sm:$0xf] %vm1932, %v1850
      %1980 = vst.msk [vmem:[%s175 + $0xbc] sm:$0xf] %vm1932, %v1851
      %1981 = vst.msk [vmem:[%s175 + $0xc0] sm:$0xf] %vm1932, %v1852
      %1982 = vst.msk [vmem:[%s175 + $0xc4] sm:$0xf] %vm1932, %v1853
      %1983 = vst.msk [vmem:[%s175 + $0xc8] sm:$0xf] %vm1932, %v1854
      %1984 = vst.msk [vmem:[%s175 + $0xcc] sm:$0xf] %vm1932, %v1855
      %1985 = vst.msk [vmem:[%s175 + $0xd0] sm:$0xf] %vm1932, %v1856
      %1986 = vst.msk [vmem:[%s175 + $0xd4] sm:$0xf] %vm1932, %v1857
      %1987 = vst.msk [vmem:[%s175 + $0xd8] sm:$0xf] %vm1932, %v1858
      %1988 = vst.msk [vmem:[%s175 + $0xdc] sm:$0xf] %vm1932, %v1859
      %1989 = vst.msk [vmem:[%s175 + $0xe0] sm:$0xf] %vm1932, %v1860
      %1990 = vst.msk [vmem:[%s175 + $0xe4] sm:$0xf] %vm1932, %v1861
      %1991 = vst.msk [vmem:[%s175 + $0xe8] sm:$0xf] %vm1932, %v1862
      %1992 = vst.msk [vmem:[%s175 + $0xec] sm:$0xf] %vm1932, %v1863
      %1993 = vst.msk [vmem:[%s175 + $0xf0] sm:$0xf] %vm1932, %v1864
      %1994 = vst.msk [vmem:[%s175 + $0xf4] sm:$0xf] %vm1932, %v1865
      %1995 = vst.msk [vmem:[%s175 + $0xf8] sm:$0xf] %vm1932, %v1866
      %1996 = vst.msk [vmem:[%s175 + $0xfc] sm:$0xf] %vm1932, %v1867
      %s1997 = smul.u32 64, %s14
      %p1998 = scmp.lt.s32.totalorder %s1997, 127
      %s1999 = scalar_select %p1998, %s1997, 127
      %s2000 = smul.addr %s1999, 4
      %s2001 = scalar_lea.vmem %s3, %s2000
      // Predicated region
      $region33: #{simple_view_encoder.5} parent=31 // pred_check
        %p2002 = pneg %p100
      $region34: #{simple_view_encoder.5} parent=31 // pred_check_branch
        %2004 = sbr.rel (%p2002) target = $region36
      $region35: #{simple_view_encoder.5} parent=31 // pred_region
        %s2005 = smul.u32 64, %s14
      $region36: #{simple_view_encoder.5} parent=31 // pred_fallthru
        _
    $region32: #{simple_view_encoder.5} parent=5 // pred_fallthru
      _
    %p2006 = scmp.le.s32.totalorder 2, %s9
    // Predicated region
    $region37: #{simple_view_encoder.5} parent=5 // pred_check
      %p2007 = pneg %p2006
    $region38: #{simple_view_encoder.5} parent=5 // pred_check_branch
      %2009 = sbr.rel (%p2007) target = $region40
    $region39: #{simple_view_encoder.5} parent=5 // pred_region
      %s2010 = ssub.s32 %s9, 2
      // Predicated region
      $region41: #{simple_view_encoder.5} parent=39 // pred_check
        %p2011 = pneg %p106
      $region42: #{simple_view_encoder.5} parent=39 // pred_check_branch
        %2013 = sbr.rel (%p2011) target = $region44
      $region43: #{simple_view_encoder.5} parent=39 // pred_region
        %s2014 = smul.u32 64, %s15
        %p2015 = scmp.lt.s32.totalorder %s2014, 127
        %s2016 = scalar_select %p2015, %s2014, 127
        %s2017 = smul.addr %s2016, 4
        %s2018 = scalar_lea.vmem %s3, %s2017
      $region44: #{simple_view_encoder.5} parent=39 // pred_fallthru
        _
    $region40: #{simple_view_encoder.5} parent=5 // pred_fallthru
      _
  $region6: #{simple_view_encoder.5} parent=0 // loop_footer
    %s13 = sadd.s32 1, %s9
  $region7: #{simple_view_encoder.5} parent=0 // loop_footer_branch
    %8 = sbr.rel target = $region3
  $region8: #{simple_view_encoder.5} parent=0 // loop_exit
    _

// kernel: simple_view_encoder.6
$region0: #{simple_view_encoder.6}
  #allocation0 [shape = 'u32[]', space=smem, size = 0x4, offset = 0x4, fixed_abs, tag = 'smem constant byte address 0x4 - core index']
  #allocation1 [shape = 'u32[144,128]{1,0:T(1,128)}', space=vmem, size = 0x12000, scoped, tag = 'internal scratch']
  %s0 = inlined_call_operand.vmem [shape: bf16[256,576], index: 0, kind: input, shape index: {}]
  %s1 = inlined_call_operand.vmem [shape: bf16[576,128], index: 1, kind: input, shape index: {}]
  %s2 = inlined_call_operand.vmem [shape: f32[1,128], index: 2, kind: input, shape index: {}]
  %s3 = inlined_call_operand.vmem [shape: bf16[256,128], index: 3, kind: output, shape index: {}]
  %s4 = sld [smem:[#allocation0]]
  $region22: #{simple_view_encoder.6} parent=0
    _
  %s6 = ssub.s32 1, %s4
  %s7 = scalar_select 0, %s6, %s4
  // Predicated region
  $region2: #{simple_view_encoder.6} parent=0 // pred_check
    _
  $region3: #{simple_view_encoder.6} parent=0 // pred_check_branch
    %9 = sbr.rel (0) target = $region5
  $region4: #{simple_view_encoder.6} parent=0 // pred_region
    _
  $region5: #{simple_view_encoder.6} parent=0 // pred_fallthru
    _
  // Predicated region
  $region6: #{simple_view_encoder.6} parent=0 // pred_check
    _
  $region7: #{simple_view_encoder.6} parent=0 // pred_check_branch
    %11 = sbr.rel (0) target = $region9
  $region8: #{simple_view_encoder.6} parent=0 // pred_region
    _
  $region9: #{simple_view_encoder.6} parent=0 // pred_fallthru
    _
  // Predicated region
  $region10: #{simple_view_encoder.6} parent=0 // pred_check
    _
  $region11: #{simple_view_encoder.6} parent=0 // pred_check_branch
    %13 = sbr.rel (0) target = $region13
  $region12: #{simple_view_encoder.6} parent=0 // pred_region
    _
  $region13: #{simple_view_encoder.6} parent=0 // pred_fallthru
    _
  %v15 = vld [vmem:[%s0] sm:$0xff]
  %v16 = vld [vmem:[%s0 + $0x8] sm:$0xff]
  %v17 = vld [vmem:[%s0 + $0x10] sm:$0xf]
  %v18 = vld [vmem:[%s0 + $0x14] sm:$0xff]
  %v19 = vld [vmem:[%s0 + $0x1c] sm:$0xff]
  %v20 = vld [vmem:[%s0 + $0x24] sm:$0xf]
  %v21 = vld [vmem:[%s0 + $0x28] sm:$0xff]
  %v22 = vld [vmem:[%s0 + $0x30] sm:$0xff]
  %v23 = vld [vmem:[%s0 + $0x38] sm:$0xf]
  %v24 = vld [vmem:[%s0 + $0x3c] sm:$0xff]
  %v25 = vld [vmem:[%s0 + $0x44] sm:$0xff]
  %v26 = vld [vmem:[%s0 + $0x4c] sm:$0xf]
  %v27 = vld [vmem:[%s0 + $0x50] sm:$0xff]
  %v28 = vld [vmem:[%s0 + $0x58] sm:$0xff]
  %v29 = vld [vmem:[%s0 + $0x60] sm:$0xf]
  %v30 = vld [vmem:[%s0 + $0x64] sm:$0xff]
  %v31 = vld [vmem:[%s0 + $0x6c] sm:$0xff]
  %v32 = vld [vmem:[%s0 + $0x74] sm:$0xf]
  %v33 = vld [vmem:[%s0 + $0x78] sm:$0xff]
  %v34 = vld [vmem:[%s0 + $0x80] sm:$0xff]
  %v35 = vld [vmem:[%s0 + $0x88] sm:$0xf]
  %v36 = vld [vmem:[%s0 + $0x8c] sm:$0xff]
  %v37 = vld [vmem:[%s0 + $0x94] sm:$0xff]
  %v38 = vld [vmem:[%s0 + $0x9c] sm:$0xf]
  %v39 = vld [vmem:[%s0 + $0xa0] sm:$0xff]
  %v40 = vld [vmem:[%s0 + $0xa8] sm:$0xff]
  %v41 = vld [vmem:[%s0 + $0xb0] sm:$0xf]
  %v42 = vld [vmem:[%s0 + $0xb4] sm:$0xff]
  %v43 = vld [vmem:[%s0 + $0xbc] sm:$0xff]
  %v44 = vld [vmem:[%s0 + $0xc4] sm:$0xf]
  %v45 = vld [vmem:[%s0 + $0xc8] sm:$0xff]
  %v46 = vld [vmem:[%s0 + $0xd0] sm:$0xff]
  %v47 = vld [vmem:[%s0 + $0xd8] sm:$0xf]
  %v48 = vld [vmem:[%s0 + $0xdc] sm:$0xff]
  %v49 = vld [vmem:[%s0 + $0xe4] sm:$0xff]
  %v50 = vld [vmem:[%s0 + $0xec] sm:$0xf]
  %v51 = vld [vmem:[%s0 + $0xf0] sm:$0xff]
  %v52 = vld [vmem:[%s0 + $0xf8] sm:$0xff]
  %v53 = vld [vmem:[%s0 + $0x100] sm:$0xf]
  %v54 = vld [vmem:[%s0 + $0x104] sm:$0xff]
  %v55 = vld [vmem:[%s0 + $0x10c] sm:$0xff]
  %v56 = vld [vmem:[%s0 + $0x114] sm:$0xf]
  %v57 = vld [vmem:[%s0 + $0x118] sm:$0xff]
  %v58 = vld [vmem:[%s0 + $0x120] sm:$0xff]
  %v59 = vld [vmem:[%s0 + $0x128] sm:$0xf]
  %v60 = vld [vmem:[%s0 + $0x12c] sm:$0xff]
  %v61 = vld [vmem:[%s0 + $0x134] sm:$0xff]
  %v62 = vld [vmem:[%s0 + $0x13c] sm:$0xf]
  %v63 = vld [vmem:[%s0 + $0x140] sm:$0xff]
  %v64 = vld [vmem:[%s0 + $0x148] sm:$0xff]
  %v65 = vld [vmem:[%s0 + $0x150] sm:$0xf]
  %v66 = vld [vmem:[%s0 + $0x154] sm:$0xff]
  %v67 = vld [vmem:[%s0 + $0x15c] sm:$0xff]
  %v68 = vld [vmem:[%s0 + $0x164] sm:$0xf]
  %v69 = vld [vmem:[%s0 + $0x168] sm:$0xff]
  %v70 = vld [vmem:[%s0 + $0x170] sm:$0xff]
  %v71 = vld [vmem:[%s0 + $0x178] sm:$0xf]
  %v72 = vld [vmem:[%s0 + $0x17c] sm:$0xff]
  %v73 = vld [vmem:[%s0 + $0x184] sm:$0xff]
  %v74 = vld [vmem:[%s0 + $0x18c] sm:$0xf]
  %v75 = vld [vmem:[%s0 + $0x190] sm:$0xff]
  %v76 = vld [vmem:[%s0 + $0x198] sm:$0xff]
  %v77 = vld [vmem:[%s0 + $0x1a0] sm:$0xf]
  %v78 = vld [vmem:[%s0 + $0x1a4] sm:$0xff]
  %v79 = vld [vmem:[%s0 + $0x1ac] sm:$0xff]
  %v80 = vld [vmem:[%s0 + $0x1b4] sm:$0xf]
  %v81 = vld [vmem:[%s0 + $0x1b8] sm:$0xff]
  %v82 = vld [vmem:[%s0 + $0x1c0] sm:$0xff]
  %v83 = vld [vmem:[%s0 + $0x1c8] sm:$0xf]
  %v84 = vld [vmem:[%s0 + $0x1cc] sm:$0xff]
  %v85 = vld [vmem:[%s0 + $0x1d4] sm:$0xff]
  %v86 = vld [vmem:[%s0 + $0x1dc] sm:$0xf]
  %v87 = vld [vmem:[%s0 + $0x1e0] sm:$0xff]
  %v88 = vld [vmem:[%s0 + $0x1e8] sm:$0xff]
  %v89 = vld [vmem:[%s0 + $0x1f0] sm:$0xf]
  %v90 = vld [vmem:[%s0 + $0x1f4] sm:$0xff]
  %v91 = vld [vmem:[%s0 + $0x1fc] sm:$0xff]
  %v92 = vld [vmem:[%s0 + $0x204] sm:$0xf]
  %v93 = vld [vmem:[%s0 + $0x208] sm:$0xff]
  %v94 = vld [vmem:[%s0 + $0x210] sm:$0xff]
  %v95 = vld [vmem:[%s0 + $0x218] sm:$0xf]
  %v96 = vld [vmem:[%s0 + $0x21c] sm:$0xff]
  %v97 = vld [vmem:[%s0 + $0x224] sm:$0xff]
  %v98 = vld [vmem:[%s0 + $0x22c] sm:$0xf]
  %v99 = vld [vmem:[%s0 + $0x230] sm:$0xff]
  %v100 = vld [vmem:[%s0 + $0x238] sm:$0xff]
  %v101 = vld [vmem:[%s0 + $0x240] sm:$0xf]
  %v102 = vld [vmem:[%s0 + $0x244] sm:$0xff]
  %v103 = vld [vmem:[%s0 + $0x24c] sm:$0xff]
  %v104 = vld [vmem:[%s0 + $0x254] sm:$0xf]
  %v105 = vld [vmem:[%s0 + $0x258] sm:$0xff]
  %v106 = vld [vmem:[%s0 + $0x260] sm:$0xff]
  %v107 = vld [vmem:[%s0 + $0x268] sm:$0xf]
  %v108 = vld [vmem:[%s0 + $0x26c] sm:$0xff]
  %v109 = vld [vmem:[%s0 + $0x274] sm:$0xff]
  %v110 = vld [vmem:[%s0 + $0x27c] sm:$0xf]
  %v111 = vld [vmem:[%s1] sm:$0xf]
  %v112 = vld [vmem:[%s1 + $0x4] sm:$0xf]
  %v113 = vld [vmem:[%s1 + $0x8] sm:$0xf]
  %v114 = vld [vmem:[%s1 + $0xc] sm:$0xf]
  %v115 = vld [vmem:[%s1 + $0x10] sm:$0xf]
  %v116 = vld [vmem:[%s1 + $0x14] sm:$0xf]
  %v117 = vld [vmem:[%s1 + $0x18] sm:$0xf]
  %v118 = vld [vmem:[%s1 + $0x1c] sm:$0xf]
  %v119 = vld [vmem:[%s1 + $0x20] sm:$0xf]
  %v120 = vld [vmem:[%s1 + $0x24] sm:$0xf]
  %v121 = vld [vmem:[%s1 + $0x28] sm:$0xf]
  %v122 = vld [vmem:[%s1 + $0x2c] sm:$0xf]
  %v123 = vld [vmem:[%s1 + $0x30] sm:$0xf]
  %v124 = vld [vmem:[%s1 + $0x34] sm:$0xf]
  %v125 = vld [vmem:[%s1 + $0x38] sm:$0xf]
  %v126 = vld [vmem:[%s1 + $0x3c] sm:$0xf]
  %v127 = vld [vmem:[%s1 + $0x40] sm:$0xf]
  %v128 = vld [vmem:[%s1 + $0x44] sm:$0xf]
  %v129 = vld [vmem:[%s1 + $0x48] sm:$0xf]
  %v130 = vld [vmem:[%s1 + $0x4c] sm:$0xf]
  %v131 = vld [vmem:[%s1 + $0x50] sm:$0xf]
  %v132 = vld [vmem:[%s1 + $0x54] sm:$0xf]
  %v133 = vld [vmem:[%s1 + $0x58] sm:$0xf]
  %v134 = vld [vmem:[%s1 + $0x5c] sm:$0xf]
  %v135 = vld [vmem:[%s1 + $0x60] sm:$0xf]
  %v136 = vld [vmem:[%s1 + $0x64] sm:$0xf]
  %v137 = vld [vmem:[%s1 + $0x68] sm:$0xf]
  %v138 = vld [vmem:[%s1 + $0x6c] sm:$0xf]
  %v139 = vld [vmem:[%s1 + $0x70] sm:$0xf]
  %v140 = vld [vmem:[%s1 + $0x74] sm:$0xf]
  %v141 = vld [vmem:[%s1 + $0x78] sm:$0xf]
  %v142 = vld [vmem:[%s1 + $0x7c] sm:$0xf]
  %v143 = vld [vmem:[%s1 + $0x80] sm:$0xf]
  %v144 = vld [vmem:[%s1 + $0x84] sm:$0xf]
  %v145 = vld [vmem:[%s1 + $0x88] sm:$0xf]
  %v146 = vld [vmem:[%s1 + $0x8c] sm:$0xf]
  %v147 = vld [vmem:[%s1 + $0x90] sm:$0xf]
  %v148 = vld [vmem:[%s1 + $0x94] sm:$0xf]
  %v149 = vld [vmem:[%s1 + $0x98] sm:$0xf]
  %v150 = vld [vmem:[%s1 + $0x9c] sm:$0xf]
  %v151 = vld [vmem:[%s1 + $0xa0] sm:$0xf]
  %v152 = vld [vmem:[%s1 + $0xa4] sm:$0xf]
  %v153 = vld [vmem:[%s1 + $0xa8] sm:$0xf]
  %v154 = vld [vmem:[%s1 + $0xac] sm:$0xf]
  %v155 = vld [vmem:[%s1 + $0xb0] sm:$0xf]
  %v156 = vld [vmem:[%s1 + $0xb4] sm:$0xf]
  %v157 = vld [vmem:[%s1 + $0xb8] sm:$0xf]
  %v158 = vld [vmem:[%s1 + $0xbc] sm:$0xf]
  %v159 = vld [vmem:[%s1 + $0xc0] sm:$0xf]
  %v160 = vld [vmem:[%s1 + $0xc4] sm:$0xf]
  %v161 = vld [vmem:[%s1 + $0xc8] sm:$0xf]
  %v162 = vld [vmem:[%s1 + $0xcc] sm:$0xf]
  %v163 = vld [vmem:[%s1 + $0xd0] sm:$0xf]
  %v164 = vld [vmem:[%s1 + $0xd4] sm:$0xf]
  %v165 = vld [vmem:[%s1 + $0xd8] sm:$0xf]
  %v166 = vld [vmem:[%s1 + $0xdc] sm:$0xf]
  %v167 = vld [vmem:[%s1 + $0xe0] sm:$0xf]
  %v168 = vld [vmem:[%s1 + $0xe4] sm:$0xf]
  %v169 = vld [vmem:[%s1 + $0xe8] sm:$0xf]
  %v170 = vld [vmem:[%s1 + $0xec] sm:$0xf]
  %v171 = vld [vmem:[%s1 + $0xf0] sm:$0xf]
  %v172 = vld [vmem:[%s1 + $0xf4] sm:$0xf]
  %v173 = vld [vmem:[%s1 + $0xf8] sm:$0xf]
  %v174 = vld [vmem:[%s1 + $0xfc] sm:$0xf]
  %v175 = vld [vmem:[%s1 + $0x100] sm:$0xf]
  %v176 = vld [vmem:[%s1 + $0x104] sm:$0xf]
  %v177 = vld [vmem:[%s1 + $0x108] sm:$0xf]
  %v178 = vld [vmem:[%s1 + $0x10c] sm:$0xf]
  %v179 = vld [vmem:[%s1 + $0x110] sm:$0xf]
  %v180 = vld [vmem:[%s1 + $0x114] sm:$0xf]
  %v181 = vld [vmem:[%s1 + $0x118] sm:$0xf]
  %v182 = vld [vmem:[%s1 + $0x11c] sm:$0xf]
  %v183 = vld [vmem:[%s2] sm:$0x1]
  %v185 = vlaneseq
  %v186 = vshrl.u32 %v185, 7
  %v187 = vsub.s32 0, %v186
  %v188 = vrot.slane %v183, %v187
  %v286 = vunpack.c.l.b16 %v15
  %v287 = vunpack.c.h.b16 %v15
  %v288 = vunpack.c.l.b16 %v16
  %v289 = vunpack.c.h.b16 %v16
  %v290 = vunpack.c.l.b16 %v17
  %v291 = vunpack.c.l.b16 %v18
  %v292 = vunpack.c.h.b16 %v18
  %v293 = vunpack.c.l.b16 %v19
  %v294 = vunpack.c.h.b16 %v19
  %v295 = vunpack.c.l.b16 %v20
  %v296 = vunpack.c.l.b16 %v21
  %v297 = vunpack.c.h.b16 %v21
  %v298 = vunpack.c.l.b16 %v22
  %v299 = vunpack.c.h.b16 %v22
  %v300 = vunpack.c.l.b16 %v23
  %v301 = vunpack.c.l.b16 %v24
  %v302 = vunpack.c.h.b16 %v24
  %v303 = vunpack.c.l.b16 %v25
  %v304 = vunpack.c.h.b16 %v25
  %v305 = vunpack.c.l.b16 %v26
  %v306 = vunpack.c.l.b16 %v27
  %v307 = vunpack.c.h.b16 %v27
  %v308 = vunpack.c.l.b16 %v28
  %v309 = vunpack.c.h.b16 %v28
  %v310 = vunpack.c.l.b16 %v29
  %v311 = vunpack.c.l.b16 %v30
  %v312 = vunpack.c.h.b16 %v30
  %v313 = vunpack.c.l.b16 %v31
  %v314 = vunpack.c.h.b16 %v31
  %v315 = vunpack.c.l.b16 %v32
  %v316 = vunpack.c.l.b16 %v33
  %v317 = vunpack.c.h.b16 %v33
  %v318 = vunpack.c.l.b16 %v34
  %v319 = vunpack.c.h.b16 %v34
  %v320 = vunpack.c.l.b16 %v35
  %v321 = vunpack.c.l.b16 %v36
  %v322 = vunpack.c.h.b16 %v36
  %v323 = vunpack.c.l.b16 %v37
  %v324 = vunpack.c.h.b16 %v37
  %v325 = vunpack.c.l.b16 %v38
  %v326 = vunpack.c.l.b16 %v39
  %v327 = vunpack.c.h.b16 %v39
  %v328 = vunpack.c.l.b16 %v40
  %v329 = vunpack.c.h.b16 %v40
  %v330 = vunpack.c.l.b16 %v41
  %v331 = vunpack.c.l.b16 %v42
  %v332 = vunpack.c.h.b16 %v42
  %v333 = vunpack.c.l.b16 %v43
  %v334 = vunpack.c.h.b16 %v43
  %v335 = vunpack.c.l.b16 %v44
  %v336 = vunpack.c.l.b16 %v45
  %v337 = vunpack.c.h.b16 %v45
  %v338 = vunpack.c.l.b16 %v46
  %v339 = vunpack.c.h.b16 %v46
  %v340 = vunpack.c.l.b16 %v47
  %v341 = vunpack.c.l.b16 %v48
  %v342 = vunpack.c.h.b16 %v48
  %v343 = vunpack.c.l.b16 %v49
  %v344 = vunpack.c.h.b16 %v49
  %v345 = vunpack.c.l.b16 %v50
  %v346 = vunpack.c.l.b16 %v51
  %v347 = vunpack.c.h.b16 %v51
  %v348 = vunpack.c.l.b16 %v52
  %v349 = vunpack.c.h.b16 %v52
  %v350 = vunpack.c.l.b16 %v53
  %v351 = vunpack.c.l.b16 %v54
  %v352 = vunpack.c.h.b16 %v54
  %v353 = vunpack.c.l.b16 %v55
  %v354 = vunpack.c.h.b16 %v55
  %v355 = vunpack.c.l.b16 %v56
  %v356 = vunpack.c.l.b16 %v57
  %v357 = vunpack.c.h.b16 %v57
  %v358 = vunpack.c.l.b16 %v58
  %v359 = vunpack.c.h.b16 %v58
  %v360 = vunpack.c.l.b16 %v59
  %v361 = vunpack.c.l.b16 %v60
  %v362 = vunpack.c.h.b16 %v60
  %v363 = vunpack.c.l.b16 %v61
  %v364 = vunpack.c.h.b16 %v61
  %v365 = vunpack.c.l.b16 %v62
  %v366 = vunpack.c.l.b16 %v63
  %v367 = vunpack.c.h.b16 %v63
  %v368 = vunpack.c.l.b16 %v64
  %v369 = vunpack.c.h.b16 %v64
  %v370 = vunpack.c.l.b16 %v65
  %v371 = vunpack.c.l.b16 %v66
  %v372 = vunpack.c.h.b16 %v66
  %v373 = vunpack.c.l.b16 %v67
  %v374 = vunpack.c.h.b16 %v67
  %v375 = vunpack.c.l.b16 %v68
  %v376 = vunpack.c.l.b16 %v69
  %v377 = vunpack.c.h.b16 %v69
  %v378 = vunpack.c.l.b16 %v70
  %v379 = vunpack.c.h.b16 %v70
  %v380 = vunpack.c.l.b16 %v71
  %v381 = vunpack.c.l.b16 %v72
  %v382 = vunpack.c.h.b16 %v72
  %v383 = vunpack.c.l.b16 %v73
  %v384 = vunpack.c.h.b16 %v73
  %v385 = vunpack.c.l.b16 %v74
  %v386 = vunpack.c.l.b16 %v75
  %v387 = vunpack.c.h.b16 %v75
  %v388 = vunpack.c.l.b16 %v76
  %v389 = vunpack.c.h.b16 %v76
  %v390 = vunpack.c.l.b16 %v77
  %v391 = vunpack.c.l.b16 %v78
  %v392 = vunpack.c.h.b16 %v78
  %v393 = vunpack.c.l.b16 %v79
  %v394 = vunpack.c.h.b16 %v79
  %v395 = vunpack.c.l.b16 %v80
  %v396 = vunpack.c.l.b16 %v81
  %v397 = vunpack.c.h.b16 %v81
  %v398 = vunpack.c.l.b16 %v82
  %v399 = vunpack.c.h.b16 %v82
  %v400 = vunpack.c.l.b16 %v83
  %v401 = vunpack.c.l.b16 %v84
  %v402 = vunpack.c.h.b16 %v84
  %v403 = vunpack.c.l.b16 %v85
  %v404 = vunpack.c.h.b16 %v85
  %v405 = vunpack.c.l.b16 %v86
  %v406 = vunpack.c.l.b16 %v87
  %v407 = vunpack.c.h.b16 %v87
  %v408 = vunpack.c.l.b16 %v88
  %v409 = vunpack.c.h.b16 %v88
  %v410 = vunpack.c.l.b16 %v89
  %v411 = vunpack.c.l.b16 %v90
  %v412 = vunpack.c.h.b16 %v90
  %v413 = vunpack.c.l.b16 %v91
  %v414 = vunpack.c.h.b16 %v91
  %v415 = vunpack.c.l.b16 %v92
  %v416 = vunpack.c.l.b16 %v93
  %v417 = vunpack.c.h.b16 %v93
  %v418 = vunpack.c.l.b16 %v94
  %v419 = vunpack.c.h.b16 %v94
  %v420 = vunpack.c.l.b16 %v95
  %v421 = vunpack.c.l.b16 %v96
  %v422 = vunpack.c.h.b16 %v96
  %v423 = vunpack.c.l.b16 %v97
  %v424 = vunpack.c.h.b16 %v97
  %v425 = vunpack.c.l.b16 %v98
  %v426 = vunpack.c.l.b16 %v99
  %v427 = vunpack.c.h.b16 %v99
  %v428 = vunpack.c.l.b16 %v100
  %v429 = vunpack.c.h.b16 %v100
  %v430 = vunpack.c.l.b16 %v101
  %v431 = vunpack.c.l.b16 %v102
  %v432 = vunpack.c.h.b16 %v102
  %v433 = vunpack.c.l.b16 %v103
  %v434 = vunpack.c.h.b16 %v103
  %v435 = vunpack.c.l.b16 %v104
  %v436 = vunpack.c.l.b16 %v105
  %v437 = vunpack.c.h.b16 %v105
  %v438 = vunpack.c.l.b16 %v106
  %v439 = vunpack.c.h.b16 %v106
  %v440 = vunpack.c.l.b16 %v107
  %v441 = vunpack.c.l.b16 %v108
  %v442 = vunpack.c.h.b16 %v108
  %v443 = vunpack.c.l.b16 %v109
  %v444 = vunpack.c.h.b16 %v109
  %v445 = vunpack.c.l.b16 %v110
  %v446 = vpack.c.b16 %v291, %v286
  %v447 = vpack.c.b16 %v292, %v287
  %v448 = vpack.c.b16 %v293, %v288
  %v449 = vpack.c.b16 %v294, %v289
  %v450 = vpack.c.b16 %v295, %v290
  %v451 = vpack.c.b16 %v301, %v296
  %v452 = vpack.c.b16 %v302, %v297
  %v453 = vpack.c.b16 %v303, %v298
  %v454 = vpack.c.b16 %v304, %v299
  %v455 = vpack.c.b16 %v305, %v300
  %v456 = vpack.c.b16 %v311, %v306
  %v457 = vpack.c.b16 %v312, %v307
  %v458 = vpack.c.b16 %v313, %v308
  %v459 = vpack.c.b16 %v314, %v309
  %v460 = vpack.c.b16 %v315, %v310
  %v461 = vpack.c.b16 %v321, %v316
  %v462 = vpack.c.b16 %v322, %v317
  %v463 = vpack.c.b16 %v323, %v318
  %v464 = vpack.c.b16 %v324, %v319
  %v465 = vpack.c.b16 %v325, %v320
  %v466 = vpack.c.b16 %v331, %v326
  %v467 = vpack.c.b16 %v332, %v327
  %v468 = vpack.c.b16 %v333, %v328
  %v469 = vpack.c.b16 %v334, %v329
  %v470 = vpack.c.b16 %v335, %v330
  %v471 = vpack.c.b16 %v341, %v336
  %v472 = vpack.c.b16 %v342, %v337
  %v473 = vpack.c.b16 %v343, %v338
  %v474 = vpack.c.b16 %v344, %v339
  %v475 = vpack.c.b16 %v345, %v340
  %v476 = vpack.c.b16 %v351, %v346
  %v477 = vpack.c.b16 %v352, %v347
  %v478 = vpack.c.b16 %v353, %v348
  %v479 = vpack.c.b16 %v354, %v349
  %v480 = vpack.c.b16 %v355, %v350
  %v481 = vpack.c.b16 %v361, %v356
  %v482 = vpack.c.b16 %v362, %v357
  %v483 = vpack.c.b16 %v363, %v358
  %v484 = vpack.c.b16 %v364, %v359
  %v485 = vpack.c.b16 %v365, %v360
  %v486 = vpack.c.b16 %v371, %v366
  %v487 = vpack.c.b16 %v372, %v367
  %v488 = vpack.c.b16 %v373, %v368
  %v489 = vpack.c.b16 %v374, %v369
  %v490 = vpack.c.b16 %v375, %v370
  %v491 = vpack.c.b16 %v381, %v376
  %v492 = vpack.c.b16 %v382, %v377
  %v493 = vpack.c.b16 %v383, %v378
  %v494 = vpack.c.b16 %v384, %v379
  %v495 = vpack.c.b16 %v385, %v380
  %v496 = vpack.c.b16 %v391, %v386
  %v497 = vpack.c.b16 %v392, %v387
  %v498 = vpack.c.b16 %v393, %v388
  %v499 = vpack.c.b16 %v394, %v389
  %v500 = vpack.c.b16 %v395, %v390
  %v501 = vpack.c.b16 %v401, %v396
  %v502 = vpack.c.b16 %v402, %v397
  %v503 = vpack.c.b16 %v403, %v398
  %v504 = vpack.c.b16 %v404, %v399
  %v505 = vpack.c.b16 %v405, %v400
  %v506 = vpack.c.b16 %v411, %v406
  %v507 = vpack.c.b16 %v412, %v407
  %v508 = vpack.c.b16 %v413, %v408
  %v509 = vpack.c.b16 %v414, %v409
  %v510 = vpack.c.b16 %v415, %v410
  %v511 = vpack.c.b16 %v421, %v416
  %v512 = vpack.c.b16 %v422, %v417
  %v513 = vpack.c.b16 %v423, %v418
  %v514 = vpack.c.b16 %v424, %v419
  %v515 = vpack.c.b16 %v425, %v420
  %v516 = vpack.c.b16 %v431, %v426
  %v517 = vpack.c.b16 %v432, %v427
  %v518 = vpack.c.b16 %v433, %v428
  %v519 = vpack.c.b16 %v434, %v429
  %v520 = vpack.c.b16 %v435, %v430
  %v521 = vpack.c.b16 %v441, %v436
  %v522 = vpack.c.b16 %v442, %v437
  %v523 = vpack.c.b16 %v443, %v438
  %v524 = vpack.c.b16 %v444, %v439
  %v525 = vpack.c.b16 %v445, %v440
  %v662 = vunpack.c.l.b16 %v111
  %v663 = vunpack.c.l.b16 %v112
  %v664 = vunpack.c.l.b16 %v113
  %v665 = vunpack.c.l.b16 %v114
  %v666 = vunpack.c.l.b16 %v115
  %v667 = vunpack.c.l.b16 %v116
  %v668 = vunpack.c.l.b16 %v117
  %v669 = vunpack.c.l.b16 %v118
  %v670 = vunpack.c.l.b16 %v119
  %v671 = vunpack.c.l.b16 %v120
  %v672 = vunpack.c.l.b16 %v121
  %v673 = vunpack.c.l.b16 %v122
  %v674 = vunpack.c.l.b16 %v123
  %v675 = vunpack.c.l.b16 %v124
  %v676 = vunpack.c.l.b16 %v125
  %v677 = vunpack.c.l.b16 %v126
  %v678 = vunpack.c.l.b16 %v127
  %v679 = vunpack.c.l.b16 %v128
  %v680 = vunpack.c.l.b16 %v129
  %v681 = vunpack.c.l.b16 %v130
  %v682 = vunpack.c.l.b16 %v131
  %v683 = vunpack.c.l.b16 %v132
  %v684 = vunpack.c.l.b16 %v133
  %v685 = vunpack.c.l.b16 %v134
  %v686 = vunpack.c.l.b16 %v135
  %v687 = vunpack.c.l.b16 %v136
  %v688 = vunpack.c.l.b16 %v137
  %v689 = vunpack.c.l.b16 %v138
  %v690 = vunpack.c.l.b16 %v139
  %v691 = vunpack.c.l.b16 %v140
  %v692 = vunpack.c.l.b16 %v141
  %v693 = vunpack.c.l.b16 %v142
  %v694 = vunpack.c.l.b16 %v143
  %v695 = vunpack.c.l.b16 %v144
  %v696 = vunpack.c.l.b16 %v145
  %v697 = vunpack.c.l.b16 %v146
  %v698 = vunpack.c.l.b16 %v147
  %v699 = vunpack.c.l.b16 %v148
  %v700 = vunpack.c.l.b16 %v149
  %v701 = vunpack.c.l.b16 %v150
  %v702 = vunpack.c.l.b16 %v151
  %v703 = vunpack.c.l.b16 %v152
  %v704 = vunpack.c.l.b16 %v153
  %v705 = vunpack.c.l.b16 %v154
  %v706 = vunpack.c.l.b16 %v155
  %v707 = vunpack.c.l.b16 %v156
  %v708 = vunpack.c.l.b16 %v157
  %v709 = vunpack.c.l.b16 %v158
  %v710 = vunpack.c.l.b16 %v159
  %v711 = vunpack.c.l.b16 %v160
  %v712 = vunpack.c.l.b16 %v161
  %v713 = vunpack.c.l.b16 %v162
  %v714 = vunpack.c.l.b16 %v163
  %v715 = vunpack.c.l.b16 %v164
  %v716 = vunpack.c.l.b16 %v165
  %v717 = vunpack.c.l.b16 %v166
  %v718 = vunpack.c.l.b16 %v167
  %v719 = vunpack.c.l.b16 %v168
  %v720 = vunpack.c.l.b16 %v169
  %v721 = vunpack.c.l.b16 %v170
  %v722 = vunpack.c.l.b16 %v171
  %v723 = vunpack.c.l.b16 %v172
  %v724 = vunpack.c.l.b16 %v173
  %v725 = vunpack.c.l.b16 %v174
  %v726 = vunpack.c.l.b16 %v175
  %v727 = vunpack.c.l.b16 %v176
  %v728 = vunpack.c.l.b16 %v177
  %v729 = vunpack.c.l.b16 %v178
  %v730 = vunpack.c.l.b16 %v179
  %v731 = vunpack.c.l.b16 %v180
  %v732 = vunpack.c.l.b16 %v181
  %v733 = vunpack.c.l.b16 %v182
  %v734 = vpack.c.b16 %v663, %v662
  %v735 = vpack.c.b16 %v665, %v664
  %v736 = vpack.c.b16 %v667, %v666
  %v737 = vpack.c.b16 %v669, %v668
  %v738 = vpack.c.b16 %v671, %v670
  %v739 = vpack.c.b16 %v673, %v672
  %v740 = vpack.c.b16 %v675, %v674
  %v741 = vpack.c.b16 %v677, %v676
  %v742 = vpack.c.b16 %v679, %v678
  %v743 = vpack.c.b16 %v681, %v680
  %v744 = vpack.c.b16 %v683, %v682
  %v745 = vpack.c.b16 %v685, %v684
  %v746 = vpack.c.b16 %v687, %v686
  %v747 = vpack.c.b16 %v689, %v688
  %v748 = vpack.c.b16 %v691, %v690
  %v749 = vpack.c.b16 %v693, %v692
  %v750 = vpack.c.b16 %v695, %v694
  %v751 = vpack.c.b16 %v697, %v696
  %v752 = vpack.c.b16 %v699, %v698
  %v753 = vpack.c.b16 %v701, %v700
  %v754 = vpack.c.b16 %v703, %v702
  %v755 = vpack.c.b16 %v705, %v704
  %v756 = vpack.c.b16 %v707, %v706
  %v757 = vpack.c.b16 %v709, %v708
  %v758 = vpack.c.b16 %v711, %v710
  %v759 = vpack.c.b16 %v713, %v712
  %v760 = vpack.c.b16 %v715, %v714
  %v761 = vpack.c.b16 %v717, %v716
  %v762 = vpack.c.b16 %v719, %v718
  %v763 = vpack.c.b16 %v721, %v720
  %v764 = vpack.c.b16 %v723, %v722
  %v765 = vpack.c.b16 %v725, %v724
  %v766 = vpack.c.b16 %v727, %v726
  %v767 = vpack.c.b16 %v729, %v728
  %v768 = vpack.c.b16 %v731, %v730
  %v769 = vpack.c.b16 %v733, %v732
  %vm806 = vcmask 523264
  %v808 = vsel %vm806, %v450, 0
  %v811 = vsel %vm806, %v455, 0
  %v814 = vsel %vm806, %v460, 0
  %v817 = vsel %vm806, %v465, 0
  %v820 = vsel %vm806, %v470, 0
  %v823 = vsel %vm806, %v475, 0
  %v826 = vsel %vm806, %v480, 0
  %v829 = vsel %vm806, %v485, 0
  %v832 = vsel %vm806, %v490, 0
  %v835 = vsel %vm806, %v495, 0
  %v838 = vsel %vm806, %v500, 0
  %v841 = vsel %vm806, %v505, 0
  %v844 = vsel %vm806, %v510, 0
  %v847 = vsel %vm806, %v515, 0
  %v850 = vsel %vm806, %v520, 0
  %v853 = vsel %vm806, %v525, 0
  %855 = vmatprep.subr.bf16.mxu0 0
  %856 = vmatpush1.bf16.msra.mxu0 %v741
  %857 = vmatprep.subr.bf16.mxu0 0
  %858 = vmatpush1.bf16.msra.mxu0 %v740
  %859 = vmatprep.subr.bf16.mxu0 0
  %860 = vmatpush1.bf16.msra.mxu0 %v739
  %861 = vmatprep.subr.bf16.mxu0 0
  %862 = vmatpush1.bf16.msra.mxu0 %v738
  %863 = vmatprep.subr.bf16.mxu0 0
  %864 = vmatpush1.bf16.msra.mxu0 %v737
  %865 = vmatprep.subr.bf16.mxu0 0
  %866 = vmatpush1.bf16.msra.mxu0 %v736
  %867 = vmatprep.subr.bf16.mxu0 0
  %868 = vmatpush1.bf16.msra.mxu0 %v735
  %869 = vmatprep.subr.bf16.mxu0 0
  %870 = vmatpush1.bf16.msra.mxu0 %v734
  %871 = vmatprep.subr.bf16.mxu0 0
  %872 = vmatpush2.bf16.msra.mxu0 %v749
  %873 = vmatprep.subr.bf16.mxu0 0
  %874 = vmatpush2.bf16.msra.mxu0 %v748
  %875 = vmatprep.subr.bf16.mxu0 0
  %876 = vmatpush2.bf16.msra.mxu0 %v747
  %877 = vmatprep.subr.bf16.mxu0 0
  %878 = vmatpush2.bf16.msra.mxu0 %v746
  %879 = vmatprep.subr.bf16.mxu0 0
  %880 = vmatpush2.bf16.msra.mxu0 %v745
  %881 = vmatprep.subr.bf16.mxu0 0
  %882 = vmatpush2.bf16.msra.mxu0 %v744
  %883 = vmatprep.subr.bf16.mxu0 0
  %884 = vmatpush2.bf16.msra.mxu0 %v743
  %885 = vmatprep.subr.bf16.mxu0 0
  %886 = vmatpush2.bf16.msra.mxu0 %v742
  %887 = vmatprep.mubr.bf16.mxu0 %v447
  %888 = vmatmul.mubr.bf16.gmra.mxu0 %v446
  %v889 = vpop.f32.mrf.mxu0
  %v890 = vadd.f32 %v188, %v889
  %v891 = vpop.f32.mrf.mxu0
  %v892 = vpop.f32.mrf.mxu0
  %v893 = vadd.f32 %v188, %v892
  %v894 = vpop.f32.mrf.mxu0
  %895 = vmatprep.mubr.bf16.mxu0 %v452
  %896 = vmatmul.mubr.bf16.gmra.mxu0 %v451
  %v897 = vpop.f32.mrf.mxu0
  %v898 = vadd.f32 %v188, %v897
  %v899 = vpop.f32.mrf.mxu0
  %v900 = vpop.f32.mrf.mxu0
  %v901 = vadd.f32 %v188, %v900
  %v902 = vpop.f32.mrf.mxu0
  %903 = vmatprep.mubr.bf16.mxu0 %v457
  %904 = vmatmul.mubr.bf16.gmra.mxu0 %v456
  %v905 = vpop.f32.mrf.mxu0
  %v906 = vadd.f32 %v188, %v905
  %v907 = vpop.f32.mrf.mxu0
  %v908 = vpop.f32.mrf.mxu0
  %v909 = vadd.f32 %v188, %v908
  %v910 = vpop.f32.mrf.mxu0
  %911 = vmatprep.mubr.bf16.mxu0 %v462
  %912 = vmatmul.mubr.bf16.gmra.mxu0 %v461
  %v913 = vpop.f32.mrf.mxu0
  %v914 = vadd.f32 %v188, %v913
  %v915 = vpop.f32.mrf.mxu0
  %v916 = vpop.f32.mrf.mxu0
  %v917 = vadd.f32 %v188, %v916
  %v918 = vpop.f32.mrf.mxu0
  %919 = vmatprep.mubr.bf16.mxu0 %v467
  %920 = vmatmul.mubr.bf16.gmra.mxu0 %v466
  %v921 = vpop.f32.mrf.mxu0
  %v922 = vadd.f32 %v188, %v921
  %v923 = vpop.f32.mrf.mxu0
  %v924 = vpop.f32.mrf.mxu0
  %v925 = vadd.f32 %v188, %v924
  %v926 = vpop.f32.mrf.mxu0
  %927 = vmatprep.mubr.bf16.mxu0 %v472
  %928 = vmatmul.mubr.bf16.gmra.mxu0 %v471
  %v929 = vpop.f32.mrf.mxu0
  %v930 = vadd.f32 %v188, %v929
  %v931 = vpop.f32.mrf.mxu0
  %v932 = vpop.f32.mrf.mxu0
  %v933 = vadd.f32 %v188, %v932
  %v934 = vpop.f32.mrf.mxu0
  %935 = vmatprep.mubr.bf16.mxu0 %v477
  %936 = vmatmul.mubr.bf16.gmra.mxu0 %v476
  %v937 = vpop.f32.mrf.mxu0
  %v938 = vadd.f32 %v188, %v937
  %v939 = vpop.f32.mrf.mxu0
  %v940 = vpop.f32.mrf.mxu0
  %v941 = vadd.f32 %v188, %v940
  %v942 = vpop.f32.mrf.mxu0
  %943 = vmatprep.mubr.bf16.mxu0 %v482
  %944 = vmatmul.mubr.bf16.gmra.mxu0 %v481
  %v945 = vpop.f32.mrf.mxu0
  %v946 = vadd.f32 %v188, %v945
  %v947 = vpop.f32.mrf.mxu0
  %v948 = vpop.f32.mrf.mxu0
  %v949 = vadd.f32 %v188, %v948
  %v950 = vpop.f32.mrf.mxu0
  %951 = vmatprep.mubr.bf16.mxu0 %v487
  %952 = vmatmul.mubr.bf16.gmra.mxu0 %v486
  %v953 = vpop.f32.mrf.mxu0
  %v954 = vadd.f32 %v188, %v953
  %v955 = vpop.f32.mrf.mxu0
  %v956 = vpop.f32.mrf.mxu0
  %v957 = vadd.f32 %v188, %v956
  %v958 = vpop.f32.mrf.mxu0
  %959 = vmatprep.mubr.bf16.mxu0 %v492
  %960 = vmatmul.mubr.bf16.gmra.mxu0 %v491
  %v961 = vpop.f32.mrf.mxu0
  %v962 = vadd.f32 %v188, %v961
  %v963 = vpop.f32.mrf.mxu0
  %v964 = vpop.f32.mrf.mxu0
  %v965 = vadd.f32 %v188, %v964
  %v966 = vpop.f32.mrf.mxu0
  %967 = vmatprep.mubr.bf16.mxu0 %v497
  %968 = vmatmul.mubr.bf16.gmra.mxu0 %v496
  %v969 = vpop.f32.mrf.mxu0
  %v970 = vadd.f32 %v188, %v969
  %v971 = vpop.f32.mrf.mxu0
  %v972 = vpop.f32.mrf.mxu0
  %v973 = vadd.f32 %v188, %v972
  %v974 = vpop.f32.mrf.mxu0
  %975 = vmatprep.mubr.bf16.mxu0 %v502
  %976 = vmatmul.mubr.bf16.gmra.mxu0 %v501
  %v977 = vpop.f32.mrf.mxu0
  %v978 = vadd.f32 %v188, %v977
  %v979 = vpop.f32.mrf.mxu0
  %v980 = vpop.f32.mrf.mxu0
  %v981 = vadd.f32 %v188, %v980
  %v982 = vpop.f32.mrf.mxu0
  %983 = vmatprep.mubr.bf16.mxu0 %v507
  %984 = vmatmul.mubr.bf16.gmra.mxu0 %v506
  %v985 = vpop.f32.mrf.mxu0
  %v986 = vadd.f32 %v188, %v985
  %v987 = vpop.f32.mrf.mxu0
  %v988 = vpop.f32.mrf.mxu0
  %v989 = vadd.f32 %v188, %v988
  %v990 = vpop.f32.mrf.mxu0
  %991 = vmatprep.mubr.bf16.mxu0 %v512
  %992 = vmatmul.mubr.bf16.gmra.mxu0 %v511
  %v993 = vpop.f32.mrf.mxu0
  %v994 = vadd.f32 %v188, %v993
  %v995 = vpop.f32.mrf.mxu0
  %v996 = vpop.f32.mrf.mxu0
  %v997 = vadd.f32 %v188, %v996
  %v998 = vpop.f32.mrf.mxu0
  %999 = vmatprep.mubr.bf16.mxu0 %v517
  %1000 = vmatmul.mubr.bf16.gmra.mxu0 %v516
  %v1001 = vpop.f32.mrf.mxu0
  %v1002 = vadd.f32 %v188, %v1001
  %v1003 = vpop.f32.mrf.mxu0
  %v1004 = vpop.f32.mrf.mxu0
  %v1005 = vadd.f32 %v188, %v1004
  %v1006 = vpop.f32.mrf.mxu0
  %1007 = vmatprep.mubr.bf16.mxu0 %v522
  %1008 = vmatmul.mubr.bf16.gmra.mxu0 %v521
  %v1009 = vpop.f32.mrf.mxu0
  %v1010 = vadd.f32 %v188, %v1009
  %v1011 = vpop.f32.mrf.mxu0
  %v1012 = vpop.f32.mrf.mxu0
  %v1013 = vadd.f32 %v188, %v1012
  %v1014 = vpop.f32.mrf.mxu0
  %1015 = vdwg.mxu0
  %1016 = vmatprep.subr.bf16.mxu0 0
  %1017 = vmatpush1.bf16.msra.mxu0 %v757
  %1018 = vmatprep.subr.bf16.mxu0 0
  %1019 = vmatpush1.bf16.msra.mxu0 %v756
  %1020 = vmatprep.subr.bf16.mxu0 0
  %1021 = vmatpush1.bf16.msra.mxu0 %v755
  %1022 = vmatprep.subr.bf16.mxu0 0
  %1023 = vmatpush1.bf16.msra.mxu0 %v754
  %1024 = vmatprep.subr.bf16.mxu0 0
  %1025 = vmatpush1.bf16.msra.mxu0 %v753
  %1026 = vmatprep.subr.bf16.mxu0 0
  %1027 = vmatpush1.bf16.msra.mxu0 %v752
  %1028 = vmatprep.subr.bf16.mxu0 0
  %1029 = vmatpush1.bf16.msra.mxu0 %v751
  %1030 = vmatprep.subr.bf16.mxu0 0
  %1031 = vmatpush1.bf16.msra.mxu0 %v750
  %1032 = vmatprep.subr.bf16.mxu0 0
  %1033 = vmatpush2.bf16.msra.mxu0 %v765
  %1034 = vmatprep.subr.bf16.mxu0 0
  %1035 = vmatpush2.bf16.msra.mxu0 %v764
  %1036 = vmatprep.subr.bf16.mxu0 0
  %1037 = vmatpush2.bf16.msra.mxu0 %v763
  %1038 = vmatprep.subr.bf16.mxu0 0
  %1039 = vmatpush2.bf16.msra.mxu0 %v762
  %1040 = vmatprep.subr.bf16.mxu0 0
  %1041 = vmatpush2.bf16.msra.mxu0 %v761
  %1042 = vmatprep.subr.bf16.mxu0 0
  %1043 = vmatpush2.bf16.msra.mxu0 %v760
  %1044 = vmatprep.subr.bf16.mxu0 0
  %1045 = vmatpush2.bf16.msra.mxu0 %v759
  %1046 = vmatprep.subr.bf16.mxu0 0
  %1047 = vmatpush2.bf16.msra.mxu0 %v758
  %1048 = vmatprep.mubr.bf16.mxu0 %v449
  %1049 = vmatmul.mubr.bf16.gmra.mxu0 %v448
  %v1050 = vpop.f32.mrf.mxu0
  %v1051 = vadd.f32 %v890, %v1050
  %v1052 = vpop.f32.mrf.mxu0
  %v1053 = vpop.f32.mrf.mxu0
  %v1054 = vadd.f32 %v893, %v1053
  %v1055 = vpop.f32.mrf.mxu0
  %1056 = vmatprep.mubr.bf16.mxu0 %v454
  %1057 = vmatmul.mubr.bf16.gmra.mxu0 %v453
  %v1058 = vpop.f32.mrf.mxu0
  %v1059 = vadd.f32 %v898, %v1058
  %v1060 = vpop.f32.mrf.mxu0
  %v1061 = vpop.f32.mrf.mxu0
  %v1062 = vadd.f32 %v901, %v1061
  %v1063 = vpop.f32.mrf.mxu0
  %1064 = vmatprep.mubr.bf16.mxu0 %v459
  %1065 = vmatmul.mubr.bf16.gmra.mxu0 %v458
  %v1066 = vpop.f32.mrf.mxu0
  %v1067 = vadd.f32 %v906, %v1066
  %v1068 = vpop.f32.mrf.mxu0
  %v1069 = vpop.f32.mrf.mxu0
  %v1070 = vadd.f32 %v909, %v1069
  %v1071 = vpop.f32.mrf.mxu0
  %1072 = vmatprep.mubr.bf16.mxu0 %v464
  %1073 = vmatmul.mubr.bf16.gmra.mxu0 %v463
  %v1074 = vpop.f32.mrf.mxu0
  %v1075 = vadd.f32 %v914, %v1074
  %v1076 = vpop.f32.mrf.mxu0
  %v1077 = vpop.f32.mrf.mxu0
  %v1078 = vadd.f32 %v917, %v1077
  %v1079 = vpop.f32.mrf.mxu0
  %1080 = vmatprep.mubr.bf16.mxu0 %v469
  %1081 = vmatmul.mubr.bf16.gmra.mxu0 %v468
  %v1082 = vpop.f32.mrf.mxu0
  %v1083 = vadd.f32 %v922, %v1082
  %v1084 = vpop.f32.mrf.mxu0
  %v1085 = vpop.f32.mrf.mxu0
  %v1086 = vadd.f32 %v925, %v1085
  %v1087 = vpop.f32.mrf.mxu0
  %1088 = vmatprep.mubr.bf16.mxu0 %v474
  %1089 = vmatmul.mubr.bf16.gmra.mxu0 %v473
  %v1090 = vpop.f32.mrf.mxu0
  %v1091 = vadd.f32 %v930, %v1090
  %v1092 = vpop.f32.mrf.mxu0
  %v1093 = vpop.f32.mrf.mxu0
  %v1094 = vadd.f32 %v933, %v1093
  %v1095 = vpop.f32.mrf.mxu0
  %1096 = vmatprep.mubr.bf16.mxu0 %v479
  %1097 = vmatmul.mubr.bf16.gmra.mxu0 %v478
  %v1098 = vpop.f32.mrf.mxu0
  %v1099 = vadd.f32 %v938, %v1098
  %v1100 = vpop.f32.mrf.mxu0
  %v1101 = vpop.f32.mrf.mxu0
  %v1102 = vadd.f32 %v941, %v1101
  %v1103 = vpop.f32.mrf.mxu0
  %1104 = vmatprep.mubr.bf16.mxu0 %v484
  %1105 = vmatmul.mubr.bf16.gmra.mxu0 %v483
  %v1106 = vpop.f32.mrf.mxu0
  %v1107 = vadd.f32 %v946, %v1106
  %v1108 = vpop.f32.mrf.mxu0
  %v1109 = vpop.f32.mrf.mxu0
  %v1110 = vadd.f32 %v949, %v1109
  %v1111 = vpop.f32.mrf.mxu0
  %1112 = vmatprep.mubr.bf16.mxu0 %v489
  %1113 = vmatmul.mubr.bf16.gmra.mxu0 %v488
  %v1114 = vpop.f32.mrf.mxu0
  %v1115 = vadd.f32 %v954, %v1114
  %v1116 = vpop.f32.mrf.mxu0
  %v1117 = vpop.f32.mrf.mxu0
  %v1118 = vadd.f32 %v957, %v1117
  %v1119 = vpop.f32.mrf.mxu0
  %1120 = vmatprep.mubr.bf16.mxu0 %v494
  %1121 = vmatmul.mubr.bf16.gmra.mxu0 %v493
  %v1122 = vpop.f32.mrf.mxu0
  %v1123 = vadd.f32 %v962, %v1122
  %v1124 = vpop.f32.mrf.mxu0
  %v1125 = vpop.f32.mrf.mxu0
  %v1126 = vadd.f32 %v965, %v1125
  %v1127 = vpop.f32.mrf.mxu0
  %1128 = vmatprep.mubr.bf16.mxu0 %v499
  %1129 = vmatmul.mubr.bf16.gmra.mxu0 %v498
  %v1130 = vpop.f32.mrf.mxu0
  %v1131 = vadd.f32 %v970, %v1130
  %v1132 = vpop.f32.mrf.mxu0
  %v1133 = vpop.f32.mrf.mxu0
  %v1134 = vadd.f32 %v973, %v1133
  %v1135 = vpop.f32.mrf.mxu0
  %1136 = vmatprep.mubr.bf16.mxu0 %v504
  %1137 = vmatmul.mubr.bf16.gmra.mxu0 %v503
  %v1138 = vpop.f32.mrf.mxu0
  %v1139 = vadd.f32 %v978, %v1138
  %v1140 = vpop.f32.mrf.mxu0
  %v1141 = vpop.f32.mrf.mxu0
  %v1142 = vadd.f32 %v981, %v1141
  %v1143 = vpop.f32.mrf.mxu0
  %1144 = vmatprep.mubr.bf16.mxu0 %v509
  %1145 = vmatmul.mubr.bf16.gmra.mxu0 %v508
  %v1146 = vpop.f32.mrf.mxu0
  %v1147 = vadd.f32 %v986, %v1146
  %v1148 = vpop.f32.mrf.mxu0
  %v1149 = vpop.f32.mrf.mxu0
  %v1150 = vadd.f32 %v989, %v1149
  %v1151 = vpop.f32.mrf.mxu0
  %1152 = vmatprep.mubr.bf16.mxu0 %v514
  %1153 = vmatmul.mubr.bf16.gmra.mxu0 %v513
  %v1154 = vpop.f32.mrf.mxu0
  %v1155 = vadd.f32 %v994, %v1154
  %v1156 = vpop.f32.mrf.mxu0
  %v1157 = vpop.f32.mrf.mxu0
  %v1158 = vadd.f32 %v997, %v1157
  %v1159 = vpop.f32.mrf.mxu0
  %1160 = vmatprep.mubr.bf16.mxu0 %v519
  %1161 = vmatmul.mubr.bf16.gmra.mxu0 %v518
  %v1162 = vpop.f32.mrf.mxu0
  %v1163 = vadd.f32 %v1002, %v1162
  %v1164 = vpop.f32.mrf.mxu0
  %v1165 = vpop.f32.mrf.mxu0
  %v1166 = vadd.f32 %v1005, %v1165
  %v1167 = vpop.f32.mrf.mxu0
  %1168 = vmatprep.mubr.bf16.mxu0 %v524
  %1169 = vmatmul.mubr.bf16.gmra.mxu0 %v523
  %v1170 = vpop.f32.mrf.mxu0
  %v1171 = vadd.f32 %v1010, %v1170
  %v1172 = vpop.f32.mrf.mxu0
  %v1173 = vpop.f32.mrf.mxu0
  %v1174 = vadd.f32 %v1013, %v1173
  %v1175 = vpop.f32.mrf.mxu0
  %1176 = vdwg.mxu0
  %1177 = vmatprep.subr.bf16.mxu0 0
  %1178 = vmatpush1.bf16.msra.mxu0 0
  %1179 = vmatprep.subr.bf16.mxu0 0
  %1180 = vmatpush1.bf16.msra.mxu0 0
  %1181 = vmatprep.subr.bf16.mxu0 0
  %1182 = vmatpush1.bf16.msra.mxu0 0
  %1183 = vmatprep.subr.bf16.mxu0 0
  %1184 = vmatpush1.bf16.msra.mxu0 0
  %1185 = vmatprep.subr.bf16.mxu0 0
  %1186 = vmatpush1.bf16.msra.mxu0 %v769
  %1187 = vmatprep.subr.bf16.mxu0 0
  %1188 = vmatpush1.bf16.msra.mxu0 %v768
  %1189 = vmatprep.subr.bf16.mxu0 0
  %1190 = vmatpush1.bf16.msra.mxu0 %v767
  %1191 = vmatprep.subr.bf16.mxu0 0
  %1192 = vmatpush1.bf16.msra.mxu0 %v766
  %1193 = vmatprep.subr.bf16.mxu0 0
  %1194 = vmatpush2.bf16.msra.mxu0 0
  %1195 = vmatprep.subr.bf16.mxu0 0
  %1196 = vmatpush2.bf16.msra.mxu0 0
  %1197 = vmatprep.subr.bf16.mxu0 0
  %1198 = vmatpush2.bf16.msra.mxu0 0
  %1199 = vmatprep.subr.bf16.mxu0 0
  %1200 = vmatpush2.bf16.msra.mxu0 0
  %1201 = vmatprep.subr.bf16.mxu0 0
  %1202 = vmatpush2.bf16.msra.mxu0 0
  %1203 = vmatprep.subr.bf16.mxu0 0
  %1204 = vmatpush2.bf16.msra.mxu0 0
  %1205 = vmatprep.subr.bf16.mxu0 0
  %1206 = vmatpush2.bf16.msra.mxu0 0
  %1207 = vmatprep.subr.bf16.mxu0 0
  %1208 = vmatpush2.bf16.msra.mxu0 0
  %1209 = vmatprep.mubr.bf16.mxu0 0
  %1210 = vmatmul.mubr.bf16.gmra.mxu0 %v808
  %v1211 = vpop.f32.mrf.mxu0
  %v1212 = vadd.f32 %v1051, %v1211
  %v1213 = vpop.f32.mrf.mxu0
  %v1214 = vpop.f32.mrf.mxu0
  %v1215 = vadd.f32 %v1054, %v1214
  %v1216 = vpop.f32.mrf.mxu0
  %1217 = vmatprep.mubr.bf16.mxu0 0
  %1218 = vmatmul.mubr.bf16.gmra.mxu0 %v811
  %v1219 = vpop.f32.mrf.mxu0
  %v1220 = vadd.f32 %v1059, %v1219
  %v1221 = vpop.f32.mrf.mxu0
  %v1222 = vpop.f32.mrf.mxu0
  %v1223 = vadd.f32 %v1062, %v1222
  %v1224 = vpop.f32.mrf.mxu0
  %1225 = vmatprep.mubr.bf16.mxu0 0
  %1226 = vmatmul.mubr.bf16.gmra.mxu0 %v814
  %v1227 = vpop.f32.mrf.mxu0
  %v1228 = vadd.f32 %v1067, %v1227
  %v1229 = vpop.f32.mrf.mxu0
  %v1230 = vpop.f32.mrf.mxu0
  %v1231 = vadd.f32 %v1070, %v1230
  %v1232 = vpop.f32.mrf.mxu0
  %1233 = vmatprep.mubr.bf16.mxu0 0
  %1234 = vmatmul.mubr.bf16.gmra.mxu0 %v817
  %v1235 = vpop.f32.mrf.mxu0
  %v1236 = vadd.f32 %v1075, %v1235
  %v1237 = vpop.f32.mrf.mxu0
  %v1238 = vpop.f32.mrf.mxu0
  %v1239 = vadd.f32 %v1078, %v1238
  %v1240 = vpop.f32.mrf.mxu0
  %1241 = vmatprep.mubr.bf16.mxu0 0
  %1242 = vmatmul.mubr.bf16.gmra.mxu0 %v820
  %v1243 = vpop.f32.mrf.mxu0
  %v1244 = vadd.f32 %v1083, %v1243
  %v1245 = vpop.f32.mrf.mxu0
  %v1246 = vpop.f32.mrf.mxu0
  %v1247 = vadd.f32 %v1086, %v1246
  %v1248 = vpop.f32.mrf.mxu0
  %1249 = vmatprep.mubr.bf16.mxu0 0
  %1250 = vmatmul.mubr.bf16.gmra.mxu0 %v823
  %v1251 = vpop.f32.mrf.mxu0
  %v1252 = vadd.f32 %v1091, %v1251
  %v1253 = vpop.f32.mrf.mxu0
  %v1254 = vpop.f32.mrf.mxu0
  %v1255 = vadd.f32 %v1094, %v1254
  %v1256 = vpop.f32.mrf.mxu0
  %1257 = vmatprep.mubr.bf16.mxu0 0
  %1258 = vmatmul.mubr.bf16.gmra.mxu0 %v826
  %v1259 = vpop.f32.mrf.mxu0
  %v1260 = vadd.f32 %v1099, %v1259
  %v1261 = vpop.f32.mrf.mxu0
  %v1262 = vpop.f32.mrf.mxu0
  %v1263 = vadd.f32 %v1102, %v1262
  %v1264 = vpop.f32.mrf.mxu0
  %1265 = vmatprep.mubr.bf16.mxu0 0
  %1266 = vmatmul.mubr.bf16.gmra.mxu0 %v829
  %v1267 = vpop.f32.mrf.mxu0
  %v1268 = vadd.f32 %v1107, %v1267
  %v1269 = vpop.f32.mrf.mxu0
  %v1270 = vpop.f32.mrf.mxu0
  %v1271 = vadd.f32 %v1110, %v1270
  %v1272 = vpop.f32.mrf.mxu0
  %1273 = vmatprep.mubr.bf16.mxu0 0
  %1274 = vmatmul.mubr.bf16.gmra.mxu0 %v832
  %v1275 = vpop.f32.mrf.mxu0
  %v1276 = vadd.f32 %v1115, %v1275
  %v1277 = vpop.f32.mrf.mxu0
  %v1278 = vpop.f32.mrf.mxu0
  %v1279 = vadd.f32 %v1118, %v1278
  %v1280 = vpop.f32.mrf.mxu0
  %1281 = vmatprep.mubr.bf16.mxu0 0
  %1282 = vmatmul.mubr.bf16.gmra.mxu0 %v835
  %v1283 = vpop.f32.mrf.mxu0
  %v1284 = vadd.f32 %v1123, %v1283
  %v1285 = vpop.f32.mrf.mxu0
  %v1286 = vpop.f32.mrf.mxu0
  %v1287 = vadd.f32 %v1126, %v1286
  %v1288 = vpop.f32.mrf.mxu0
  %1289 = vmatprep.mubr.bf16.mxu0 0
  %1290 = vmatmul.mubr.bf16.gmra.mxu0 %v838
  %v1291 = vpop.f32.mrf.mxu0
  %v1292 = vadd.f32 %v1131, %v1291
  %v1293 = vpop.f32.mrf.mxu0
  %v1294 = vpop.f32.mrf.mxu0
  %v1295 = vadd.f32 %v1134, %v1294
  %v1296 = vpop.f32.mrf.mxu0
  %1297 = vmatprep.mubr.bf16.mxu0 0
  %1298 = vmatmul.mubr.bf16.gmra.mxu0 %v841
  %v1299 = vpop.f32.mrf.mxu0
  %v1300 = vadd.f32 %v1139, %v1299
  %v1301 = vpop.f32.mrf.mxu0
  %v1302 = vpop.f32.mrf.mxu0
  %v1303 = vadd.f32 %v1142, %v1302
  %v1304 = vpop.f32.mrf.mxu0
  %1305 = vmatprep.mubr.bf16.mxu0 0
  %1306 = vmatmul.mubr.bf16.gmra.mxu0 %v844
  %v1307 = vpop.f32.mrf.mxu0
  %v1308 = vadd.f32 %v1147, %v1307
  %v1309 = vpop.f32.mrf.mxu0
  %v1310 = vpop.f32.mrf.mxu0
  %v1311 = vadd.f32 %v1150, %v1310
  %v1312 = vpop.f32.mrf.mxu0
  %1313 = vmatprep.mubr.bf16.mxu0 0
  %1314 = vmatmul.mubr.bf16.gmra.mxu0 %v847
  %v1315 = vpop.f32.mrf.mxu0
  %v1316 = vadd.f32 %v1155, %v1315
  %v1317 = vpop.f32.mrf.mxu0
  %v1318 = vpop.f32.mrf.mxu0
  %v1319 = vadd.f32 %v1158, %v1318
  %v1320 = vpop.f32.mrf.mxu0
  %1321 = vmatprep.mubr.bf16.mxu0 0
  %1322 = vmatmul.mubr.bf16.gmra.mxu0 %v850
  %v1323 = vpop.f32.mrf.mxu0
  %v1324 = vadd.f32 %v1163, %v1323
  %v1325 = vpop.f32.mrf.mxu0
  %v1326 = vpop.f32.mrf.mxu0
  %v1327 = vadd.f32 %v1166, %v1326
  %v1328 = vpop.f32.mrf.mxu0
  %1329 = vmatprep.mubr.bf16.mxu0 0
  %1330 = vmatmul.mubr.bf16.gmra.mxu0 %v853
  %v1331 = vpop.f32.mrf.mxu0
  %v1332 = vadd.f32 %v1171, %v1331
  %v1333 = vpop.f32.mrf.mxu0
  %v1334 = vpop.f32.mrf.mxu0
  %v1335 = vadd.f32 %v1174, %v1334
  %v1336 = vpop.f32.mrf.mxu0
  %1337 = vdwg.mxu0
  %v1338 = vmax.f32 %v1212, 0.0
  %v1339 = vmax.f32 %v1215, 0.0
  %v1340 = vmax.f32 %v1220, 0.0
  %v1341 = vmax.f32 %v1223, 0.0
  %v1342 = vmax.f32 %v1228, 0.0
  %v1343 = vmax.f32 %v1231, 0.0
  %v1344 = vmax.f32 %v1236, 0.0
  %v1345 = vmax.f32 %v1239, 0.0
  %v1346 = vmax.f32 %v1244, 0.0
  %v1347 = vmax.f32 %v1247, 0.0
  %v1348 = vmax.f32 %v1252, 0.0
  %v1349 = vmax.f32 %v1255, 0.0
  %v1350 = vmax.f32 %v1260, 0.0
  %v1351 = vmax.f32 %v1263, 0.0
  %v1352 = vmax.f32 %v1268, 0.0
  %v1353 = vmax.f32 %v1271, 0.0
  %v1354 = vmax.f32 %v1276, 0.0
  %v1355 = vmax.f32 %v1279, 0.0
  %v1356 = vmax.f32 %v1284, 0.0
  %v1357 = vmax.f32 %v1287, 0.0
  %v1358 = vmax.f32 %v1292, 0.0
  %v1359 = vmax.f32 %v1295, 0.0
  %v1360 = vmax.f32 %v1300, 0.0
  %v1361 = vmax.f32 %v1303, 0.0
  %v1362 = vmax.f32 %v1308, 0.0
  %v1363 = vmax.f32 %v1311, 0.0
  %v1364 = vmax.f32 %v1316, 0.0
  %v1365 = vmax.f32 %v1319, 0.0
  %v1366 = vmax.f32 %v1324, 0.0
  %v1367 = vmax.f32 %v1327, 0.0
  %v1368 = vmax.f32 %v1332, 0.0
  %v1369 = vmax.f32 %v1335, 0.0
  %v1370 = vpack.c.bf16 %v1339, %v1338
  %v1371 = vpack.c.bf16 %v1341, %v1340
  %v1372 = vpack.c.bf16 %v1343, %v1342
  %v1373 = vpack.c.bf16 %v1345, %v1344
  %v1374 = vpack.c.bf16 %v1347, %v1346
  %v1375 = vpack.c.bf16 %v1349, %v1348
  %v1376 = vpack.c.bf16 %v1351, %v1350
  %v1377 = vpack.c.bf16 %v1353, %v1352
  %v1378 = vpack.c.bf16 %v1355, %v1354
  %v1379 = vpack.c.bf16 %v1357, %v1356
  %v1380 = vpack.c.bf16 %v1359, %v1358
  %v1381 = vpack.c.bf16 %v1361, %v1360
  %v1382 = vpack.c.bf16 %v1363, %v1362
  %v1383 = vpack.c.bf16 %v1365, %v1364
  %v1384 = vpack.c.bf16 %v1367, %v1366
  %v1385 = vpack.c.bf16 %v1369, %v1368
  %v1402 = vunpack.c.l.b16 %v1370
  %v1403 = vunpack.c.h.b16 %v1370
  %v1404 = vunpack.c.l.b16 %v1371
  %v1405 = vunpack.c.h.b16 %v1371
  %v1406 = vunpack.c.l.b16 %v1372
  %v1407 = vunpack.c.h.b16 %v1372
  %v1408 = vunpack.c.l.b16 %v1373
  %v1409 = vunpack.c.h.b16 %v1373
  %v1410 = vunpack.c.l.b16 %v1374
  %v1411 = vunpack.c.h.b16 %v1374
  %v1412 = vunpack.c.l.b16 %v1375
  %v1413 = vunpack.c.h.b16 %v1375
  %v1414 = vunpack.c.l.b16 %v1376
  %v1415 = vunpack.c.h.b16 %v1376
  %v1416 = vunpack.c.l.b16 %v1377
  %v1417 = vunpack.c.h.b16 %v1377
  %v1418 = vunpack.c.l.b16 %v1378
  %v1419 = vunpack.c.h.b16 %v1378
  %v1420 = vunpack.c.l.b16 %v1379
  %v1421 = vunpack.c.h.b16 %v1379
  %v1422 = vunpack.c.l.b16 %v1380
  %v1423 = vunpack.c.h.b16 %v1380
  %v1424 = vunpack.c.l.b16 %v1381
  %v1425 = vunpack.c.h.b16 %v1381
  %v1426 = vunpack.c.l.b16 %v1382
  %v1427 = vunpack.c.h.b16 %v1382
  %v1428 = vunpack.c.l.b16 %v1383
  %v1429 = vunpack.c.h.b16 %v1383
  %v1430 = vunpack.c.l.b16 %v1384
  %v1431 = vunpack.c.h.b16 %v1384
  %v1432 = vunpack.c.l.b16 %v1385
  %v1433 = vunpack.c.h.b16 %v1385
  %v1434 = vpack.c.b16 %v1402, %v1402
  %v1435 = vpack.c.b16 %v1403, %v1403
  %v1436 = vpack.c.b16 %v1404, %v1404
  %v1437 = vpack.c.b16 %v1405, %v1405
  %v1438 = vpack.c.b16 %v1406, %v1406
  %v1439 = vpack.c.b16 %v1407, %v1407
  %v1440 = vpack.c.b16 %v1408, %v1408
  %v1441 = vpack.c.b16 %v1409, %v1409
  %v1442 = vpack.c.b16 %v1410, %v1410
  %v1443 = vpack.c.b16 %v1411, %v1411
  %v1444 = vpack.c.b16 %v1412, %v1412
  %v1445 = vpack.c.b16 %v1413, %v1413
  %v1446 = vpack.c.b16 %v1414, %v1414
  %v1447 = vpack.c.b16 %v1415, %v1415
  %v1448 = vpack.c.b16 %v1416, %v1416
  %v1449 = vpack.c.b16 %v1417, %v1417
  %v1450 = vpack.c.b16 %v1418, %v1418
  %v1451 = vpack.c.b16 %v1419, %v1419
  %v1452 = vpack.c.b16 %v1420, %v1420
  %v1453 = vpack.c.b16 %v1421, %v1421
  %v1454 = vpack.c.b16 %v1422, %v1422
  %v1455 = vpack.c.b16 %v1423, %v1423
  %v1456 = vpack.c.b16 %v1424, %v1424
  %v1457 = vpack.c.b16 %v1425, %v1425
  %v1458 = vpack.c.b16 %v1426, %v1426
  %v1459 = vpack.c.b16 %v1427, %v1427
  %v1460 = vpack.c.b16 %v1428, %v1428
  %v1461 = vpack.c.b16 %v1429, %v1429
  %v1462 = vpack.c.b16 %v1430, %v1430
  %v1463 = vpack.c.b16 %v1431, %v1431
  %v1464 = vpack.c.b16 %v1432, %v1432
  %v1465 = vpack.c.b16 %v1433, %v1433
  %1498 = vst [vmem:[%s3] sm:$0xf] %v1434
  %1499 = vst [vmem:[%s3 + $0x4] sm:$0xf] %v1435
  %1500 = vst [vmem:[%s3 + $0x8] sm:$0xf] %v1436
  %1501 = vst [vmem:[%s3 + $0xc] sm:$0xf] %v1437
  %1502 = vst [vmem:[%s3 + $0x10] sm:$0xf] %v1438
  %1503 = vst [vmem:[%s3 + $0x14] sm:$0xf] %v1439
  %1504 = vst [vmem:[%s3 + $0x18] sm:$0xf] %v1440
  %1505 = vst [vmem:[%s3 + $0x1c] sm:$0xf] %v1441
  %1506 = vst [vmem:[%s3 + $0x20] sm:$0xf] %v1442
  %1507 = vst [vmem:[%s3 + $0x24] sm:$0xf] %v1443
  %1508 = vst [vmem:[%s3 + $0x28] sm:$0xf] %v1444
  %1509 = vst [vmem:[%s3 + $0x2c] sm:$0xf] %v1445
  %1510 = vst [vmem:[%s3 + $0x30] sm:$0xf] %v1446
  %1511 = vst [vmem:[%s3 + $0x34] sm:$0xf] %v1447
  %1512 = vst [vmem:[%s3 + $0x38] sm:$0xf] %v1448
  %1513 = vst [vmem:[%s3 + $0x3c] sm:$0xf] %v1449
  %1514 = vst [vmem:[%s3 + $0x40] sm:$0xf] %v1450
  %1515 = vst [vmem:[%s3 + $0x44] sm:$0xf] %v1451
  %1516 = vst [vmem:[%s3 + $0x48] sm:$0xf] %v1452
  %1517 = vst [vmem:[%s3 + $0x4c] sm:$0xf] %v1453
  %1518 = vst [vmem:[%s3 + $0x50] sm:$0xf] %v1454
  %1519 = vst [vmem:[%s3 + $0x54] sm:$0xf] %v1455
  %1520 = vst [vmem:[%s3 + $0x58] sm:$0xf] %v1456
  %1521 = vst [vmem:[%s3 + $0x5c] sm:$0xf] %v1457
  %1522 = vst [vmem:[%s3 + $0x60] sm:$0xf] %v1458
  %1523 = vst [vmem:[%s3 + $0x64] sm:$0xf] %v1459
  %1524 = vst [vmem:[%s3 + $0x68] sm:$0xf] %v1460
  %1525 = vst [vmem:[%s3 + $0x6c] sm:$0xf] %v1461
  %1526 = vst [vmem:[%s3 + $0x70] sm:$0xf] %v1462
  %1527 = vst [vmem:[%s3 + $0x74] sm:$0xf] %v1463
  %1528 = vst [vmem:[%s3 + $0x78] sm:$0xf] %v1464
  %1529 = vst [vmem:[%s3 + $0x7c] sm:$0xf] %v1465
  // Predicated region
  $region14: #{simple_view_encoder.6} parent=0 // pred_check
    _
  $region15: #{simple_view_encoder.6} parent=0 // pred_check_branch
    %1531 = sbr.rel (0) target = $region17
  $region16: #{simple_view_encoder.6} parent=0 // pred_region
    _
  $region17: #{simple_view_encoder.6} parent=0 // pred_fallthru
    _
  // Predicated region
  $region18: #{simple_view_encoder.6} parent=0 // pred_check
    _
  $region19: #{simple_view_encoder.6} parent=0 // pred_check_branch
    %1533 = sbr.rel (0) target = $region21
  $region20: #{simple_view_encoder.6} parent=0 // pred_region
    _
  $region21: #{simple_view_encoder.6} parent=0 // pred_fallthru
    _

// kernel: simple_view_encoder.7
$region0: #{simple_view_encoder.7}
  #allocation0 [shape = 'u32[]', space=smem, size = 0x4, offset = 0x4, fixed_abs, tag = 'smem constant byte address 0x4 - core index']
  #allocation1 [shape = 'u32[144,128]{1,0:T(1,128)}', space=vmem, size = 0x12000, scoped, tag = 'internal scratch']
  %s0 = inlined_call_operand.vmem [shape: bf16[64,1152], index: 0, kind: input, shape index: {}]
  %s1 = inlined_call_operand.vmem [shape: bf16[1152,256], index: 1, kind: input, shape index: {}]
  %s2 = inlined_call_operand.vmem [shape: f32[1,256], index: 2, kind: input, shape index: {}]
  %s3 = inlined_call_operand.vmem [shape: f32[16,64], index: 3, kind: input, shape index: {}]
  %s4 = inlined_call_operand.vmem [shape: f32[16,256], index: 4, kind: output, shape index: {}]
  %s5 = sld [smem:[#allocation0]]
  $region26: #{simple_view_encoder.7} parent=0
    _
  %s7 = ssub.s32 1, %s5
  %s8 = scalar_select 0, %s7, %s5
  // Predicated region
  $region2: #{simple_view_encoder.7} parent=0 // pred_check
    _
  $region3: #{simple_view_encoder.7} parent=0 // pred_check_branch
    %10 = sbr.rel (0) target = $region5
  $region4: #{simple_view_encoder.7} parent=0 // pred_region
    _
  $region5: #{simple_view_encoder.7} parent=0 // pred_fallthru
    _
  // Predicated region
  $region6: #{simple_view_encoder.7} parent=0 // pred_check
    _
  $region7: #{simple_view_encoder.7} parent=0 // pred_check_branch
    %12 = sbr.rel (0) target = $region9
  $region8: #{simple_view_encoder.7} parent=0 // pred_region
    _
  $region9: #{simple_view_encoder.7} parent=0 // pred_fallthru
    _
  // Predicated region
  $region10: #{simple_view_encoder.7} parent=0 // pred_check
    _
  $region11: #{simple_view_encoder.7} parent=0 // pred_check_branch
    %14 = sbr.rel (0) target = $region13
  $region12: #{simple_view_encoder.7} parent=0 // pred_region
    _
  $region13: #{simple_view_encoder.7} parent=0 // pred_fallthru
    _
  // Predicated region
  $region14: #{simple_view_encoder.7} parent=0 // pred_check
    _
  $region15: #{simple_view_encoder.7} parent=0 // pred_check_branch
    %16 = sbr.rel (0) target = $region17
  $region16: #{simple_view_encoder.7} parent=0 // pred_region
    _
  $region17: #{simple_view_encoder.7} parent=0 // pred_fallthru
    _
  %v18 = vld [vmem:[%s0] sm:$0xff]
  %v19 = vld [vmem:[%s0 + $0x8] sm:$0xff]
  %v20 = vld [vmem:[%s0 + $0x10] sm:$0xff]
  %v21 = vld [vmem:[%s0 + $0x18] sm:$0xff]
  %v22 = vld [vmem:[%s0 + $0x20] sm:$0xf]
  %v23 = vld [vmem:[%s0 + $0x24] sm:$0xff]
  %v24 = vld [vmem:[%s0 + $0x2c] sm:$0xff]
  %v25 = vld [vmem:[%s0 + $0x34] sm:$0xff]
  %v26 = vld [vmem:[%s0 + $0x3c] sm:$0xff]
  %v27 = vld [vmem:[%s0 + $0x44] sm:$0xf]
  %v28 = vld [vmem:[%s0 + $0x48] sm:$0xff]
  %v29 = vld [vmem:[%s0 + $0x50] sm:$0xff]
  %v30 = vld [vmem:[%s0 + $0x58] sm:$0xff]
  %v31 = vld [vmem:[%s0 + $0x60] sm:$0xff]
  %v32 = vld [vmem:[%s0 + $0x68] sm:$0xf]
  %v33 = vld [vmem:[%s0 + $0x6c] sm:$0xff]
  %v34 = vld [vmem:[%s0 + $0x74] sm:$0xff]
  %v35 = vld [vmem:[%s0 + $0x7c] sm:$0xff]
  %v36 = vld [vmem:[%s0 + $0x84] sm:$0xff]
  %v37 = vld [vmem:[%s0 + $0x8c] sm:$0xf]
  %v38 = vld [vmem:[%s0 + $0x90] sm:$0xff]
  %v39 = vld [vmem:[%s0 + $0x98] sm:$0xff]
  %v40 = vld [vmem:[%s0 + $0xa0] sm:$0xff]
  %v41 = vld [vmem:[%s0 + $0xa8] sm:$0xff]
  %v42 = vld [vmem:[%s0 + $0xb0] sm:$0xf]
  %v43 = vld [vmem:[%s0 + $0xb4] sm:$0xff]
  %v44 = vld [vmem:[%s0 + $0xbc] sm:$0xff]
  %v45 = vld [vmem:[%s0 + $0xc4] sm:$0xff]
  %v46 = vld [vmem:[%s0 + $0xcc] sm:$0xff]
  %v47 = vld [vmem:[%s0 + $0xd4] sm:$0xf]
  %v48 = vld [vmem:[%s0 + $0xd8] sm:$0xff]
  %v49 = vld [vmem:[%s0 + $0xe0] sm:$0xff]
  %v50 = vld [vmem:[%s0 + $0xe8] sm:$0xff]
  %v51 = vld [vmem:[%s0 + $0xf0] sm:$0xff]
  %v52 = vld [vmem:[%s0 + $0xf8] sm:$0xf]
  %v53 = vld [vmem:[%s0 + $0xfc] sm:$0xff]
  %v54 = vld [vmem:[%s0 + $0x104] sm:$0xff]
  %v55 = vld [vmem:[%s0 + $0x10c] sm:$0xff]
  %v56 = vld [vmem:[%s0 + $0x114] sm:$0xff]
  %v57 = vld [vmem:[%s0 + $0x11c] sm:$0xf]
  %v58 = vld [vmem:[%s1] sm:$0xff]
  %v59 = vld [vmem:[%s1 + $0x8] sm:$0xff]
  %v60 = vld [vmem:[%s1 + $0x10] sm:$0xff]
  %v61 = vld [vmem:[%s1 + $0x18] sm:$0xff]
  %v62 = vld [vmem:[%s1 + $0x20] sm:$0xff]
  %v63 = vld [vmem:[%s1 + $0x28] sm:$0xff]
  %v64 = vld [vmem:[%s1 + $0x30] sm:$0xff]
  %v65 = vld [vmem:[%s1 + $0x38] sm:$0xff]
  %v66 = vld [vmem:[%s1 + $0x40] sm:$0xff]
  %v67 = vld [vmem:[%s1 + $0x48] sm:$0xff]
  %v68 = vld [vmem:[%s1 + $0x50] sm:$0xff]
  %v69 = vld [vmem:[%s1 + $0x58] sm:$0xff]
  %v70 = vld [vmem:[%s1 + $0x60] sm:$0xff]
  %v71 = vld [vmem:[%s1 + $0x68] sm:$0xff]
  %v72 = vld [vmem:[%s1 + $0x70] sm:$0xff]
  %v73 = vld [vmem:[%s1 + $0x78] sm:$0xff]
  %v74 = vld [vmem:[%s1 + $0x80] sm:$0xff]
  %v75 = vld [vmem:[%s1 + $0x88] sm:$0xff]
  %v76 = vld [vmem:[%s1 + $0x90] sm:$0xff]
  %v77 = vld [vmem:[%s1 + $0x98] sm:$0xff]
  %v78 = vld [vmem:[%s1 + $0xa0] sm:$0xff]
  %v79 = vld [vmem:[%s1 + $0xa8] sm:$0xff]
  %v80 = vld [vmem:[%s1 + $0xb0] sm:$0xff]
  %v81 = vld [vmem:[%s1 + $0xb8] sm:$0xff]
  %v82 = vld [vmem:[%s1 + $0xc0] sm:$0xff]
  %v83 = vld [vmem:[%s1 + $0xc8] sm:$0xff]
  %v84 = vld [vmem:[%s1 + $0xd0] sm:$0xff]
  %v85 = vld [vmem:[%s1 + $0xd8] sm:$0xff]
  %v86 = vld [vmem:[%s1 + $0xe0] sm:$0xff]
  %v87 = vld [vmem:[%s1 + $0xe8] sm:$0xff]
  %v88 = vld [vmem:[%s1 + $0xf0] sm:$0xff]
  %v89 = vld [vmem:[%s1 + $0xf8] sm:$0xff]
  %v90 = vld [vmem:[%s1 + $0x100] sm:$0xff]
  %v91 = vld [vmem:[%s1 + $0x108] sm:$0xff]
  %v92 = vld [vmem:[%s1 + $0x110] sm:$0xff]
  %v93 = vld [vmem:[%s1 + $0x118] sm:$0xff]
  %v94 = vld [vmem:[%s1 + $0x120] sm:$0xff]
  %v95 = vld [vmem:[%s1 + $0x128] sm:$0xff]
  %v96 = vld [vmem:[%s1 + $0x130] sm:$0xff]
  %v97 = vld [vmem:[%s1 + $0x138] sm:$0xff]
  %v98 = vld [vmem:[%s1 + $0x140] sm:$0xff]
  %v99 = vld [vmem:[%s1 + $0x148] sm:$0xff]
  %v100 = vld [vmem:[%s1 + $0x150] sm:$0xff]
  %v101 = vld [vmem:[%s1 + $0x158] sm:$0xff]
  %v102 = vld [vmem:[%s1 + $0x160] sm:$0xff]
  %v103 = vld [vmem:[%s1 + $0x168] sm:$0xff]
  %v104 = vld [vmem:[%s1 + $0x170] sm:$0xff]
  %v105 = vld [vmem:[%s1 + $0x178] sm:$0xff]
  %v106 = vld [vmem:[%s1 + $0x180] sm:$0xff]
  %v107 = vld [vmem:[%s1 + $0x188] sm:$0xff]
  %v108 = vld [vmem:[%s1 + $0x190] sm:$0xff]
  %v109 = vld [vmem:[%s1 + $0x198] sm:$0xff]
  %v110 = vld [vmem:[%s1 + $0x1a0] sm:$0xff]
  %v111 = vld [vmem:[%s1 + $0x1a8] sm:$0xff]
  %v112 = vld [vmem:[%s1 + $0x1b0] sm:$0xff]
  %v113 = vld [vmem:[%s1 + $0x1b8] sm:$0xff]
  %v114 = vld [vmem:[%s1 + $0x1c0] sm:$0xff]
  %v115 = vld [vmem:[%s1 + $0x1c8] sm:$0xff]
  %v116 = vld [vmem:[%s1 + $0x1d0] sm:$0xff]
  %v117 = vld [vmem:[%s1 + $0x1d8] sm:$0xff]
  %v118 = vld [vmem:[%s1 + $0x1e0] sm:$0xff]
  %v119 = vld [vmem:[%s1 + $0x1e8] sm:$0xff]
  %v120 = vld [vmem:[%s1 + $0x1f0] sm:$0xff]
  %v121 = vld [vmem:[%s1 + $0x1f8] sm:$0xff]
  %v122 = vld [vmem:[%s1 + $0x200] sm:$0xff]
  %v123 = vld [vmem:[%s1 + $0x208] sm:$0xff]
  %v124 = vld [vmem:[%s1 + $0x210] sm:$0xff]
  %v125 = vld [vmem:[%s1 + $0x218] sm:$0xff]
  %v126 = vld [vmem:[%s1 + $0x220] sm:$0xff]
  %v127 = vld [vmem:[%s1 + $0x228] sm:$0xff]
  %v128 = vld [vmem:[%s1 + $0x230] sm:$0xff]
  %v129 = vld [vmem:[%s1 + $0x238] sm:$0xff]
  %v130 = vld [vmem:[%s1 + $0x240] sm:$0xff]
  %v131 = vld [vmem:[%s1 + $0x248] sm:$0xff]
  %v132 = vld [vmem:[%s1 + $0x250] sm:$0xff]
  %v133 = vld [vmem:[%s1 + $0x258] sm:$0xff]
  %v134 = vld [vmem:[%s1 + $0x260] sm:$0xff]
  %v135 = vld [vmem:[%s1 + $0x268] sm:$0xff]
  %v136 = vld [vmem:[%s1 + $0x270] sm:$0xff]
  %v137 = vld [vmem:[%s1 + $0x278] sm:$0xff]
  %v138 = vld [vmem:[%s1 + $0x280] sm:$0xff]
  %v139 = vld [vmem:[%s1 + $0x288] sm:$0xff]
  %v140 = vld [vmem:[%s1 + $0x290] sm:$0xff]
  %v141 = vld [vmem:[%s1 + $0x298] sm:$0xff]
  %v142 = vld [vmem:[%s1 + $0x2a0] sm:$0xff]
  %v143 = vld [vmem:[%s1 + $0x2a8] sm:$0xff]
  %v144 = vld [vmem:[%s1 + $0x2b0] sm:$0xff]
  %v145 = vld [vmem:[%s1 + $0x2b8] sm:$0xff]
  %v146 = vld [vmem:[%s1 + $0x2c0] sm:$0xff]
  %v147 = vld [vmem:[%s1 + $0x2c8] sm:$0xff]
  %v148 = vld [vmem:[%s1 + $0x2d0] sm:$0xff]
  %v149 = vld [vmem:[%s1 + $0x2d8] sm:$0xff]
  %v150 = vld [vmem:[%s1 + $0x2e0] sm:$0xff]
  %v151 = vld [vmem:[%s1 + $0x2e8] sm:$0xff]
  %v152 = vld [vmem:[%s1 + $0x2f0] sm:$0xff]
  %v153 = vld [vmem:[%s1 + $0x2f8] sm:$0xff]
  %v154 = vld [vmem:[%s1 + $0x300] sm:$0xff]
  %v155 = vld [vmem:[%s1 + $0x308] sm:$0xff]
  %v156 = vld [vmem:[%s1 + $0x310] sm:$0xff]
  %v157 = vld [vmem:[%s1 + $0x318] sm:$0xff]
  %v158 = vld [vmem:[%s1 + $0x320] sm:$0xff]
  %v159 = vld [vmem:[%s1 + $0x328] sm:$0xff]
  %v160 = vld [vmem:[%s1 + $0x330] sm:$0xff]
  %v161 = vld [vmem:[%s1 + $0x338] sm:$0xff]
  %v162 = vld [vmem:[%s1 + $0x340] sm:$0xff]
  %v163 = vld [vmem:[%s1 + $0x348] sm:$0xff]
  %v164 = vld [vmem:[%s1 + $0x350] sm:$0xff]
  %v165 = vld [vmem:[%s1 + $0x358] sm:$0xff]
  %v166 = vld [vmem:[%s1 + $0x360] sm:$0xff]
  %v167 = vld [vmem:[%s1 + $0x368] sm:$0xff]
  %v168 = vld [vmem:[%s1 + $0x370] sm:$0xff]
  %v169 = vld [vmem:[%s1 + $0x378] sm:$0xff]
  %v170 = vld [vmem:[%s1 + $0x380] sm:$0xff]
  %v171 = vld [vmem:[%s1 + $0x388] sm:$0xff]
  %v172 = vld [vmem:[%s1 + $0x390] sm:$0xff]
  %v173 = vld [vmem:[%s1 + $0x398] sm:$0xff]
  %v174 = vld [vmem:[%s1 + $0x3a0] sm:$0xff]
  %v175 = vld [vmem:[%s1 + $0x3a8] sm:$0xff]
  %v176 = vld [vmem:[%s1 + $0x3b0] sm:$0xff]
  %v177 = vld [vmem:[%s1 + $0x3b8] sm:$0xff]
  %v178 = vld [vmem:[%s1 + $0x3c0] sm:$0xff]
  %v179 = vld [vmem:[%s1 + $0x3c8] sm:$0xff]
  %v180 = vld [vmem:[%s1 + $0x3d0] sm:$0xff]
  %v181 = vld [vmem:[%s1 + $0x3d8] sm:$0xff]
  %v182 = vld [vmem:[%s1 + $0x3e0] sm:$0xff]
  %v183 = vld [vmem:[%s1 + $0x3e8] sm:$0xff]
  %v184 = vld [vmem:[%s1 + $0x3f0] sm:$0xff]
  %v185 = vld [vmem:[%s1 + $0x3f8] sm:$0xff]
  %v186 = vld [vmem:[%s1 + $0x400] sm:$0xff]
  %v187 = vld [vmem:[%s1 + $0x408] sm:$0xff]
  %v188 = vld [vmem:[%s1 + $0x410] sm:$0xff]
  %v189 = vld [vmem:[%s1 + $0x418] sm:$0xff]
  %v190 = vld [vmem:[%s1 + $0x420] sm:$0xff]
  %v191 = vld [vmem:[%s1 + $0x428] sm:$0xff]
  %v192 = vld [vmem:[%s1 + $0x430] sm:$0xff]
  %v193 = vld [vmem:[%s1 + $0x438] sm:$0xff]
  %v194 = vld [vmem:[%s1 + $0x440] sm:$0xff]
  %v195 = vld [vmem:[%s1 + $0x448] sm:$0xff]
  %v196 = vld [vmem:[%s1 + $0x450] sm:$0xff]
  %v197 = vld [vmem:[%s1 + $0x458] sm:$0xff]
  %v198 = vld [vmem:[%s1 + $0x460] sm:$0xff]
  %v199 = vld [vmem:[%s1 + $0x468] sm:$0xff]
  %v200 = vld [vmem:[%s1 + $0x470] sm:$0xff]
  %v201 = vld [vmem:[%s1 + $0x478] sm:$0xff]
  %v202 = vld [vmem:[%s2] sm:$0x3]
  %v204 = vlaneseq
  %v205 = vshrl.u32 %v204, 7
  %v206 = vsub.s32 0, %v205
  %v207 = vrot.slane %v202, %v206
  %v208 = vlaneseq
  %v209 = vshrl.u32 %v208, 7
  %v210 = vsub.s32 1, %v209
  %v211 = vrot.slane %v202, %v210
  %v254 = vunpack.c.l.b16 %v18
  %v255 = vunpack.c.h.b16 %v18
  %v256 = vunpack.c.l.b16 %v19
  %v257 = vunpack.c.h.b16 %v19
  %v258 = vunpack.c.l.b16 %v20
  %v259 = vunpack.c.h.b16 %v20
  %v260 = vunpack.c.l.b16 %v21
  %v261 = vunpack.c.h.b16 %v21
  %v262 = vunpack.c.l.b16 %v22
  %v263 = vunpack.c.l.b16 %v23
  %v264 = vunpack.c.h.b16 %v23
  %v265 = vunpack.c.l.b16 %v24
  %v266 = vunpack.c.h.b16 %v24
  %v267 = vunpack.c.l.b16 %v25
  %v268 = vunpack.c.h.b16 %v25
  %v269 = vunpack.c.l.b16 %v26
  %v270 = vunpack.c.h.b16 %v26
  %v271 = vunpack.c.l.b16 %v27
  %v272 = vunpack.c.l.b16 %v28
  %v273 = vunpack.c.h.b16 %v28
  %v274 = vunpack.c.l.b16 %v29
  %v275 = vunpack.c.h.b16 %v29
  %v276 = vunpack.c.l.b16 %v30
  %v277 = vunpack.c.h.b16 %v30
  %v278 = vunpack.c.l.b16 %v31
  %v279 = vunpack.c.h.b16 %v31
  %v280 = vunpack.c.l.b16 %v32
  %v281 = vunpack.c.l.b16 %v33
  %v282 = vunpack.c.h.b16 %v33
  %v283 = vunpack.c.l.b16 %v34
  %v284 = vunpack.c.h.b16 %v34
  %v285 = vunpack.c.l.b16 %v35
  %v286 = vunpack.c.h.b16 %v35
  %v287 = vunpack.c.l.b16 %v36
  %v288 = vunpack.c.h.b16 %v36
  %v289 = vunpack.c.l.b16 %v37
  %v290 = vunpack.c.l.b16 %v38
  %v291 = vunpack.c.h.b16 %v38
  %v292 = vunpack.c.l.b16 %v39
  %v293 = vunpack.c.h.b16 %v39
  %v294 = vunpack.c.l.b16 %v40
  %v295 = vunpack.c.h.b16 %v40
  %v296 = vunpack.c.l.b16 %v41
  %v297 = vunpack.c.h.b16 %v41
  %v298 = vunpack.c.l.b16 %v42
  %v299 = vunpack.c.l.b16 %v43
  %v300 = vunpack.c.h.b16 %v43
  %v301 = vunpack.c.l.b16 %v44
  %v302 = vunpack.c.h.b16 %v44
  %v303 = vunpack.c.l.b16 %v45
  %v304 = vunpack.c.h.b16 %v45
  %v305 = vunpack.c.l.b16 %v46
  %v306 = vunpack.c.h.b16 %v46
  %v307 = vunpack.c.l.b16 %v47
  %v308 = vunpack.c.l.b16 %v48
  %v309 = vunpack.c.h.b16 %v48
  %v310 = vunpack.c.l.b16 %v49
  %v311 = vunpack.c.h.b16 %v49
  %v312 = vunpack.c.l.b16 %v50
  %v313 = vunpack.c.h.b16 %v50
  %v314 = vunpack.c.l.b16 %v51
  %v315 = vunpack.c.h.b16 %v51
  %v316 = vunpack.c.l.b16 %v52
  %v317 = vunpack.c.l.b16 %v53
  %v318 = vunpack.c.h.b16 %v53
  %v319 = vunpack.c.l.b16 %v54
  %v320 = vunpack.c.h.b16 %v54
  %v321 = vunpack.c.l.b16 %v55
  %v322 = vunpack.c.h.b16 %v55
  %v323 = vunpack.c.l.b16 %v56
  %v324 = vunpack.c.h.b16 %v56
  %v325 = vunpack.c.l.b16 %v57
  %v326 = vpack.c.b16 %v263, %v254
  %v327 = vpack.c.b16 %v264, %v255
  %v328 = vpack.c.b16 %v265, %v256
  %v329 = vpack.c.b16 %v266, %v257
  %v330 = vpack.c.b16 %v267, %v258
  %v331 = vpack.c.b16 %v268, %v259
  %v332 = vpack.c.b16 %v269, %v260
  %v333 = vpack.c.b16 %v270, %v261
  %v334 = vpack.c.b16 %v271, %v262
  %v335 = vpack.c.b16 %v281, %v272
  %v336 = vpack.c.b16 %v282, %v273
  %v337 = vpack.c.b16 %v283, %v274
  %v338 = vpack.c.b16 %v284, %v275
  %v339 = vpack.c.b16 %v285, %v276
  %v340 = vpack.c.b16 %v286, %v277
  %v341 = vpack.c.b16 %v287, %v278
  %v342 = vpack.c.b16 %v288, %v279
  %v343 = vpack.c.b16 %v289, %v280
  %v344 = vpack.c.b16 %v299, %v290
  %v345 = vpack.c.b16 %v300, %v291
  %v346 = vpack.c.b16 %v301, %v292
  %v347 = vpack.c.b16 %v302, %v293
  %v348 = vpack.c.b16 %v303, %v294
  %v349 = vpack.c.b16 %v304, %v295
  %v350 = vpack.c.b16 %v305, %v296
  %v351 = vpack.c.b16 %v306, %v297
  %v352 = vpack.c.b16 %v307, %v298
  %v353 = vpack.c.b16 %v317, %v308
  %v354 = vpack.c.b16 %v318, %v309
  %v355 = vpack.c.b16 %v319, %v310
  %v356 = vpack.c.b16 %v320, %v311
  %v357 = vpack.c.b16 %v321, %v312
  %v358 = vpack.c.b16 %v322, %v313
  %v359 = vpack.c.b16 %v323, %v314
  %v360 = vpack.c.b16 %v324, %v315
  %v361 = vpack.c.b16 %v325, %v316
  %v542 = vunpack.c.l.b16 %v58
  %v543 = vunpack.c.h.b16 %v58
  %v544 = vunpack.c.l.b16 %v59
  %v545 = vunpack.c.h.b16 %v59
  %v546 = vunpack.c.l.b16 %v60
  %v547 = vunpack.c.h.b16 %v60
  %v548 = vunpack.c.l.b16 %v61
  %v549 = vunpack.c.h.b16 %v61
  %v550 = vunpack.c.l.b16 %v62
  %v551 = vunpack.c.h.b16 %v62
  %v552 = vunpack.c.l.b16 %v63
  %v553 = vunpack.c.h.b16 %v63
  %v554 = vunpack.c.l.b16 %v64
  %v555 = vunpack.c.h.b16 %v64
  %v556 = vunpack.c.l.b16 %v65
  %v557 = vunpack.c.h.b16 %v65
  %v558 = vunpack.c.l.b16 %v66
  %v559 = vunpack.c.h.b16 %v66
  %v560 = vunpack.c.l.b16 %v67
  %v561 = vunpack.c.h.b16 %v67
  %v562 = vunpack.c.l.b16 %v68
  %v563 = vunpack.c.h.b16 %v68
  %v564 = vunpack.c.l.b16 %v69
  %v565 = vunpack.c.h.b16 %v69
  %v566 = vunpack.c.l.b16 %v70
  %v567 = vunpack.c.h.b16 %v70
  %v568 = vunpack.c.l.b16 %v71
  %v569 = vunpack.c.h.b16 %v71
  %v570 = vunpack.c.l.b16 %v72
  %v571 = vunpack.c.h.b16 %v72
  %v572 = vunpack.c.l.b16 %v73
  %v573 = vunpack.c.h.b16 %v73
  %v574 = vunpack.c.l.b16 %v74
  %v575 = vunpack.c.h.b16 %v74
  %v576 = vunpack.c.l.b16 %v75
  %v577 = vunpack.c.h.b16 %v75
  %v578 = vunpack.c.l.b16 %v76
  %v579 = vunpack.c.h.b16 %v76
  %v580 = vunpack.c.l.b16 %v77
  %v581 = vunpack.c.h.b16 %v77
  %v582 = vunpack.c.l.b16 %v78
  %v583 = vunpack.c.h.b16 %v78
  %v584 = vunpack.c.l.b16 %v79
  %v585 = vunpack.c.h.b16 %v79
  %v586 = vunpack.c.l.b16 %v80
  %v587 = vunpack.c.h.b16 %v80
  %v588 = vunpack.c.l.b16 %v81
  %v589 = vunpack.c.h.b16 %v81
  %v590 = vunpack.c.l.b16 %v82
  %v591 = vunpack.c.h.b16 %v82
  %v592 = vunpack.c.l.b16 %v83
  %v593 = vunpack.c.h.b16 %v83
  %v594 = vunpack.c.l.b16 %v84
  %v595 = vunpack.c.h.b16 %v84
  %v596 = vunpack.c.l.b16 %v85
  %v597 = vunpack.c.h.b16 %v85
  %v598 = vunpack.c.l.b16 %v86
  %v599 = vunpack.c.h.b16 %v86
  %v600 = vunpack.c.l.b16 %v87
  %v601 = vunpack.c.h.b16 %v87
  %v602 = vunpack.c.l.b16 %v88
  %v603 = vunpack.c.h.b16 %v88
  %v604 = vunpack.c.l.b16 %v89
  %v605 = vunpack.c.h.b16 %v89
  %v606 = vunpack.c.l.b16 %v90
  %v607 = vunpack.c.h.b16 %v90
  %v608 = vunpack.c.l.b16 %v91
  %v609 = vunpack.c.h.b16 %v91
  %v610 = vunpack.c.l.b16 %v92
  %v611 = vunpack.c.h.b16 %v92
  %v612 = vunpack.c.l.b16 %v93
  %v613 = vunpack.c.h.b16 %v93
  %v614 = vunpack.c.l.b16 %v94
  %v615 = vunpack.c.h.b16 %v94
  %v616 = vunpack.c.l.b16 %v95
  %v617 = vunpack.c.h.b16 %v95
  %v618 = vunpack.c.l.b16 %v96
  %v619 = vunpack.c.h.b16 %v96
  %v620 = vunpack.c.l.b16 %v97
  %v621 = vunpack.c.h.b16 %v97
  %v622 = vunpack.c.l.b16 %v98
  %v623 = vunpack.c.h.b16 %v98
  %v624 = vunpack.c.l.b16 %v99
  %v625 = vunpack.c.h.b16 %v99
  %v626 = vunpack.c.l.b16 %v100
  %v627 = vunpack.c.h.b16 %v100
  %v628 = vunpack.c.l.b16 %v101
  %v629 = vunpack.c.h.b16 %v101
  %v630 = vunpack.c.l.b16 %v102
  %v631 = vunpack.c.h.b16 %v102
  %v632 = vunpack.c.l.b16 %v103
  %v633 = vunpack.c.h.b16 %v103
  %v634 = vunpack.c.l.b16 %v104
  %v635 = vunpack.c.h.b16 %v104
  %v636 = vunpack.c.l.b16 %v105
  %v637 = vunpack.c.h.b16 %v105
  %v638 = vunpack.c.l.b16 %v106
  %v639 = vunpack.c.h.b16 %v106
  %v640 = vunpack.c.l.b16 %v107
  %v641 = vunpack.c.h.b16 %v107
  %v642 = vunpack.c.l.b16 %v108
  %v643 = vunpack.c.h.b16 %v108
  %v644 = vunpack.c.l.b16 %v109
  %v645 = vunpack.c.h.b16 %v109
  %v646 = vunpack.c.l.b16 %v110
  %v647 = vunpack.c.h.b16 %v110
  %v648 = vunpack.c.l.b16 %v111
  %v649 = vunpack.c.h.b16 %v111
  %v650 = vunpack.c.l.b16 %v112
  %v651 = vunpack.c.h.b16 %v112
  %v652 = vunpack.c.l.b16 %v113
  %v653 = vunpack.c.h.b16 %v113
  %v654 = vunpack.c.l.b16 %v114
  %v655 = vunpack.c.h.b16 %v114
  %v656 = vunpack.c.l.b16 %v115
  %v657 = vunpack.c.h.b16 %v115
  %v658 = vunpack.c.l.b16 %v116
  %v659 = vunpack.c.h.b16 %v116
  %v660 = vunpack.c.l.b16 %v117
  %v661 = vunpack.c.h.b16 %v117
  %v662 = vunpack.c.l.b16 %v118
  %v663 = vunpack.c.h.b16 %v118
  %v664 = vunpack.c.l.b16 %v119
  %v665 = vunpack.c.h.b16 %v119
  %v666 = vunpack.c.l.b16 %v120
  %v667 = vunpack.c.h.b16 %v120
  %v668 = vunpack.c.l.b16 %v121
  %v669 = vunpack.c.h.b16 %v121
  %v670 = vunpack.c.l.b16 %v122
  %v671 = vunpack.c.h.b16 %v122
  %v672 = vunpack.c.l.b16 %v123
  %v673 = vunpack.c.h.b16 %v123
  %v674 = vunpack.c.l.b16 %v124
  %v675 = vunpack.c.h.b16 %v124
  %v676 = vunpack.c.l.b16 %v125
  %v677 = vunpack.c.h.b16 %v125
  %v678 = vunpack.c.l.b16 %v126
  %v679 = vunpack.c.h.b16 %v126
  %v680 = vunpack.c.l.b16 %v127
  %v681 = vunpack.c.h.b16 %v127
  %v682 = vunpack.c.l.b16 %v128
  %v683 = vunpack.c.h.b16 %v128
  %v684 = vunpack.c.l.b16 %v129
  %v685 = vunpack.c.h.b16 %v129
  %v686 = vunpack.c.l.b16 %v130
  %v687 = vunpack.c.h.b16 %v130
  %v688 = vunpack.c.l.b16 %v131
  %v689 = vunpack.c.h.b16 %v131
  %v690 = vunpack.c.l.b16 %v132
  %v691 = vunpack.c.h.b16 %v132
  %v692 = vunpack.c.l.b16 %v133
  %v693 = vunpack.c.h.b16 %v133
  %v694 = vunpack.c.l.b16 %v134
  %v695 = vunpack.c.h.b16 %v134
  %v696 = vunpack.c.l.b16 %v135
  %v697 = vunpack.c.h.b16 %v135
  %v698 = vunpack.c.l.b16 %v136
  %v699 = vunpack.c.h.b16 %v136
  %v700 = vunpack.c.l.b16 %v137
  %v701 = vunpack.c.h.b16 %v137
  %v702 = vunpack.c.l.b16 %v138
  %v703 = vunpack.c.h.b16 %v138
  %v704 = vunpack.c.l.b16 %v139
  %v705 = vunpack.c.h.b16 %v139
  %v706 = vunpack.c.l.b16 %v140
  %v707 = vunpack.c.h.b16 %v140
  %v708 = vunpack.c.l.b16 %v141
  %v709 = vunpack.c.h.b16 %v141
  %v710 = vunpack.c.l.b16 %v142
  %v711 = vunpack.c.h.b16 %v142
  %v712 = vunpack.c.l.b16 %v143
  %v713 = vunpack.c.h.b16 %v143
  %v714 = vunpack.c.l.b16 %v144
  %v715 = vunpack.c.h.b16 %v144
  %v716 = vunpack.c.l.b16 %v145
  %v717 = vunpack.c.h.b16 %v145
  %v718 = vunpack.c.l.b16 %v146
  %v719 = vunpack.c.h.b16 %v146
  %v720 = vunpack.c.l.b16 %v147
  %v721 = vunpack.c.h.b16 %v147
  %v722 = vunpack.c.l.b16 %v148
  %v723 = vunpack.c.h.b16 %v148
  %v724 = vunpack.c.l.b16 %v149
  %v725 = vunpack.c.h.b16 %v149
  %v726 = vunpack.c.l.b16 %v150
  %v727 = vunpack.c.h.b16 %v150
  %v728 = vunpack.c.l.b16 %v151
  %v729 = vunpack.c.h.b16 %v151
  %v730 = vunpack.c.l.b16 %v152
  %v731 = vunpack.c.h.b16 %v152
  %v732 = vunpack.c.l.b16 %v153
  %v733 = vunpack.c.h.b16 %v153
  %v734 = vunpack.c.l.b16 %v154
  %v735 = vunpack.c.h.b16 %v154
  %v736 = vunpack.c.l.b16 %v155
  %v737 = vunpack.c.h.b16 %v155
  %v738 = vunpack.c.l.b16 %v156
  %v739 = vunpack.c.h.b16 %v156
  %v740 = vunpack.c.l.b16 %v157
  %v741 = vunpack.c.h.b16 %v157
  %v742 = vunpack.c.l.b16 %v158
  %v743 = vunpack.c.h.b16 %v158
  %v744 = vunpack.c.l.b16 %v159
  %v745 = vunpack.c.h.b16 %v159
  %v746 = vunpack.c.l.b16 %v160
  %v747 = vunpack.c.h.b16 %v160
  %v748 = vunpack.c.l.b16 %v161
  %v749 = vunpack.c.h.b16 %v161
  %v750 = vunpack.c.l.b16 %v162
  %v751 = vunpack.c.h.b16 %v162
  %v752 = vunpack.c.l.b16 %v163
  %v753 = vunpack.c.h.b16 %v163
  %v754 = vunpack.c.l.b16 %v164
  %v755 = vunpack.c.h.b16 %v164
  %v756 = vunpack.c.l.b16 %v165
  %v757 = vunpack.c.h.b16 %v165
  %v758 = vunpack.c.l.b16 %v166
  %v759 = vunpack.c.h.b16 %v166
  %v760 = vunpack.c.l.b16 %v167
  %v761 = vunpack.c.h.b16 %v167
  %v762 = vunpack.c.l.b16 %v168
  %v763 = vunpack.c.h.b16 %v168
  %v764 = vunpack.c.l.b16 %v169
  %v765 = vunpack.c.h.b16 %v169
  %v766 = vunpack.c.l.b16 %v170
  %v767 = vunpack.c.h.b16 %v170
  %v768 = vunpack.c.l.b16 %v171
  %v769 = vunpack.c.h.b16 %v171
  %v770 = vunpack.c.l.b16 %v172
  %v771 = vunpack.c.h.b16 %v172
  %v772 = vunpack.c.l.b16 %v173
  %v773 = vunpack.c.h.b16 %v173
  %v774 = vunpack.c.l.b16 %v174
  %v775 = vunpack.c.h.b16 %v174
  %v776 = vunpack.c.l.b16 %v175
  %v777 = vunpack.c.h.b16 %v175
  %v778 = vunpack.c.l.b16 %v176
  %v779 = vunpack.c.h.b16 %v176
  %v780 = vunpack.c.l.b16 %v177
  %v781 = vunpack.c.h.b16 %v177
  %v782 = vunpack.c.l.b16 %v178
  %v783 = vunpack.c.h.b16 %v178
  %v784 = vunpack.c.l.b16 %v179
  %v785 = vunpack.c.h.b16 %v179
  %v786 = vunpack.c.l.b16 %v180
  %v787 = vunpack.c.h.b16 %v180
  %v788 = vunpack.c.l.b16 %v181
  %v789 = vunpack.c.h.b16 %v181
  %v790 = vunpack.c.l.b16 %v182
  %v791 = vunpack.c.h.b16 %v182
  %v792 = vunpack.c.l.b16 %v183
  %v793 = vunpack.c.h.b16 %v183
  %v794 = vunpack.c.l.b16 %v184
  %v795 = vunpack.c.h.b16 %v184
  %v796 = vunpack.c.l.b16 %v185
  %v797 = vunpack.c.h.b16 %v185
  %v798 = vunpack.c.l.b16 %v186
  %v799 = vunpack.c.h.b16 %v186
  %v800 = vunpack.c.l.b16 %v187
  %v801 = vunpack.c.h.b16 %v187
  %v802 = vunpack.c.l.b16 %v188
  %v803 = vunpack.c.h.b16 %v188
  %v804 = vunpack.c.l.b16 %v189
  %v805 = vunpack.c.h.b16 %v189
  %v806 = vunpack.c.l.b16 %v190
  %v807 = vunpack.c.h.b16 %v190
  %v808 = vunpack.c.l.b16 %v191
  %v809 = vunpack.c.h.b16 %v191
  %v810 = vunpack.c.l.b16 %v192
  %v811 = vunpack.c.h.b16 %v192
  %v812 = vunpack.c.l.b16 %v193
  %v813 = vunpack.c.h.b16 %v193
  %v814 = vunpack.c.l.b16 %v194
  %v815 = vunpack.c.h.b16 %v194
  %v816 = vunpack.c.l.b16 %v195
  %v817 = vunpack.c.h.b16 %v195
  %v818 = vunpack.c.l.b16 %v196
  %v819 = vunpack.c.h.b16 %v196
  %v820 = vunpack.c.l.b16 %v197
  %v821 = vunpack.c.h.b16 %v197
  %v822 = vunpack.c.l.b16 %v198
  %v823 = vunpack.c.h.b16 %v198
  %v824 = vunpack.c.l.b16 %v199
  %v825 = vunpack.c.h.b16 %v199
  %v826 = vunpack.c.l.b16 %v200
  %v827 = vunpack.c.h.b16 %v200
  %v828 = vunpack.c.l.b16 %v201
  %v829 = vunpack.c.h.b16 %v201
  %v830 = vpack.c.b16 %v544, %v542
  %v831 = vpack.c.b16 %v545, %v543
  %v832 = vpack.c.b16 %v548, %v546
  %v833 = vpack.c.b16 %v549, %v547
  %v834 = vpack.c.b16 %v552, %v550
  %v835 = vpack.c.b16 %v553, %v551
  %v836 = vpack.c.b16 %v556, %v554
  %v837 = vpack.c.b16 %v557, %v555
  %v838 = vpack.c.b16 %v560, %v558
  %v839 = vpack.c.b16 %v561, %v559
  %v840 = vpack.c.b16 %v564, %v562
  %v841 = vpack.c.b16 %v565, %v563
  %v842 = vpack.c.b16 %v568, %v566
  %v843 = vpack.c.b16 %v569, %v567
  %v844 = vpack.c.b16 %v572, %v570
  %v845 = vpack.c.b16 %v573, %v571
  %v846 = vpack.c.b16 %v576, %v574
  %v847 = vpack.c.b16 %v577, %v575
  %v848 = vpack.c.b16 %v580, %v578
  %v849 = vpack.c.b16 %v581, %v579
  %v850 = vpack.c.b16 %v584, %v582
  %v851 = vpack.c.b16 %v585, %v583
  %v852 = vpack.c.b16 %v588, %v586
  %v853 = vpack.c.b16 %v589, %v587
  %v854 = vpack.c.b16 %v592, %v590
  %v855 = vpack.c.b16 %v593, %v591
  %v856 = vpack.c.b16 %v596, %v594
  %v857 = vpack.c.b16 %v597, %v595
  %v858 = vpack.c.b16 %v600, %v598
  %v859 = vpack.c.b16 %v601, %v599
  %v860 = vpack.c.b16 %v604, %v602
  %v861 = vpack.c.b16 %v605, %v603
  %v862 = vpack.c.b16 %v608, %v606
  %v863 = vpack.c.b16 %v609, %v607
  %v864 = vpack.c.b16 %v612, %v610
  %v865 = vpack.c.b16 %v613, %v611
  %v866 = vpack.c.b16 %v616, %v614
  %v867 = vpack.c.b16 %v617, %v615
  %v868 = vpack.c.b16 %v620, %v618
  %v869 = vpack.c.b16 %v621, %v619
  %v870 = vpack.c.b16 %v624, %v622
  %v871 = vpack.c.b16 %v625, %v623
  %v872 = vpack.c.b16 %v628, %v626
  %v873 = vpack.c.b16 %v629, %v627
  %v874 = vpack.c.b16 %v632, %v630
  %v875 = vpack.c.b16 %v633, %v631
  %v876 = vpack.c.b16 %v636, %v634
  %v877 = vpack.c.b16 %v637, %v635
  %v878 = vpack.c.b16 %v640, %v638
  %v879 = vpack.c.b16 %v641, %v639
  %v880 = vpack.c.b16 %v644, %v642
  %v881 = vpack.c.b16 %v645, %v643
  %v882 = vpack.c.b16 %v648, %v646
  %v883 = vpack.c.b16 %v649, %v647
  %v884 = vpack.c.b16 %v652, %v650
  %v885 = vpack.c.b16 %v653, %v651
  %v886 = vpack.c.b16 %v656, %v654
  %v887 = vpack.c.b16 %v657, %v655
  %v888 = vpack.c.b16 %v660, %v658
  %v889 = vpack.c.b16 %v661, %v659
  %v890 = vpack.c.b16 %v664, %v662
  %v891 = vpack.c.b16 %v665, %v663
  %v892 = vpack.c.b16 %v668, %v666
  %v893 = vpack.c.b16 %v669, %v667
  %v894 = vpack.c.b16 %v672, %v670
  %v895 = vpack.c.b16 %v673, %v671
  %v896 = vpack.c.b16 %v676, %v674
  %v897 = vpack.c.b16 %v677, %v675
  %v898 = vpack.c.b16 %v680, %v678
  %v899 = vpack.c.b16 %v681, %v679
  %v900 = vpack.c.b16 %v684, %v682
  %v901 = vpack.c.b16 %v685, %v683
  %v902 = vpack.c.b16 %v688, %v686
  %v903 = vpack.c.b16 %v689, %v687
  %v904 = vpack.c.b16 %v692, %v690
  %v905 = vpack.c.b16 %v693, %v691
  %v906 = vpack.c.b16 %v696, %v694
  %v907 = vpack.c.b16 %v697, %v695
  %v908 = vpack.c.b16 %v700, %v698
  %v909 = vpack.c.b16 %v701, %v699
  %v910 = vpack.c.b16 %v704, %v702
  %v911 = vpack.c.b16 %v705, %v703
  %v912 = vpack.c.b16 %v708, %v706
  %v913 = vpack.c.b16 %v709, %v707
  %v914 = vpack.c.b16 %v712, %v710
  %v915 = vpack.c.b16 %v713, %v711
  %v916 = vpack.c.b16 %v716, %v714
  %v917 = vpack.c.b16 %v717, %v715
  %v918 = vpack.c.b16 %v720, %v718
  %v919 = vpack.c.b16 %v721, %v719
  %v920 = vpack.c.b16 %v724, %v722
  %v921 = vpack.c.b16 %v725, %v723
  %v922 = vpack.c.b16 %v728, %v726
  %v923 = vpack.c.b16 %v729, %v727
  %v924 = vpack.c.b16 %v732, %v730
  %v925 = vpack.c.b16 %v733, %v731
  %v926 = vpack.c.b16 %v736, %v734
  %v927 = vpack.c.b16 %v737, %v735
  %v928 = vpack.c.b16 %v740, %v738
  %v929 = vpack.c.b16 %v741, %v739
  %v930 = vpack.c.b16 %v744, %v742
  %v931 = vpack.c.b16 %v745, %v743
  %v932 = vpack.c.b16 %v748, %v746
  %v933 = vpack.c.b16 %v749, %v747
  %v934 = vpack.c.b16 %v752, %v750
  %v935 = vpack.c.b16 %v753, %v751
  %v936 = vpack.c.b16 %v756, %v754
  %v937 = vpack.c.b16 %v757, %v755
  %v938 = vpack.c.b16 %v760, %v758
  %v939 = vpack.c.b16 %v761, %v759
  %v940 = vpack.c.b16 %v764, %v762
  %v941 = vpack.c.b16 %v765, %v763
  %v942 = vpack.c.b16 %v768, %v766
  %v943 = vpack.c.b16 %v769, %v767
  %v944 = vpack.c.b16 %v772, %v770
  %v945 = vpack.c.b16 %v773, %v771
  %v946 = vpack.c.b16 %v776, %v774
  %v947 = vpack.c.b16 %v777, %v775
  %v948 = vpack.c.b16 %v780, %v778
  %v949 = vpack.c.b16 %v781, %v779
  %v950 = vpack.c.b16 %v784, %v782
  %v951 = vpack.c.b16 %v785, %v783
  %v952 = vpack.c.b16 %v788, %v786
  %v953 = vpack.c.b16 %v789, %v787
  %v954 = vpack.c.b16 %v792, %v790
  %v955 = vpack.c.b16 %v793, %v791
  %v956 = vpack.c.b16 %v796, %v794
  %v957 = vpack.c.b16 %v797, %v795
  %v958 = vpack.c.b16 %v800, %v798
  %v959 = vpack.c.b16 %v801, %v799
  %v960 = vpack.c.b16 %v804, %v802
  %v961 = vpack.c.b16 %v805, %v803
  %v962 = vpack.c.b16 %v808, %v806
  %v963 = vpack.c.b16 %v809, %v807
  %v964 = vpack.c.b16 %v812, %v810
  %v965 = vpack.c.b16 %v813, %v811
  %v966 = vpack.c.b16 %v816, %v814
  %v967 = vpack.c.b16 %v817, %v815
  %v968 = vpack.c.b16 %v820, %v818
  %v969 = vpack.c.b16 %v821, %v819
  %v970 = vpack.c.b16 %v824, %v822
  %v971 = vpack.c.b16 %v825, %v823
  %v972 = vpack.c.b16 %v828, %v826
  %v973 = vpack.c.b16 %v829, %v827
  %1118 = vmatprep.subr.bf16.mxu0 %v845
  %1119 = vmatpush1.bf16.msra.mxu0 %v844
  %1120 = vmatprep.subr.bf16.mxu0 %v843
  %1121 = vmatpush1.bf16.msra.mxu0 %v842
  %1122 = vmatprep.subr.bf16.mxu0 %v841
  %1123 = vmatpush1.bf16.msra.mxu0 %v840
  %1124 = vmatprep.subr.bf16.mxu0 %v839
  %1125 = vmatpush1.bf16.msra.mxu0 %v838
  %1126 = vmatprep.subr.bf16.mxu0 %v837
  %1127 = vmatpush1.bf16.msra.mxu0 %v836
  %1128 = vmatprep.subr.bf16.mxu0 %v835
  %1129 = vmatpush1.bf16.msra.mxu0 %v834
  %1130 = vmatprep.subr.bf16.mxu0 %v833
  %1131 = vmatpush1.bf16.msra.mxu0 %v832
  %1132 = vmatprep.subr.bf16.mxu0 %v831
  %1133 = vmatpush1.bf16.msra.mxu0 %v830
  %1134 = vmatprep.subr.bf16.mxu0 %v861
  %1135 = vmatpush2.bf16.msra.mxu0 %v860
  %1136 = vmatprep.subr.bf16.mxu0 %v859
  %1137 = vmatpush2.bf16.msra.mxu0 %v858
  %1138 = vmatprep.subr.bf16.mxu0 %v857
  %1139 = vmatpush2.bf16.msra.mxu0 %v856
  %1140 = vmatprep.subr.bf16.mxu0 %v855
  %1141 = vmatpush2.bf16.msra.mxu0 %v854
  %1142 = vmatprep.subr.bf16.mxu0 %v853
  %1143 = vmatpush2.bf16.msra.mxu0 %v852
  %1144 = vmatprep.subr.bf16.mxu0 %v851
  %1145 = vmatpush2.bf16.msra.mxu0 %v850
  %1146 = vmatprep.subr.bf16.mxu0 %v849
  %1147 = vmatpush2.bf16.msra.mxu0 %v848
  %1148 = vmatprep.subr.bf16.mxu0 %v847
  %1149 = vmatpush2.bf16.msra.mxu0 %v846
  %1150 = vmatprep.mubr.bf16.mxu0 %v327
  %1151 = vmatmul.mubr.bf16.gmra.mxu0 %v326
  %v1152 = vpop.f32.mrf.mxu0
  %v1153 = vadd.f32 %v207, %v1152
  %v1154 = vpop.f32.mrf.mxu0
  %v1155 = vadd.f32 %v211, %v1154
  %v1156 = vpop.f32.mrf.mxu0
  %v1157 = vadd.f32 %v207, %v1156
  %v1158 = vpop.f32.mrf.mxu0
  %v1159 = vadd.f32 %v211, %v1158
  %1160 = vmatprep.mubr.bf16.mxu0 %v336
  %1161 = vmatmul.mubr.bf16.gmra.mxu0 %v335
  %v1162 = vpop.f32.mrf.mxu0
  %v1163 = vadd.f32 %v207, %v1162
  %v1164 = vpop.f32.mrf.mxu0
  %v1165 = vadd.f32 %v211, %v1164
  %v1166 = vpop.f32.mrf.mxu0
  %v1167 = vadd.f32 %v207, %v1166
  %v1168 = vpop.f32.mrf.mxu0
  %v1169 = vadd.f32 %v211, %v1168
  %1170 = vmatprep.mubr.bf16.mxu0 %v345
  %1171 = vmatmul.mubr.bf16.gmra.mxu0 %v344
  %v1172 = vpop.f32.mrf.mxu0
  %v1173 = vadd.f32 %v207, %v1172
  %v1174 = vpop.f32.mrf.mxu0
  %v1175 = vadd.f32 %v211, %v1174
  %v1176 = vpop.f32.mrf.mxu0
  %v1177 = vadd.f32 %v207, %v1176
  %v1178 = vpop.f32.mrf.mxu0
  %v1179 = vadd.f32 %v211, %v1178
  %1180 = vmatprep.mubr.bf16.mxu0 %v354
  %1181 = vmatmul.mubr.bf16.gmra.mxu0 %v353
  %v1182 = vpop.f32.mrf.mxu0
  %v1183 = vadd.f32 %v207, %v1182
  %v1184 = vpop.f32.mrf.mxu0
  %v1185 = vadd.f32 %v211, %v1184
  %v1186 = vpop.f32.mrf.mxu0
  %v1187 = vadd.f32 %v207, %v1186
  %v1188 = vpop.f32.mrf.mxu0
  %v1189 = vadd.f32 %v211, %v1188
  %1190 = vdwg.mxu0
  %1191 = vmatprep.subr.bf16.mxu0 %v877
  %1192 = vmatpush1.bf16.msra.mxu0 %v876
  %1193 = vmatprep.subr.bf16.mxu0 %v875
  %1194 = vmatpush1.bf16.msra.mxu0 %v874
  %1195 = vmatprep.subr.bf16.mxu0 %v873
  %1196 = vmatpush1.bf16.msra.mxu0 %v872
  %1197 = vmatprep.subr.bf16.mxu0 %v871
  %1198 = vmatpush1.bf16.msra.mxu0 %v870
  %1199 = vmatprep.subr.bf16.mxu0 %v869
  %1200 = vmatpush1.bf16.msra.mxu0 %v868
  %1201 = vmatprep.subr.bf16.mxu0 %v867
  %1202 = vmatpush1.bf16.msra.mxu0 %v866
  %1203 = vmatprep.subr.bf16.mxu0 %v865
  %1204 = vmatpush1.bf16.msra.mxu0 %v864
  %1205 = vmatprep.subr.bf16.mxu0 %v863
  %1206 = vmatpush1.bf16.msra.mxu0 %v862
  %1207 = vmatprep.subr.bf16.mxu0 %v893
  %1208 = vmatpush2.bf16.msra.mxu0 %v892
  %1209 = vmatprep.subr.bf16.mxu0 %v891
  %1210 = vmatpush2.bf16.msra.mxu0 %v890
  %1211 = vmatprep.subr.bf16.mxu0 %v889
  %1212 = vmatpush2.bf16.msra.mxu0 %v888
  %1213 = vmatprep.subr.bf16.mxu0 %v887
  %1214 = vmatpush2.bf16.msra.mxu0 %v886
  %1215 = vmatprep.subr.bf16.mxu0 %v885
  %1216 = vmatpush2.bf16.msra.mxu0 %v884
  %1217 = vmatprep.subr.bf16.mxu0 %v883
  %1218 = vmatpush2.bf16.msra.mxu0 %v882
  %1219 = vmatprep.subr.bf16.mxu0 %v881
  %1220 = vmatpush2.bf16.msra.mxu0 %v880
  %1221 = vmatprep.subr.bf16.mxu0 %v879
  %1222 = vmatpush2.bf16.msra.mxu0 %v878
  %1223 = vmatprep.mubr.bf16.mxu0 %v329
  %1224 = vmatmul.mubr.bf16.gmra.mxu0 %v328
  %v1225 = vpop.f32.mrf.mxu0
  %v1226 = vadd.f32 %v1153, %v1225
  %v1227 = vpop.f32.mrf.mxu0
  %v1228 = vadd.f32 %v1155, %v1227
  %v1229 = vpop.f32.mrf.mxu0
  %v1230 = vadd.f32 %v1157, %v1229
  %v1231 = vpop.f32.mrf.mxu0
  %v1232 = vadd.f32 %v1159, %v1231
  %1233 = vmatprep.mubr.bf16.mxu0 %v338
  %1234 = vmatmul.mubr.bf16.gmra.mxu0 %v337
  %v1235 = vpop.f32.mrf.mxu0
  %v1236 = vadd.f32 %v1163, %v1235
  %v1237 = vpop.f32.mrf.mxu0
  %v1238 = vadd.f32 %v1165, %v1237
  %v1239 = vpop.f32.mrf.mxu0
  %v1240 = vadd.f32 %v1167, %v1239
  %v1241 = vpop.f32.mrf.mxu0
  %v1242 = vadd.f32 %v1169, %v1241
  %1243 = vmatprep.mubr.bf16.mxu0 %v347
  %1244 = vmatmul.mubr.bf16.gmra.mxu0 %v346
  %v1245 = vpop.f32.mrf.mxu0
  %v1246 = vadd.f32 %v1173, %v1245
  %v1247 = vpop.f32.mrf.mxu0
  %v1248 = vadd.f32 %v1175, %v1247
  %v1249 = vpop.f32.mrf.mxu0
  %v1250 = vadd.f32 %v1177, %v1249
  %v1251 = vpop.f32.mrf.mxu0
  %v1252 = vadd.f32 %v1179, %v1251
  %1253 = vmatprep.mubr.bf16.mxu0 %v356
  %1254 = vmatmul.mubr.bf16.gmra.mxu0 %v355
  %v1255 = vpop.f32.mrf.mxu0
  %v1256 = vadd.f32 %v1183, %v1255
  %v1257 = vpop.f32.mrf.mxu0
  %v1258 = vadd.f32 %v1185, %v1257
  %v1259 = vpop.f32.mrf.mxu0
  %v1260 = vadd.f32 %v1187, %v1259
  %v1261 = vpop.f32.mrf.mxu0
  %v1262 = vadd.f32 %v1189, %v1261
  %1263 = vdwg.mxu0
  %1264 = vmatprep.subr.bf16.mxu0 %v909
  %1265 = vmatpush1.bf16.msra.mxu0 %v908
  %1266 = vmatprep.subr.bf16.mxu0 %v907
  %1267 = vmatpush1.bf16.msra.mxu0 %v906
  %1268 = vmatprep.subr.bf16.mxu0 %v905
  %1269 = vmatpush1.bf16.msra.mxu0 %v904
  %1270 = vmatprep.subr.bf16.mxu0 %v903
  %1271 = vmatpush1.bf16.msra.mxu0 %v902
  %1272 = vmatprep.subr.bf16.mxu0 %v901
  %1273 = vmatpush1.bf16.msra.mxu0 %v900
  %1274 = vmatprep.subr.bf16.mxu0 %v899
  %1275 = vmatpush1.bf16.msra.mxu0 %v898
  %1276 = vmatprep.subr.bf16.mxu0 %v897
  %1277 = vmatpush1.bf16.msra.mxu0 %v896
  %1278 = vmatprep.subr.bf16.mxu0 %v895
  %1279 = vmatpush1.bf16.msra.mxu0 %v894
  %1280 = vmatprep.subr.bf16.mxu0 %v925
  %1281 = vmatpush2.bf16.msra.mxu0 %v924
  %1282 = vmatprep.subr.bf16.mxu0 %v923
  %1283 = vmatpush2.bf16.msra.mxu0 %v922
  %1284 = vmatprep.subr.bf16.mxu0 %v921
  %1285 = vmatpush2.bf16.msra.mxu0 %v920
  %1286 = vmatprep.subr.bf16.mxu0 %v919
  %1287 = vmatpush2.bf16.msra.mxu0 %v918
  %1288 = vmatprep.subr.bf16.mxu0 %v917
  %1289 = vmatpush2.bf16.msra.mxu0 %v916
  %1290 = vmatprep.subr.bf16.mxu0 %v915
  %1291 = vmatpush2.bf16.msra.mxu0 %v914
  %1292 = vmatprep.subr.bf16.mxu0 %v913
  %1293 = vmatpush2.bf16.msra.mxu0 %v912
  %1294 = vmatprep.subr.bf16.mxu0 %v911
  %1295 = vmatpush2.bf16.msra.mxu0 %v910
  %1296 = vmatprep.mubr.bf16.mxu0 %v331
  %1297 = vmatmul.mubr.bf16.gmra.mxu0 %v330
  %v1298 = vpop.f32.mrf.mxu0
  %v1299 = vadd.f32 %v1226, %v1298
  %v1300 = vpop.f32.mrf.mxu0
  %v1301 = vadd.f32 %v1228, %v1300
  %v1302 = vpop.f32.mrf.mxu0
  %v1303 = vadd.f32 %v1230, %v1302
  %v1304 = vpop.f32.mrf.mxu0
  %v1305 = vadd.f32 %v1232, %v1304
  %1306 = vmatprep.mubr.bf16.mxu0 %v340
  %1307 = vmatmul.mubr.bf16.gmra.mxu0 %v339
  %v1308 = vpop.f32.mrf.mxu0
  %v1309 = vadd.f32 %v1236, %v1308
  %v1310 = vpop.f32.mrf.mxu0
  %v1311 = vadd.f32 %v1238, %v1310
  %v1312 = vpop.f32.mrf.mxu0
  %v1313 = vadd.f32 %v1240, %v1312
  %v1314 = vpop.f32.mrf.mxu0
  %v1315 = vadd.f32 %v1242, %v1314
  %1316 = vmatprep.mubr.bf16.mxu0 %v349
  %1317 = vmatmul.mubr.bf16.gmra.mxu0 %v348
  %v1318 = vpop.f32.mrf.mxu0
  %v1319 = vadd.f32 %v1246, %v1318
  %v1320 = vpop.f32.mrf.mxu0
  %v1321 = vadd.f32 %v1248, %v1320
  %v1322 = vpop.f32.mrf.mxu0
  %v1323 = vadd.f32 %v1250, %v1322
  %v1324 = vpop.f32.mrf.mxu0
  %v1325 = vadd.f32 %v1252, %v1324
  %1326 = vmatprep.mubr.bf16.mxu0 %v358
  %1327 = vmatmul.mubr.bf16.gmra.mxu0 %v357
  %v1328 = vpop.f32.mrf.mxu0
  %v1329 = vadd.f32 %v1256, %v1328
  %v1330 = vpop.f32.mrf.mxu0
  %v1331 = vadd.f32 %v1258, %v1330
  %v1332 = vpop.f32.mrf.mxu0
  %v1333 = vadd.f32 %v1260, %v1332
  %v1334 = vpop.f32.mrf.mxu0
  %v1335 = vadd.f32 %v1262, %v1334
  %1336 = vdwg.mxu0
  %1337 = vmatprep.subr.bf16.mxu0 %v941
  %1338 = vmatpush1.bf16.msra.mxu0 %v940
  %1339 = vmatprep.subr.bf16.mxu0 %v939
  %1340 = vmatpush1.bf16.msra.mxu0 %v938
  %1341 = vmatprep.subr.bf16.mxu0 %v937
  %1342 = vmatpush1.bf16.msra.mxu0 %v936
  %1343 = vmatprep.subr.bf16.mxu0 %v935
  %1344 = vmatpush1.bf16.msra.mxu0 %v934
  %1345 = vmatprep.subr.bf16.mxu0 %v933
  %1346 = vmatpush1.bf16.msra.mxu0 %v932
  %1347 = vmatprep.subr.bf16.mxu0 %v931
  %1348 = vmatpush1.bf16.msra.mxu0 %v930
  %1349 = vmatprep.subr.bf16.mxu0 %v929
  %1350 = vmatpush1.bf16.msra.mxu0 %v928
  %1351 = vmatprep.subr.bf16.mxu0 %v927
  %1352 = vmatpush1.bf16.msra.mxu0 %v926
  %1353 = vmatprep.subr.bf16.mxu0 %v957
  %1354 = vmatpush2.bf16.msra.mxu0 %v956
  %1355 = vmatprep.subr.bf16.mxu0 %v955
  %1356 = vmatpush2.bf16.msra.mxu0 %v954
  %1357 = vmatprep.subr.bf16.mxu0 %v953
  %1358 = vmatpush2.bf16.msra.mxu0 %v952
  %1359 = vmatprep.subr.bf16.mxu0 %v951
  %1360 = vmatpush2.bf16.msra.mxu0 %v950
  %1361 = vmatprep.subr.bf16.mxu0 %v949
  %1362 = vmatpush2.bf16.msra.mxu0 %v948
  %1363 = vmatprep.subr.bf16.mxu0 %v947
  %1364 = vmatpush2.bf16.msra.mxu0 %v946
  %1365 = vmatprep.subr.bf16.mxu0 %v945
  %1366 = vmatpush2.bf16.msra.mxu0 %v944
  %1367 = vmatprep.subr.bf16.mxu0 %v943
  %1368 = vmatpush2.bf16.msra.mxu0 %v942
  %1369 = vmatprep.mubr.bf16.mxu0 %v333
  %1370 = vmatmul.mubr.bf16.gmra.mxu0 %v332
  %v1371 = vpop.f32.mrf.mxu0
  %v1372 = vadd.f32 %v1299, %v1371
  %v1373 = vpop.f32.mrf.mxu0
  %v1374 = vadd.f32 %v1301, %v1373
  %v1375 = vpop.f32.mrf.mxu0
  %v1376 = vadd.f32 %v1303, %v1375
  %v1377 = vpop.f32.mrf.mxu0
  %v1378 = vadd.f32 %v1305, %v1377
  %1379 = vmatprep.mubr.bf16.mxu0 %v342
  %1380 = vmatmul.mubr.bf16.gmra.mxu0 %v341
  %v1381 = vpop.f32.mrf.mxu0
  %v1382 = vadd.f32 %v1309, %v1381
  %v1383 = vpop.f32.mrf.mxu0
  %v1384 = vadd.f32 %v1311, %v1383
  %v1385 = vpop.f32.mrf.mxu0
  %v1386 = vadd.f32 %v1313, %v1385
  %v1387 = vpop.f32.mrf.mxu0
  %v1388 = vadd.f32 %v1315, %v1387
  %1389 = vmatprep.mubr.bf16.mxu0 %v351
  %1390 = vmatmul.mubr.bf16.gmra.mxu0 %v350
  %v1391 = vpop.f32.mrf.mxu0
  %v1392 = vadd.f32 %v1319, %v1391
  %v1393 = vpop.f32.mrf.mxu0
  %v1394 = vadd.f32 %v1321, %v1393
  %v1395 = vpop.f32.mrf.mxu0
  %v1396 = vadd.f32 %v1323, %v1395
  %v1397 = vpop.f32.mrf.mxu0
  %v1398 = vadd.f32 %v1325, %v1397
  %1399 = vmatprep.mubr.bf16.mxu0 %v360
  %1400 = vmatmul.mubr.bf16.gmra.mxu0 %v359
  %v1401 = vpop.f32.mrf.mxu0
  %v1402 = vadd.f32 %v1329, %v1401
  %v1403 = vpop.f32.mrf.mxu0
  %v1404 = vadd.f32 %v1331, %v1403
  %v1405 = vpop.f32.mrf.mxu0
  %v1406 = vadd.f32 %v1333, %v1405
  %v1407 = vpop.f32.mrf.mxu0
  %v1408 = vadd.f32 %v1335, %v1407
  %1409 = vdwg.mxu0
  %1410 = vmatprep.subr.bf16.mxu0 %v973
  %1411 = vmatpush1.bf16.msra.mxu0 %v972
  %1412 = vmatprep.subr.bf16.mxu0 %v971
  %1413 = vmatpush1.bf16.msra.mxu0 %v970
  %1414 = vmatprep.subr.bf16.mxu0 %v969
  %1415 = vmatpush1.bf16.msra.mxu0 %v968
  %1416 = vmatprep.subr.bf16.mxu0 %v967
  %1417 = vmatpush1.bf16.msra.mxu0 %v966
  %1418 = vmatprep.subr.bf16.mxu0 %v965
  %1419 = vmatpush1.bf16.msra.mxu0 %v964
  %1420 = vmatprep.subr.bf16.mxu0 %v963
  %1421 = vmatpush1.bf16.msra.mxu0 %v962
  %1422 = vmatprep.subr.bf16.mxu0 %v961
  %1423 = vmatpush1.bf16.msra.mxu0 %v960
  %1424 = vmatprep.subr.bf16.mxu0 %v959
  %1425 = vmatpush1.bf16.msra.mxu0 %v958
  %1426 = vmatprep.subr.bf16.mxu0 0
  %1427 = vmatpush2.bf16.msra.mxu0 0
  %1428 = vmatprep.subr.bf16.mxu0 0
  %1429 = vmatpush2.bf16.msra.mxu0 0
  %1430 = vmatprep.subr.bf16.mxu0 0
  %1431 = vmatpush2.bf16.msra.mxu0 0
  %1432 = vmatprep.subr.bf16.mxu0 0
  %1433 = vmatpush2.bf16.msra.mxu0 0
  %1434 = vmatprep.subr.bf16.mxu0 0
  %1435 = vmatpush2.bf16.msra.mxu0 0
  %1436 = vmatprep.subr.bf16.mxu0 0
  %1437 = vmatpush2.bf16.msra.mxu0 0
  %1438 = vmatprep.subr.bf16.mxu0 0
  %1439 = vmatpush2.bf16.msra.mxu0 0
  %1440 = vmatprep.subr.bf16.mxu0 0
  %1441 = vmatpush2.bf16.msra.mxu0 0
  %1442 = vmatprep.mubr.bf16.mxu0 0
  %1443 = vmatmul.mubr.bf16.gmra.mxu0 %v334
  %v1444 = vpop.f32.mrf.mxu0
  %v1445 = vadd.f32 %v1372, %v1444
  %v1446 = vpop.f32.mrf.mxu0
  %v1447 = vadd.f32 %v1374, %v1446
  %v1448 = vpop.f32.mrf.mxu0
  %v1449 = vadd.f32 %v1376, %v1448
  %v1450 = vpop.f32.mrf.mxu0
  %v1451 = vadd.f32 %v1378, %v1450
  %1452 = vmatprep.mubr.bf16.mxu0 0
  %1453 = vmatmul.mubr.bf16.gmra.mxu0 %v343
  %v1454 = vpop.f32.mrf.mxu0
  %v1455 = vadd.f32 %v1382, %v1454
  %v1456 = vpop.f32.mrf.mxu0
  %v1457 = vadd.f32 %v1384, %v1456
  %v1458 = vpop.f32.mrf.mxu0
  %v1459 = vadd.f32 %v1386, %v1458
  %v1460 = vpop.f32.mrf.mxu0
  %v1461 = vadd.f32 %v1388, %v1460
  %1462 = vmatprep.mubr.bf16.mxu0 0
  %1463 = vmatmul.mubr.bf16.gmra.mxu0 %v352
  %v1464 = vpop.f32.mrf.mxu0
  %v1465 = vadd.f32 %v1392, %v1464
  %v1466 = vpop.f32.mrf.mxu0
  %v1467 = vadd.f32 %v1394, %v1466
  %v1468 = vpop.f32.mrf.mxu0
  %v1469 = vadd.f32 %v1396, %v1468
  %v1470 = vpop.f32.mrf.mxu0
  %v1471 = vadd.f32 %v1398, %v1470
  %1472 = vmatprep.mubr.bf16.mxu0 0
  %1473 = vmatmul.mubr.bf16.gmra.mxu0 %v361
  %v1474 = vpop.f32.mrf.mxu0
  %v1475 = vadd.f32 %v1402, %v1474
  %v1476 = vpop.f32.mrf.mxu0
  %v1477 = vadd.f32 %v1404, %v1476
  %v1478 = vpop.f32.mrf.mxu0
  %v1479 = vadd.f32 %v1406, %v1478
  %v1480 = vpop.f32.mrf.mxu0
  %v1481 = vadd.f32 %v1408, %v1480
  %1482 = vdwg.mxu0
  %v1483 = vmax.f32 %v1445, 0.0
  %v1484 = vmax.f32 %v1447, 0.0
  %v1485 = vmax.f32 %v1449, 0.0
  %v1486 = vmax.f32 %v1451, 0.0
  %v1487 = vmax.f32 %v1455, 0.0
  %v1488 = vmax.f32 %v1457, 0.0
  %v1489 = vmax.f32 %v1459, 0.0
  %v1490 = vmax.f32 %v1461, 0.0
  %v1491 = vmax.f32 %v1465, 0.0
  %v1492 = vmax.f32 %v1467, 0.0
  %v1493 = vmax.f32 %v1469, 0.0
  %v1494 = vmax.f32 %v1471, 0.0
  %v1495 = vmax.f32 %v1475, 0.0
  %v1496 = vmax.f32 %v1477, 0.0
  %v1497 = vmax.f32 %v1479, 0.0
  %v1498 = vmax.f32 %v1481, 0.0
  %v1499 = vld [vmem:[%s3] sm:$0xff]
  %v1500 = vld [vmem:[%s3 + $0x8] sm:$0xff]
  %vm1501 = vcmask 523264
  %v1503 = vsel %vm1501, %v1499, 0
  %v1506 = vsel %vm1501, %v1500, 0
  %1508 = vmatprep.subr.mxu0 0.0
  %1509 = vmatpush1.msra.mxu0 0.0
  %1510 = vmatprep.subr.mxu0 0.0
  %1511 = vmatpush1.msra.mxu0 0.0
  %1512 = vmatprep.subr.mxu0 0.0
  %1513 = vmatpush1.msra.mxu0 0.0
  %1514 = vmatprep.subr.mxu0 0.0
  %1515 = vmatpush1.msra.mxu0 0.0
  %1516 = vmatprep.subr.mxu0 0.0
  %1517 = vmatpush1.msra.mxu0 0.0
  %1518 = vmatprep.subr.mxu0 0.0
  %1519 = vmatpush1.msra.mxu0 0.0
  %1520 = vmatprep.subr.mxu0 0.0
  %1521 = vmatpush1.msra.mxu0 0.0
  %1522 = vmatprep.subr.mxu0 0.0
  %1523 = vmatpush1.msra.mxu0 0.0
  %1524 = vmatprep.subr.mxu0 %v1498
  %1525 = vmatpush1.msra.mxu0 %v1497
  %1526 = vmatprep.subr.mxu0 %v1496
  %1527 = vmatpush1.msra.mxu0 %v1495
  %1528 = vmatprep.subr.mxu0 %v1494
  %1529 = vmatpush1.msra.mxu0 %v1493
  %1530 = vmatprep.subr.mxu0 %v1492
  %1531 = vmatpush1.msra.mxu0 %v1491
  %1532 = vmatprep.subr.mxu0 %v1490
  %1533 = vmatpush1.msra.mxu0 %v1489
  %1534 = vmatprep.subr.mxu0 %v1488
  %1535 = vmatpush1.msra.mxu0 %v1487
  %1536 = vmatprep.subr.mxu0 %v1486
  %1537 = vmatpush1.msra.mxu0 %v1485
  %1538 = vmatprep.subr.mxu0 %v1484
  %1539 = vmatpush1.msra.mxu0 %v1483
  %1540 = vmatprep.subr.mxu0 0.0
  %1541 = vmatpush2.msra.mxu0 0.0
  %1542 = vmatprep.subr.mxu0 0.0
  %1543 = vmatpush2.msra.mxu0 0.0
  %1544 = vmatprep.subr.mxu0 0.0
  %1545 = vmatpush2.msra.mxu0 0.0
  %1546 = vmatprep.subr.mxu0 0.0
  %1547 = vmatpush2.msra.mxu0 0.0
  %1548 = vmatprep.subr.mxu0 0.0
  %1549 = vmatpush2.msra.mxu0 0.0
  %1550 = vmatprep.subr.mxu0 0.0
  %1551 = vmatpush2.msra.mxu0 0.0
  %1552 = vmatprep.subr.mxu0 0.0
  %1553 = vmatpush2.msra.mxu0 0.0
  %1554 = vmatprep.subr.mxu0 0.0
  %1555 = vmatpush2.msra.mxu0 0.0
  %1556 = vmatprep.subr.mxu0 0.0
  %1557 = vmatpush2.msra.mxu0 0.0
  %1558 = vmatprep.subr.mxu0 0.0
  %1559 = vmatpush2.msra.mxu0 0.0
  %1560 = vmatprep.subr.mxu0 0.0
  %1561 = vmatpush2.msra.mxu0 0.0
  %1562 = vmatprep.subr.mxu0 0.0
  %1563 = vmatpush2.msra.mxu0 0.0
  %1564 = vmatprep.subr.mxu0 0.0
  %1565 = vmatpush2.msra.mxu0 0.0
  %1566 = vmatprep.subr.mxu0 0.0
  %1567 = vmatpush2.msra.mxu0 0.0
  %1568 = vmatprep.subr.mxu0 0.0
  %1569 = vmatpush2.msra.mxu0 0.0
  %1570 = vmatprep.subr.mxu0 0.0
  %1571 = vmatpush2.msra.mxu0 0.0
  %1572 = vmatprep.mubr.f32.mxu0 0.0
  %1573 = vmatmul.mubr.f32.gmra.mxu0 %v1503
  %v1574 = vpop.f32.mrf.mxu0
  %v1575 = vadd.f32 0.0, %v1574
  %v1576 = vpop.f32.mrf.mxu0
  %v1577 = vadd.f32 0.0, %v1576
  %1578 = vmatprep.mubr.f32.mxu0 0.0
  %1579 = vmatmul.mubr.f32.gmra.mxu0 %v1506
  %v1580 = vpop.f32.mrf.mxu0
  %v1581 = vadd.f32 0.0, %v1580
  %v1582 = vpop.f32.mrf.mxu0
  %v1583 = vadd.f32 0.0, %v1582
  %1584 = vdwg.mxu0
  %1585 = vst [vmem:[%s4] sm:$0xff] %v1575
  %1586 = vst [vmem:[%s4 + $0x8] sm:$0xff] %v1577
  %1587 = vst [vmem:[%s4 + $0x10] sm:$0xff] %v1581
  %1588 = vst [vmem:[%s4 + $0x18] sm:$0xff] %v1583
  // Predicated region
  $region18: #{simple_view_encoder.7} parent=0 // pred_check
    _
  $region19: #{simple_view_encoder.7} parent=0 // pred_check_branch
    %1590 = sbr.rel (0) target = $region21
  $region20: #{simple_view_encoder.7} parent=0 // pred_region
    _
  $region21: #{simple_view_encoder.7} parent=0 // pred_fallthru
    _
  // Predicated region
  $region22: #{simple_view_encoder.7} parent=0 // pred_check
    _
  $region23: #{simple_view_encoder.7} parent=0 // pred_check_branch
    %1592 = sbr.rel (0) target = $region25
  $region24: #{simple_view_encoder.7} parent=0 // pred_region
    _
  $region25: #{simple_view_encoder.7} parent=0 // pred_fallthru
    _

</llo_original>
